<compile_context>
chip_gen: v6e
topology: v6e:2x2x1
jax: 0.10.0
libtpu: 0.0.40
codegen_flags: <defaults>
</compile_context>

<pallas_src>
import functools

import jax
import jax.numpy as jnp
from jax import lax
from jax.experimental import pallas as pl
from jax.experimental.pallas import tpu as pltpu


_PADL = 8  # left pad (W / sublane axis) so the interior store is sublane-aligned


# ----------------------------------------------------------------------------
# Fused kernel
# ----------------------------------------------------------------------------
def _bottleneck_kernel(x_ref, w1_ref, b1_ref, w2_ref, b2_ref, w3_ref, b3_ref,
                       o_ref, h1_pad, *, H, W, Cmid, cw, npacks):
    Nb = x_ref.shape[0]
    Cin = x_ref.shape[-1]
    Cout = o_ref.shape[-1]
    M = Nb * H * W

    # Zero the padded scratch ONCE.  Invariant: the interior
    # [:, 1:H+1, _PADL:_PADL+W, :] is fully overwritten every grid step and the
    # 1-pixel border is never written, so the zeros persist across steps.
    # (Grid axis is "arbitrary" -> sequential, so program_id==0 runs first.)
    @pl.when(pl.program_id(0) == 0)
    def _():
        h1_pad[...] = jnp.zeros(h1_pad.shape, h1_pad.dtype)

    # ---- stage 1: 1x1 conv (BN scale folded into W) + bias + ReLU -----------
    x2d = x_ref[...].reshape(M, Cin)                          # bf16, reused as skip
    y1 = jnp.dot(x2d, w1_ref[...], preferred_element_type=jnp.float32)
    y1 = jnp.maximum(y1 + b1_ref[...], 0.0)                   # (M, Cmid) f32

    # interior write, sublane-aligned at W offset _PADL, bf16 scratch
    h1_pad[:, 1:H + 1, _PADL:_PADL + W, :] = (
        y1.reshape(Nb, H, W, Cmid).astype(h1_pad.dtype))

    # ---- stage 2: grouped 3x3 conv -------------------------------------------
    # Per pack of groups: im2col operand built as a traced concat of the nine
    # shifted taps (no scratch round-trip), one MXU matmul with K = 9*cw.
    y2_parts = []
    for p in range(npacks):
        c0 = p * cw
        taps = [
            h1_pad[:, dy:dy + H,
                   _PADL - 1 + dx:_PADL - 1 + dx + W,
                   c0:c0 + cw].reshape(M, cw)
            for dy in range(3) for dx in range(3)
        ]
        cols_p = jnp.concatenate(taps, axis=-1)               # (M, 9*cw) bf16
        y2_parts.append(jnp.dot(cols_p, w2_ref[p],
                                preferred_element_type=jnp.float32))
    y2 = y2_parts[0] if npacks == 1 else jnp.concatenate(y2_parts, axis=-1)
    y2 = jnp.maximum(y2 + b2_ref[...], 0.0)                   # (M, Cmid) f32

    # ---- stage 3: 1x1 expansion conv + bias + identity shortcut + ReLU ------
    y3 = jnp.dot(y2.astype(jnp.bfloat16), w3_ref[...],
                 preferred_element_type=jnp.float32)
    y3 = y3 + b3_ref[...] + x2d.astype(jnp.float32)           # shortcut in f32
    o_ref[...] = jnp.maximum(y3, 0.0).reshape(Nb, H, W, Cout).astype(o_ref.dtype)


# ----------------------------------------------------------------------------
# helpers
# ----------------------------------------------------------------------------
def _choose_groups_per_pack(cg, cardinality, target_k=256):
    """Smallest divisor gpp of `cardinality` with per-pack K = 9*cg*gpp >= target_k.

    Packing groups trades (gpp x) block-diagonal FLOP inflation for an MXU-
    friendly K; falls back to all groups in one pack for tiny configs.
    """
    for gpp in range(1, cardinality + 1):
        if cardinality % gpp == 0 and 9 * cg * gpp >= target_k:
            return gpp
    return cardinality


def _pick_batch_block(n, max_nb=8):
    nb = 1
    for cand in range(1, min(n, max_nb) + 1):
        if n % cand == 0:
            nb = cand
    return nb


def _vmem_limit_bytes():
    try:
        cap = pltpu.get_tpu_info().vmem_capacity_bytes
    except Exception:
        cap = 64 * 1024 * 1024
    return min((cap * 3) // 4, 96 * 1024 * 1024)


# ----------------------------------------------------------------------------
# Pallas wrapper (NHWC in, NHWC out, bf16 activations on the kernel path)
# ----------------------------------------------------------------------------
def bottleneck_forward(x_nhwc, kp):
    """Bottleneck.forward (stride=1, projection=None), NHWC activations."""
    N, H, W, Cin = x_nhwc.shape
    Cmid = kp["w1"].shape[1]
    Cout = kp["w3"].shape[1]
    npacks, _, cw = kp["w2pack"].shape
    assert Cout == Cin, "identity shortcut requires out_channels == in_channels"

    # In a real network activations already arrive as bf16 NHWC; this cast only
    # exists because the test constructs f32 input.
    x = x_nhwc.astype(jnp.bfloat16)

    Nb = _pick_batch_block(N)
    assert N % Nb == 0

    out = pl.pallas_call(
        functools.partial(_bottleneck_kernel, H=H, W=W, Cmid=Cmid,
                          cw=cw, npacks=npacks),
        grid=(N // Nb,),
        out_shape=jax.ShapeDtypeStruct((N, H, W, Cout), jnp.bfloat16),
        in_specs=[
            pl.BlockSpec((Nb, H, W, Cin), lambda n: (n, 0, 0, 0)),
            pl.BlockSpec((Cin, Cmid), lambda n: (0, 0)),
            pl.BlockSpec((1, Cmid), lambda n: (0, 0)),
            pl.BlockSpec((npacks, 9 * cw, cw), lambda n: (0, 0, 0)),
            pl.BlockSpec((1, Cmid), lambda n: (0, 0)),
            pl.BlockSpec((Cmid, Cout), lambda n: (0, 0)),
            pl.BlockSpec((1, Cout), lambda n: (0, 0)),
        ],
        out_specs=pl.BlockSpec((Nb, H, W, Cout), lambda n: (n, 0, 0, 0)),
        scratch_shapes=[
            # padded h1: border zeroed once, interior rewritten per step (bf16)
            pltpu.VMEM((Nb, H + 2, _PADL + W + 1, Cmid), jnp.bfloat16),
        ],
        compiler_params=pltpu.CompilerParams(
            # "arbitrary" (sequential) so the zero-once scratch-border invariant
            # holds; for multi-TC sharding, zero the border per step instead.
            dimension_semantics=("arbitrary",),
            vmem_limit_bytes=_vmem_limit_bytes()),
    )(x, kp["w1"], kp["b1"], kp["w2pack"], kp["b2"], kp["w3"], kp["b3"])

    return out  # NHWC bf16


# ----------------------------------------------------------------------------
# Parameter construction (deterministic, synthetic); BN folded into W / bias.
# ----------------------------------------------------------------------------
def make_params(key, in_channels, inner_channels, cardinality, eps=1e-5):
    expansion = 2
    out_channels = inner_channels * expansion
    ks = jax.random.split(key, 6)

    def nrm(k, shape, s=0.1):
        return jax.random.normal(k, shape, jnp.float32) * s

    # PyTorch-shaped weights (OIHW)
    w1 = nrm(ks[0], (inner_channels, in_channels, 1, 1))
    w2 = nrm(ks[1], (inner_channels, inner_channels // cardinality, 3, 3))
    w3 = nrm(ks[2], (out_channels, inner_channels, 1, 1))

    def bn_params(k, c):
        k1, k2, k3, k4 = jax.random.split(k, 4)
        gamma = 1.0 + 0.1 * jax.random.normal(k1, (c,), jnp.float32)
        beta = 0.1 * jax.random.normal(k2, (c,), jnp.float32)
        mean = 0.1 * jax.random.normal(k3, (c,), jnp.float32)
        var = jnp.abs(jax.random.normal(k4, (c,), jnp.float32)) * 0.5 + 0.5
        return gamma, beta, mean, var

    bn1 = bn_params(ks[3], inner_channels)
    bn2 = bn_params(ks[4], inner_channels)
    bn3 = bn_params(ks[5], out_channels)

    raw = dict(w1=w1, w2=w2, w3=w3, bn1=bn1, bn2=bn2, bn3=bn3)

    def fold(bnp):
        gamma, beta, mean, var = bnp
        s = gamma / jnp.sqrt(var + eps)
        return s, beta - mean * s

    s1, b1 = fold(bn1)
    s2, b2 = fold(bn2)
    s3, b3 = fold(bn3)

    # 1x1 convs as (Cin, Cout) matmuls, BN scale folded into output cols, bf16.
    w1m = (jnp.transpose(w1[:, :, 0, 0], (1, 0)) * s1[None, :]).astype(jnp.bfloat16)
    w3m = (jnp.transpose(w3[:, :, 0, 0], (1, 0)) * s3[None, :]).astype(jnp.bfloat16)

    # Grouped 3x3 conv: pack gpp groups per matmul.  Per-pack weight is
    # (9*cw, cw), block-diagonal over the gpp groups inside the pack, im2col
    # layout index [t*cw + ci_local, co_local] with t = ky*3 + kx.
    cg = inner_channels // cardinality
    gpp = _choose_groups_per_pack(cg, cardinality)
    npacks = cardinality // gpp
    cw = cg * gpp

    w2pack = jnp.zeros((npacks, 9, cw, cw), jnp.float32)
    for g in range(cardinality):
        p, j = divmod(g, gpp)
        wg = w2[g * cg:(g + 1) * cg]                   # (co_local, ci, 3, 3)
        wg = jnp.transpose(wg, (2, 3, 1, 0)).reshape(9, cg, cg)  # (t, ci, co)
        w2pack = w2pack.at[p, :, j * cg:(j + 1) * cg, j * cg:(j + 1) * cg].set(wg)
    s2p = s2.reshape(npacks, cw)                       # groups are contiguous
    w2pack = (w2pack * s2p[:, None, None, :]).reshape(
        npacks, 9 * cw, cw).astype(jnp.bfloat16)

    kp = dict(w1=w1m, b1=b1[None, :],
              w2pack=w2pack, b2=b2[None, :],
              w3=w3m, b3=b3[None, :])
    return raw, kp


# ----------------------------------------------------------------------------
# Pure-JAX f32 reference (matches the PyTorch module in eval mode), NCHW.
# ----------------------------------------------------------------------------
def reference_forward(x, raw, cardinality, eps=1e-5):
    dn = ("NCHW", "OIHW", "NCHW")

    def bn(y, p):
        gamma, beta, mean, var = p
        sh = (1, -1, 1, 1)
        return (y - mean.reshape(sh)) / jnp.sqrt(var + eps).reshape(sh) \
            * gamma.reshape(sh) + beta.reshape(sh)

    y = lax.conv_general_dilated(x, raw["w1"], (1, 1), "VALID",
                                 dimension_numbers=dn)
    y = jax.nn.relu(bn(y, raw["bn1"]))
    y = lax.conv_general_dilated(y, raw["w2"], (1, 1), ((1, 1), (1, 1)),
                                 dimension_numbers=dn,
                                 feature_group_count=cardinality)
    y = jax.nn.relu(bn(y, raw["bn2"]))
    y = lax.conv_general_dilated(y, raw["w3"], (1, 1), "VALID",
                                 dimension_numbers=dn)
    y = bn(y, raw["bn3"])
    return jax.nn.relu(y + x)


# ----------------------------------------------------------------------------
if __name__ == "__main__":
    # Bottleneck(in_channels=32, inner_channels=16, cardinality=4)
    # -> out channels = inner * expansion(2) = 32 == in_channels (identity skip)
    N, Cin, H, W = 4, 32, 8, 8
    inner, cardinality = 16, 4

    key = jax.random.PRNGKey(0)
    kx, kparam = jax.random.split(key)
    x_nhwc = jax.random.normal(kx, (N, H, W, Cin), jnp.float32)

    raw, kernel_params = make_params(kparam, Cin, inner, cardinality)

    out_nhwc = jax.jit(bottleneck_forward)(x_nhwc, kernel_params)
    out_nhwc = jax.block_until_ready(out_nhwc)

    # reference path (not perf-critical): NCHW f32
    x_nchw = jnp.transpose(x_nhwc, (0, 3, 1, 2))
    ref_nchw = reference_forward(x_nchw, raw, cardinality)
    ref_nhwc = jnp.transpose(ref_nchw, (0, 2, 3, 1))

    assert out_nhwc.shape == ref_nhwc.shape == (N, H, W, Cin)
    out_f32 = out_nhwc.astype(jnp.float32)
    # Tolerance accounts for bf16 input/output activations and bf16 MXU
    # operands (f32 accumulation) vs. the pure-f32 reference.
    err = float(jnp.max(jnp.abs(out_f32 - ref_nhwc)))
    assert jnp.allclose(out_f32, ref_nhwc, atol=3e-2, rtol=3e-2), err

    print("KERNEL_OK")
</pallas_src>

<mosaic_0001>
module attributes {stable_mosaic.version = 11 : i64} {
  func.func @_bottleneck_kernel(%arg0: i32, %arg1: memref<4x8x8x32xbf16, #tpu.memory_space<vmem>>, %arg2: memref<32x16xbf16, #tpu.memory_space<vmem>>, %arg3: memref<1x16xf32, #tpu.memory_space<vmem>>, %arg4: memref<1x144x16xbf16, #tpu.memory_space<vmem>>, %arg5: memref<1x16xf32, #tpu.memory_space<vmem>>, %arg6: memref<16x32xbf16, #tpu.memory_space<vmem>>, %arg7: memref<1x32xf32, #tpu.memory_space<vmem>>, %arg8: memref<4x8x8x32xbf16, #tpu.memory_space<vmem>>, %arg9: memref<4x10x17x16xbf16, #tpu.memory_space<vmem>>) attributes {dimension_semantics = [#tpu.dimension_semantics<arbitrary>], iteration_bounds = array<i64: 1>, scalar_prefetch = 0 : i64, scratch_operands = 1 : i64, tpu.core_type = #tpu.core_type<tc>, window_params = [{transform_indices = @transform_0, window_bounds = array<i64: 4, 8, 8, 32>}, {pipeline_mode = #tpu.pipeline_mode<synchronous>, transform_indices = @transform_1, window_bounds = array<i64: 32, 16>}, {pipeline_mode = #tpu.pipeline_mode<synchronous>, transform_indices = @transform_2, window_bounds = array<i64: 1, 16>}, {pipeline_mode = #tpu.pipeline_mode<synchronous>, transform_indices = @transform_3, window_bounds = array<i64: 1, 144, 16>}, {pipeline_mode = #tpu.pipeline_mode<synchronous>, transform_indices = @transform_4, window_bounds = array<i64: 1, 16>}, {pipeline_mode = #tpu.pipeline_mode<synchronous>, transform_indices = @transform_5, window_bounds = array<i64: 16, 32>}, {pipeline_mode = #tpu.pipeline_mode<synchronous>, transform_indices = @transform_6, window_bounds = array<i64: 1, 32>}, {transform_indices = @transform_7, window_bounds = array<i64: 4, 8, 8, 32>}]} {
    %c0_i32 = arith.constant 0 : i32
    %0 = arith.cmpi eq, %arg0, %c0_i32 : i32
    %1 = arith.extui %0 : i1 to i32
    %c0_i32_0 = arith.constant 0 : i32
    %2 = arith.cmpi ne, %1, %c0_i32_0 : i32
    scf.if %2 {
      %cst_61 = arith.constant 0.000000e+00 : bf16
      %55 = vector.broadcast %cst_61 : bf16 to vector<4x10x17x16xbf16>
      %c0_62 = arith.constant 0 : index
      %c0_63 = arith.constant 0 : index
      %c0_64 = arith.constant 0 : index
      %c0_65 = arith.constant 0 : index
      %56 = vector.load %arg9[%c0_62, %c0_63, %c0_64, %c0_65] : memref<4x10x17x16xbf16, #tpu.memory_space<vmem>>, vector<4x10x17x16xbf16>
      tpu.vector_store %arg9[%c0_62, %c0_63, %c0_64, %c0_65], %55 {strides = array<i32>} : memref<4x10x17x16xbf16, #tpu.memory_space<vmem>>, vector<4x10x17x16xbf16>,
    } else {
    }
    %c0 = arith.constant 0 : index
    %c0_1 = arith.constant 0 : index
    %c0_2 = arith.constant 0 : index
    %c0_3 = arith.constant 0 : index
    %3 = vector.load %arg1[%c0, %c0_1, %c0_2, %c0_3] : memref<4x8x8x32xbf16, #tpu.memory_space<vmem>>, vector<4x8x8x32xbf16>
    %4 = vector.shape_cast %3 : vector<4x8x8x32xbf16> to vector<256x32xbf16>
    %c0_4 = arith.constant 0 : index
    %c0_5 = arith.constant 0 : index
    %5 = vector.load %arg2[%c0_4, %c0_5] : memref<32x16xbf16, #tpu.memory_space<vmem>>, vector<32x16xbf16>
    %cst = arith.constant dense<0.000000e+00> : vector<256x16xf32>
    %6 = tpu.matmul %4, %5, %cst {dimension_numbers = #tpu.dot_dimension_numbers<[1], [0], [0], [1], [0, 0, 1, 1], [], []>} : vector<256x32xbf16>, vector<32x16xbf16>, vector<256x16xf32> -> vector<256x16xf32>
    %c0_6 = arith.constant 0 : index
    %c0_7 = arith.constant 0 : index
    %7 = vector.load %arg3[%c0_6, %c0_7] : memref<1x16xf32, #tpu.memory_space<vmem>>, vector<1x16xf32>
    %8 = vector.broadcast %7 : vector<1x16xf32> to vector<256x16xf32>
    %9 = arith.addf %6, %8 : vector<256x16xf32>
    %cst_8 = arith.constant 0.000000e+00 : f32
    %10 = vector.broadcast %cst_8 : f32 to vector<256x16xf32>
    %11 = arith.maximumf %9, %10 : vector<256x16xf32>
    %12 = vector.shape_cast %11 : vector<256x16xf32> to vector<4x8x8x16xf32>
    %13 = arith.truncf %12 : vector<4x8x8x16xf32> to vector<4x8x8x16xbf16>
    %c0_9 = arith.constant 0 : index
    %c1 = arith.constant 1 : index
    %c8 = arith.constant 8 : index
    %c0_10 = arith.constant 0 : index
    %14 = vector.load %arg9[%c0_9, %c1, %c8, %c0_10] : memref<4x10x17x16xbf16, #tpu.memory_space<vmem>>, vector<4x8x8x16xbf16>
    tpu.vector_store %arg9[%c0_9, %c1, %c8, %c0_10], %13 {strides = array<i32>} : memref<4x10x17x16xbf16, #tpu.memory_space<vmem>>, vector<4x8x8x16xbf16>,
    %c0_11 = arith.constant 0 : index
    %c0_12 = arith.constant 0 : index
    %c7 = arith.constant 7 : index
    %c0_13 = arith.constant 0 : index
    %15 = vector.load %arg9[%c0_11, %c0_12, %c7, %c0_13] : memref<4x10x17x16xbf16, #tpu.memory_space<vmem>>, vector<4x8x8x16xbf16>
    %16 = vector.shape_cast %15 : vector<4x8x8x16xbf16> to vector<256x16xbf16>
    %c0_14 = arith.constant 0 : index
    %c0_15 = arith.constant 0 : index
    %c8_16 = arith.constant 8 : index
    %c0_17 = arith.constant 0 : index
    %17 = vector.load %arg9[%c0_14, %c0_15, %c8_16, %c0_17] : memref<4x10x17x16xbf16, #tpu.memory_space<vmem>>, vector<4x8x8x16xbf16>
    %18 = vector.shape_cast %17 : vector<4x8x8x16xbf16> to vector<256x16xbf16>
    %c0_18 = arith.constant 0 : index
    %c0_19 = arith.constant 0 : index
    %c9 = arith.constant 9 : index
    %c0_20 = arith.constant 0 : index
    %19 = vector.load %arg9[%c0_18, %c0_19, %c9, %c0_20] : memref<4x10x17x16xbf16, #tpu.memory_space<vmem>>, vector<4x8x8x16xbf16>
    %20 = vector.shape_cast %19 : vector<4x8x8x16xbf16> to vector<256x16xbf16>
    %c0_21 = arith.constant 0 : index
    %c1_22 = arith.constant 1 : index
    %c7_23 = arith.constant 7 : index
    %c0_24 = arith.constant 0 : index
    %21 = vector.load %arg9[%c0_21, %c1_22, %c7_23, %c0_24] : memref<4x10x17x16xbf16, #tpu.memory_space<vmem>>, vector<4x8x8x16xbf16>
    %22 = vector.shape_cast %21 : vector<4x8x8x16xbf16> to vector<256x16xbf16>
    %c0_25 = arith.constant 0 : index
    %c1_26 = arith.constant 1 : index
    %c8_27 = arith.constant 8 : index
    %c0_28 = arith.constant 0 : index
    %23 = vector.load %arg9[%c0_25, %c1_26, %c8_27, %c0_28] : memref<4x10x17x16xbf16, #tpu.memory_space<vmem>>, vector<4x8x8x16xbf16>
    %24 = vector.shape_cast %23 : vector<4x8x8x16xbf16> to vector<256x16xbf16>
    %c0_29 = arith.constant 0 : index
    %c1_30 = arith.constant 1 : index
    %c9_31 = arith.constant 9 : index
    %c0_32 = arith.constant 0 : index
    %25 = vector.load %arg9[%c0_29, %c1_30, %c9_31, %c0_32] : memref<4x10x17x16xbf16, #tpu.memory_space<vmem>>, vector<4x8x8x16xbf16>
    %26 = vector.shape_cast %25 : vector<4x8x8x16xbf16> to vector<256x16xbf16>
    %c0_33 = arith.constant 0 : index
    %c2 = arith.constant 2 : index
    %c7_34 = arith.constant 7 : index
    %c0_35 = arith.constant 0 : index
    %27 = vector.load %arg9[%c0_33, %c2, %c7_34, %c0_35] : memref<4x10x17x16xbf16, #tpu.memory_space<vmem>>, vector<4x8x8x16xbf16>
    %28 = vector.shape_cast %27 : vector<4x8x8x16xbf16> to vector<256x16xbf16>
    %c0_36 = arith.constant 0 : index
    %c2_37 = arith.constant 2 : index
    %c8_38 = arith.constant 8 : index
    %c0_39 = arith.constant 0 : index
    %29 = vector.load %arg9[%c0_36, %c2_37, %c8_38, %c0_39] : memref<4x10x17x16xbf16, #tpu.memory_space<vmem>>, vector<4x8x8x16xbf16>
    %30 = vector.shape_cast %29 : vector<4x8x8x16xbf16> to vector<256x16xbf16>
    %c0_40 = arith.constant 0 : index
    %c2_41 = arith.constant 2 : index
    %c9_42 = arith.constant 9 : index
    %c0_43 = arith.constant 0 : index
    %31 = vector.load %arg9[%c0_40, %c2_41, %c9_42, %c0_43] : memref<4x10x17x16xbf16, #tpu.memory_space<vmem>>, vector<4x8x8x16xbf16>
    %32 = vector.shape_cast %31 : vector<4x8x8x16xbf16> to vector<256x16xbf16>
    %33 = tpu.concatenate %16, %18, %20, %22, %24, %26, %28, %30, %32 in 1 : vector<256x16xbf16>, vector<256x16xbf16>, vector<256x16xbf16>, vector<256x16xbf16>, vector<256x16xbf16>, vector<256x16xbf16>, vector<256x16xbf16>, vector<256x16xbf16>, vector<256x16xbf16> -> vector<256x144xbf16>
    %c0_44 = arith.constant 0 : index
    %c0_45 = arith.constant 0 : index
    %c0_46 = arith.constant 0 : index
    %34 = vector.load %arg4[%c0_44, %c0_45, %c0_46] : memref<1x144x16xbf16, #tpu.memory_space<vmem>>, vector<1x144x16xbf16>
    %35 = vector.shape_cast %34 : vector<1x144x16xbf16> to vector<144x16xbf16>
    %cst_47 = arith.constant dense<0.000000e+00> : vector<256x16xf32>
    %36 = tpu.matmul %33, %35, %cst_47 {dimension_numbers = #tpu.dot_dimension_numbers<[1], [0], [0], [1], [0, 0, 1, 1], [], []>} : vector<256x144xbf16>, vector<144x16xbf16>, vector<256x16xf32> -> vector<256x16xf32>
    %c0_48 = arith.constant 0 : index
    %c0_49 = arith.constant 0 : index
    %37 = vector.load %arg5[%c0_48, %c0_49] : memref<1x16xf32, #tpu.memory_space<vmem>>, vector<1x16xf32>
    %38 = vector.broadcast %37 : vector<1x16xf32> to vector<256x16xf32>
    %39 = arith.addf %36, %38 : vector<256x16xf32>
    %cst_50 = arith.constant 0.000000e+00 : f32
    %40 = vector.broadcast %cst_50 : f32 to vector<256x16xf32>
    %41 = arith.maximumf %39, %40 : vector<256x16xf32>
    %42 = arith.truncf %41 : vector<256x16xf32> to vector<256x16xbf16>
    %c0_51 = arith.constant 0 : index
    %c0_52 = arith.constant 0 : index
    %43 = vector.load %arg6[%c0_51, %c0_52] : memref<16x32xbf16, #tpu.memory_space<vmem>>, vector<16x32xbf16>
    %cst_53 = arith.constant dense<0.000000e+00> : vector<256x32xf32>
    %44 = tpu.matmul %42, %43, %cst_53 {dimension_numbers = #tpu.dot_dimension_numbers<[1], [0], [0], [1], [0, 0, 1, 1], [], []>} : vector<256x16xbf16>, vector<16x32xbf16>, vector<256x32xf32> -> vector<256x32xf32>
    %c0_54 = arith.constant 0 : index
    %c0_55 = arith.constant 0 : index
    %45 = vector.load %arg7[%c0_54, %c0_55] : memref<1x32xf32, #tpu.memory_space<vmem>>, vector<1x32xf32>
    %46 = vector.broadcast %45 : vector<1x32xf32> to vector<256x32xf32>
    %47 = arith.addf %44, %46 : vector<256x32xf32>
    %48 = arith.extf %4 : vector<256x32xbf16> to vector<256x32xf32>
    %49 = arith.addf %47, %48 : vector<256x32xf32>
    %cst_56 = arith.constant 0.000000e+00 : f32
    %50 = vector.broadcast %cst_56 : f32 to vector<256x32xf32>
    %51 = arith.maximumf %49, %50 : vector<256x32xf32>
    %52 = vector.shape_cast %51 : vector<256x32xf32> to vector<4x8x8x32xf32>
    %53 = arith.truncf %52 : vector<4x8x8x32xf32> to vector<4x8x8x32xbf16>
    %c0_57 = arith.constant 0 : index
    %c0_58 = arith.constant 0 : index
    %c0_59 = arith.constant 0 : index
    %c0_60 = arith.constant 0 : index
    %54 = vector.load %arg8[%c0_57, %c0_58, %c0_59, %c0_60] : memref<4x8x8x32xbf16, #tpu.memory_space<vmem>>, vector<4x8x8x32xbf16>
    tpu.vector_store %arg8[%c0_57, %c0_58, %c0_59, %c0_60], %53 {strides = array<i32>} : memref<4x8x8x32xbf16, #tpu.memory_space<vmem>>, vector<4x8x8x32xbf16>,
    return
  }
  func.func @transform_0(%arg0: i32) -> (i32, i32, i32, i32) {
    %c0_i32 = arith.constant 0 : i32
    %c0_i32_0 = arith.constant 0 : i32
    %c0_i32_1 = arith.constant 0 : i32
    %c0_i32_2 = arith.constant 0 : i32
    return %arg0, %c0_i32, %c0_i32_0, %c0_i32_1 : i32, i32, i32, i32
  }
  func.func @transform_1(%arg0: i32) -> (i32, i32) {
    %c0_i32 = arith.constant 0 : i32
    %c0_i32_0 = arith.constant 0 : i32
    %c0_i32_1 = arith.constant 0 : i32
    return %c0_i32, %c0_i32_0 : i32, i32
  }
  func.func @transform_2(%arg0: i32) -> (i32, i32) {
    %c0_i32 = arith.constant 0 : i32
    %c0_i32_0 = arith.constant 0 : i32
    %c0_i32_1 = arith.constant 0 : i32
    return %c0_i32, %c0_i32_0 : i32, i32
  }
  func.func @transform_3(%arg0: i32) -> (i32, i32, i32) {
    %c0_i32 = arith.constant 0 : i32
    %c0_i32_0 = arith.constant 0 : i32
    %c0_i32_1 = arith.constant 0 : i32
    %c0_i32_2 = arith.constant 0 : i32
    return %c0_i32, %c0_i32_0, %c0_i32_1 : i32, i32, i32
  }
  func.func @transform_4(%arg0: i32) -> (i32, i32) {
    %c0_i32 = arith.constant 0 : i32
    %c0_i32_0 = arith.constant 0 : i32
    %c0_i32_1 = arith.constant 0 : i32
    return %c0_i32, %c0_i32_0 : i32, i32
  }
  func.func @transform_5(%arg0: i32) -> (i32, i32) {
    %c0_i32 = arith.constant 0 : i32
    %c0_i32_0 = arith.constant 0 : i32
    %c0_i32_1 = arith.constant 0 : i32
    return %c0_i32, %c0_i32_0 : i32, i32
  }
  func.func @transform_6(%arg0: i32) -> (i32, i32) {
    %c0_i32 = arith.constant 0 : i32
    %c0_i32_0 = arith.constant 0 : i32
    %c0_i32_1 = arith.constant 0 : i32
    return %c0_i32, %c0_i32_0 : i32, i32
  }
  func.func @transform_7(%arg0: i32) -> (i32, i32, i32, i32) {
    %c0_i32 = arith.constant 0 : i32
    %c0_i32_0 = arith.constant 0 : i32
    %c0_i32_1 = arith.constant 0 : i32
    %c0_i32_2 = arith.constant 0 : i32
    return %arg0, %c0_i32, %c0_i32_0, %c0_i32_1 : i32, i32, i32, i32
  }
}

</mosaic_0001>

<llo_original>
// kernel: bottleneck_forward.1
$region0: #{bottleneck_forward.1}
  #allocation0 [shape = 'u32[]', space=smem, size = 0x4, offset = 0x4, fixed_abs, tag = 'smem constant byte address 0x4 - core index']
  #allocation1 [shape = 'u32[144,128]{1,0:T(1,128)}', space=vmem, size = 0x12000, scoped, tag = 'internal scratch']
  #allocation2 [shape = 'bf16[4,10,17,16]{3,2,1,0:T(8,128)(2,1)}', space=vmem, size = 0x3c000, scoped, tag = 'scratch operand']
  %s0 = inlined_call_operand.vmem [shape: bf16[4,8,8,32], index: 0, kind: input, shape index: {}]
  %s1 = inlined_call_operand.vmem [shape: bf16[32,16], index: 1, kind: input, shape index: {}]
  %s2 = inlined_call_operand.vmem [shape: f32[1,16], index: 2, kind: input, shape index: {}]
  %s3 = inlined_call_operand.vmem [shape: bf16[1,144,16], index: 3, kind: input, shape index: {}]
  %s4 = inlined_call_operand.vmem [shape: f32[1,16], index: 4, kind: input, shape index: {}]
  %s5 = inlined_call_operand.vmem [shape: bf16[16,32], index: 5, kind: input, shape index: {}]
  %s6 = inlined_call_operand.vmem [shape: f32[1,32], index: 6, kind: input, shape index: {}]
  %s7 = inlined_call_operand.hbm [shape: bf16[4,8,8,32], index: 7, kind: output, shape index: {}]
  %s8 = sld [smem:[#allocation0]]
  $region42: #{bottleneck_forward.1} parent=0
    _
  %s10 = ssub.s32 1, %s8
  %s11 = scalar_select 0, %s10, %s8
  $region1: #{bottleneck_forward.1} parent=0
    #allocation3 [shape = 'u8[65536]{0}', space=vmem, size = 0x10000, scoped, tag = 'output window, operand 0, single buffered']
    #allocation4 [shape = 's32[1]{0}', space=sflag, size = 0x4, scoped, tag = 'scoped memory for bottleneck_forward.1']
    %12 = vsyncpa [#allocation4], 0
    // Predicated region
    $region2: #{bottleneck_forward.1} parent=1 // pred_check
      _
    $region3: #{bottleneck_forward.1} parent=1 // pred_check_branch
      %14 = sbr.rel (0) target = $region5
    $region4: #{bottleneck_forward.1} parent=1 // pred_region
      _
    $region5: #{bottleneck_forward.1} parent=1 // pred_fallthru
      _
    // Predicated region
    $region6: #{bottleneck_forward.1} parent=1 // pred_check
      _
    $region7: #{bottleneck_forward.1} parent=1 // pred_check_branch
      %16 = sbr.rel (0) target = $region9
    $region8: #{bottleneck_forward.1} parent=1 // pred_region
      _
    $region9: #{bottleneck_forward.1} parent=1 // pred_fallthru
      _
    // Predicated region
    $region10: #{bottleneck_forward.1} parent=1 // pred_check
      _
    $region11: #{bottleneck_forward.1} parent=1 // pred_check_branch
      %18 = sbr.rel (0) target = $region13
    $region12: #{bottleneck_forward.1} parent=1 // pred_region
      _
    $region13: #{bottleneck_forward.1} parent=1 // pred_fallthru
      _
    // Predicated region
    $region14: #{bottleneck_forward.1} parent=1 // pred_check
      _
    $region15: #{bottleneck_forward.1} parent=1 // pred_check_branch
      %20 = sbr.rel (0) target = $region17
    $region16: #{bottleneck_forward.1} parent=1 // pred_region
      _
    $region17: #{bottleneck_forward.1} parent=1 // pred_fallthru
      _
    // Predicated region
    $region18: #{bottleneck_forward.1} parent=1 // pred_check
      _
    $region19: #{bottleneck_forward.1} parent=1 // pred_check_branch
      %22 = sbr.rel (0) target = $region21
    $region20: #{bottleneck_forward.1} parent=1 // pred_region
      _
    $region21: #{bottleneck_forward.1} parent=1 // pred_fallthru
      _
    // Predicated region
    $region22: #{bottleneck_forward.1} parent=1 // pred_check
      _
    $region23: #{bottleneck_forward.1} parent=1 // pred_check_branch
      %24 = sbr.rel (0) target = $region25
    $region24: #{bottleneck_forward.1} parent=1 // pred_region
      _
    $region25: #{bottleneck_forward.1} parent=1 // pred_fallthru
      _
    // Predicated region
    $region26: #{bottleneck_forward.1} parent=1 // pred_check
      _
    $region27: #{bottleneck_forward.1} parent=1 // pred_check_branch
      %26 = sbr.rel (0) target = $region29
    $region28: #{bottleneck_forward.1} parent=1 // pred_region
      _
    $region29: #{bottleneck_forward.1} parent=1 // pred_fallthru
      _
    %p28 = scmp.eq.s32.totalorder 0, 0
    // Predicated region
    $region30: #{bottleneck_forward.1} parent=1 // pred_check
      %p29 = pneg %p28
    $region31: #{bottleneck_forward.1} parent=1 // pred_check_branch
      %31 = sbr.rel (%p29) target = $region33
    $region32: #{bottleneck_forward.1} parent=1 // pred_region
      %vm32 = vcmask 125952
      %33 = vst.msk [vmem:[#allocation2] sm:$0xf] %vm32, 0
      %34 = vst.msk [vmem:[#allocation2 + $0x4] sm:$0xf] %vm32, 0
      %vm35 = vcmask 122880
      %vm36 = vsmask.f32 256
      %vm37 = vmand %vm35, %vm36
      %v38 = vld [vmem:[#allocation2 + $0x8] sm:$0x1]
      %v39 = vsel %vm37, 0, %v38
      %40 = vst [vmem:[#allocation2 + $0x8] sm:$0x1] %v39
      %41 = vst.msk [vmem:[#allocation2 + $0xc] sm:$0xf] %vm32, 0
      %42 = vst.msk [vmem:[#allocation2 + $0x10] sm:$0xf] %vm32, 0
      %v43 = vld [vmem:[#allocation2 + $0x14] sm:$0x1]
      %v44 = vsel %vm37, 0, %v43
      %45 = vst [vmem:[#allocation2 + $0x14] sm:$0x1] %v44
      %46 = vst.msk [vmem:[#allocation2 + $0x18] sm:$0xf] %vm32, 0
      %47 = vst.msk [vmem:[#allocation2 + $0x1c] sm:$0xf] %vm32, 0
      %v48 = vld [vmem:[#allocation2 + $0x20] sm:$0x1]
      %v49 = vsel %vm37, 0, %v48
      %50 = vst [vmem:[#allocation2 + $0x20] sm:$0x1] %v49
      %51 = vst.msk [vmem:[#allocation2 + $0x24] sm:$0xf] %vm32, 0
      %52 = vst.msk [vmem:[#allocation2 + $0x28] sm:$0xf] %vm32, 0
      %v53 = vld [vmem:[#allocation2 + $0x2c] sm:$0x1]
      %v54 = vsel %vm37, 0, %v53
      %55 = vst [vmem:[#allocation2 + $0x2c] sm:$0x1] %v54
      %56 = vst.msk [vmem:[#allocation2 + $0x30] sm:$0xf] %vm32, 0
      %57 = vst.msk [vmem:[#allocation2 + $0x34] sm:$0xf] %vm32, 0
      %v58 = vld [vmem:[#allocation2 + $0x38] sm:$0x1]
      %v59 = vsel %vm37, 0, %v58
      %60 = vst [vmem:[#allocation2 + $0x38] sm:$0x1] %v59
      %61 = vst.msk [vmem:[#allocation2 + $0x3c] sm:$0xf] %vm32, 0
      %62 = vst.msk [vmem:[#allocation2 + $0x40] sm:$0xf] %vm32, 0
      %v63 = vld [vmem:[#allocation2 + $0x44] sm:$0x1]
      %v64 = vsel %vm37, 0, %v63
      %65 = vst [vmem:[#allocation2 + $0x44] sm:$0x1] %v64
      %66 = vst.msk [vmem:[#allocation2 + $0x48] sm:$0xf] %vm32, 0
      %67 = vst.msk [vmem:[#allocation2 + $0x4c] sm:$0xf] %vm32, 0
      %v68 = vld [vmem:[#allocation2 + $0x50] sm:$0x1]
      %v69 = vsel %vm37, 0, %v68
      %70 = vst [vmem:[#allocation2 + $0x50] sm:$0x1] %v69
      %71 = vst.msk [vmem:[#allocation2 + $0x54] sm:$0xf] %vm32, 0
      %72 = vst.msk [vmem:[#allocation2 + $0x58] sm:$0xf] %vm32, 0
      %v73 = vld [vmem:[#allocation2 + $0x5c] sm:$0x1]
      %v74 = vsel %vm37, 0, %v73
      %75 = vst [vmem:[#allocation2 + $0x5c] sm:$0x1] %v74
      %76 = vst.msk [vmem:[#allocation2 + $0x60] sm:$0xf] %vm32, 0
      %77 = vst.msk [vmem:[#allocation2 + $0x64] sm:$0xf] %vm32, 0
      %v78 = vld [vmem:[#allocation2 + $0x68] sm:$0x1]
      %v79 = vsel %vm37, 0, %v78
      %80 = vst [vmem:[#allocation2 + $0x68] sm:$0x1] %v79
      %81 = vst.msk [vmem:[#allocation2 + $0x6c] sm:$0xf] %vm32, 0
      %82 = vst.msk [vmem:[#allocation2 + $0x70] sm:$0xf] %vm32, 0
      %v83 = vld [vmem:[#allocation2 + $0x74] sm:$0x1]
      %v84 = vsel %vm37, 0, %v83
      %85 = vst [vmem:[#allocation2 + $0x74] sm:$0x1] %v84
      %86 = vst.msk [vmem:[#allocation2 + $0x78] sm:$0xf] %vm32, 0
      %87 = vst.msk [vmem:[#allocation2 + $0x7c] sm:$0xf] %vm32, 0
      %v88 = vld [vmem:[#allocation2 + $0x80] sm:$0x1]
      %v89 = vsel %vm37, 0, %v88
      %90 = vst [vmem:[#allocation2 + $0x80] sm:$0x1] %v89
      %91 = vst.msk [vmem:[#allocation2 + $0x84] sm:$0xf] %vm32, 0
      %92 = vst.msk [vmem:[#allocation2 + $0x88] sm:$0xf] %vm32, 0
      %v93 = vld [vmem:[#allocation2 + $0x8c] sm:$0x1]
      %v94 = vsel %vm37, 0, %v93
      %95 = vst [vmem:[#allocation2 + $0x8c] sm:$0x1] %v94
      %96 = vst.msk [vmem:[#allocation2 + $0x90] sm:$0xf] %vm32, 0
      %97 = vst.msk [vmem:[#allocation2 + $0x94] sm:$0xf] %vm32, 0
      %v98 = vld [vmem:[#allocation2 + $0x98] sm:$0x1]
      %v99 = vsel %vm37, 0, %v98
      %100 = vst [vmem:[#allocation2 + $0x98] sm:$0x1] %v99
      %101 = vst.msk [vmem:[#allocation2 + $0x9c] sm:$0xf] %vm32, 0
      %102 = vst.msk [vmem:[#allocation2 + $0xa0] sm:$0xf] %vm32, 0
      %v103 = vld [vmem:[#allocation2 + $0xa4] sm:$0x1]
      %v104 = vsel %vm37, 0, %v103
      %105 = vst [vmem:[#allocation2 + $0xa4] sm:$0x1] %v104
      %106 = vst.msk [vmem:[#allocation2 + $0xa8] sm:$0xf] %vm32, 0
      %107 = vst.msk [vmem:[#allocation2 + $0xac] sm:$0xf] %vm32, 0
      %v108 = vld [vmem:[#allocation2 + $0xb0] sm:$0x1]
      %v109 = vsel %vm37, 0, %v108
      %110 = vst [vmem:[#allocation2 + $0xb0] sm:$0x1] %v109
      %111 = vst.msk [vmem:[#allocation2 + $0xb4] sm:$0xf] %vm32, 0
      %112 = vst.msk [vmem:[#allocation2 + $0xb8] sm:$0xf] %vm32, 0
      %v113 = vld [vmem:[#allocation2 + $0xbc] sm:$0x1]
      %v114 = vsel %vm37, 0, %v113
      %115 = vst [vmem:[#allocation2 + $0xbc] sm:$0x1] %v114
      %116 = vst.msk [vmem:[#allocation2 + $0xc0] sm:$0xf] %vm32, 0
      %117 = vst.msk [vmem:[#allocation2 + $0xc4] sm:$0xf] %vm32, 0
      %v118 = vld [vmem:[#allocation2 + $0xc8] sm:$0x1]
      %v119 = vsel %vm37, 0, %v118
      %120 = vst [vmem:[#allocation2 + $0xc8] sm:$0x1] %v119
      %121 = vst.msk [vmem:[#allocation2 + $0xcc] sm:$0xf] %vm32, 0
      %122 = vst.msk [vmem:[#allocation2 + $0xd0] sm:$0xf] %vm32, 0
      %v123 = vld [vmem:[#allocation2 + $0xd4] sm:$0x1]
      %v124 = vsel %vm37, 0, %v123
      %125 = vst [vmem:[#allocation2 + $0xd4] sm:$0x1] %v124
      %126 = vst.msk [vmem:[#allocation2 + $0xd8] sm:$0xf] %vm32, 0
      %127 = vst.msk [vmem:[#allocation2 + $0xdc] sm:$0xf] %vm32, 0
      %v128 = vld [vmem:[#allocation2 + $0xe0] sm:$0x1]
      %v129 = vsel %vm37, 0, %v128
      %130 = vst [vmem:[#allocation2 + $0xe0] sm:$0x1] %v129
      %131 = vst.msk [vmem:[#allocation2 + $0xe4] sm:$0xf] %vm32, 0
      %132 = vst.msk [vmem:[#allocation2 + $0xe8] sm:$0xf] %vm32, 0
      %v133 = vld [vmem:[#allocation2 + $0xec] sm:$0x1]
      %v134 = vsel %vm37, 0, %v133
      %135 = vst [vmem:[#allocation2 + $0xec] sm:$0x1] %v134
      %136 = vst.msk [vmem:[#allocation2 + $0xf0] sm:$0xf] %vm32, 0
      %137 = vst.msk [vmem:[#allocation2 + $0xf4] sm:$0xf] %vm32, 0
      %v138 = vld [vmem:[#allocation2 + $0xf8] sm:$0x1]
      %v139 = vsel %vm37, 0, %v138
      %140 = vst [vmem:[#allocation2 + $0xf8] sm:$0x1] %v139
      %141 = vst.msk [vmem:[#allocation2 + $0xfc] sm:$0xf] %vm32, 0
      %142 = vst.msk [vmem:[#allocation2 + $0x100] sm:$0xf] %vm32, 0
      %v143 = vld [vmem:[#allocation2 + $0x104] sm:$0x1]
      %v144 = vsel %vm37, 0, %v143
      %145 = vst [vmem:[#allocation2 + $0x104] sm:$0x1] %v144
      %146 = vst.msk [vmem:[#allocation2 + $0x108] sm:$0xf] %vm32, 0
      %147 = vst.msk [vmem:[#allocation2 + $0x10c] sm:$0xf] %vm32, 0
      %v148 = vld [vmem:[#allocation2 + $0x110] sm:$0x1]
      %v149 = vsel %vm37, 0, %v148
      %150 = vst [vmem:[#allocation2 + $0x110] sm:$0x1] %v149
      %151 = vst.msk [vmem:[#allocation2 + $0x114] sm:$0xf] %vm32, 0
      %152 = vst.msk [vmem:[#allocation2 + $0x118] sm:$0xf] %vm32, 0
      %v153 = vld [vmem:[#allocation2 + $0x11c] sm:$0x1]
      %v154 = vsel %vm37, 0, %v153
      %155 = vst [vmem:[#allocation2 + $0x11c] sm:$0x1] %v154
      %156 = vst.msk [vmem:[#allocation2 + $0x120] sm:$0xf] %vm32, 0
      %157 = vst.msk [vmem:[#allocation2 + $0x124] sm:$0xf] %vm32, 0
      %v158 = vld [vmem:[#allocation2 + $0x128] sm:$0x1]
      %v159 = vsel %vm37, 0, %v158
      %160 = vst [vmem:[#allocation2 + $0x128] sm:$0x1] %v159
      %161 = vst.msk [vmem:[#allocation2 + $0x12c] sm:$0xf] %vm32, 0
      %162 = vst.msk [vmem:[#allocation2 + $0x130] sm:$0xf] %vm32, 0
      %v163 = vld [vmem:[#allocation2 + $0x134] sm:$0x1]
      %v164 = vsel %vm37, 0, %v163
      %165 = vst [vmem:[#allocation2 + $0x134] sm:$0x1] %v164
      %166 = vst.msk [vmem:[#allocation2 + $0x138] sm:$0xf] %vm32, 0
      %167 = vst.msk [vmem:[#allocation2 + $0x13c] sm:$0xf] %vm32, 0
      %v168 = vld [vmem:[#allocation2 + $0x140] sm:$0x1]
      %v169 = vsel %vm37, 0, %v168
      %170 = vst [vmem:[#allocation2 + $0x140] sm:$0x1] %v169
      %171 = vst.msk [vmem:[#allocation2 + $0x144] sm:$0xf] %vm32, 0
      %172 = vst.msk [vmem:[#allocation2 + $0x148] sm:$0xf] %vm32, 0
      %v173 = vld [vmem:[#allocation2 + $0x14c] sm:$0x1]
      %v174 = vsel %vm37, 0, %v173
      %175 = vst [vmem:[#allocation2 + $0x14c] sm:$0x1] %v174
      %176 = vst.msk [vmem:[#allocation2 + $0x150] sm:$0xf] %vm32, 0
      %177 = vst.msk [vmem:[#allocation2 + $0x154] sm:$0xf] %vm32, 0
      %v178 = vld [vmem:[#allocation2 + $0x158] sm:$0x1]
      %v179 = vsel %vm37, 0, %v178
      %180 = vst [vmem:[#allocation2 + $0x158] sm:$0x1] %v179
      %181 = vst.msk [vmem:[#allocation2 + $0x15c] sm:$0xf] %vm32, 0
      %182 = vst.msk [vmem:[#allocation2 + $0x160] sm:$0xf] %vm32, 0
      %v183 = vld [vmem:[#allocation2 + $0x164] sm:$0x1]
      %v184 = vsel %vm37, 0, %v183
      %185 = vst [vmem:[#allocation2 + $0x164] sm:$0x1] %v184
      %186 = vst.msk [vmem:[#allocation2 + $0x168] sm:$0xf] %vm32, 0
      %187 = vst.msk [vmem:[#allocation2 + $0x16c] sm:$0xf] %vm32, 0
      %v188 = vld [vmem:[#allocation2 + $0x170] sm:$0x1]
      %v189 = vsel %vm37, 0, %v188
      %190 = vst [vmem:[#allocation2 + $0x170] sm:$0x1] %v189
      %191 = vst.msk [vmem:[#allocation2 + $0x174] sm:$0xf] %vm32, 0
      %192 = vst.msk [vmem:[#allocation2 + $0x178] sm:$0xf] %vm32, 0
      %v193 = vld [vmem:[#allocation2 + $0x17c] sm:$0x1]
      %v194 = vsel %vm37, 0, %v193
      %195 = vst [vmem:[#allocation2 + $0x17c] sm:$0x1] %v194
      %196 = vst.msk [vmem:[#allocation2 + $0x180] sm:$0xf] %vm32, 0
      %197 = vst.msk [vmem:[#allocation2 + $0x184] sm:$0xf] %vm32, 0
      %v198 = vld [vmem:[#allocation2 + $0x188] sm:$0x1]
      %v199 = vsel %vm37, 0, %v198
      %200 = vst [vmem:[#allocation2 + $0x188] sm:$0x1] %v199
      %201 = vst.msk [vmem:[#allocation2 + $0x18c] sm:$0xf] %vm32, 0
      %202 = vst.msk [vmem:[#allocation2 + $0x190] sm:$0xf] %vm32, 0
      %v203 = vld [vmem:[#allocation2 + $0x194] sm:$0x1]
      %v204 = vsel %vm37, 0, %v203
      %205 = vst [vmem:[#allocation2 + $0x194] sm:$0x1] %v204
      %206 = vst.msk [vmem:[#allocation2 + $0x198] sm:$0xf] %vm32, 0
      %207 = vst.msk [vmem:[#allocation2 + $0x19c] sm:$0xf] %vm32, 0
      %v208 = vld [vmem:[#allocation2 + $0x1a0] sm:$0x1]
      %v209 = vsel %vm37, 0, %v208
      %210 = vst [vmem:[#allocation2 + $0x1a0] sm:$0x1] %v209
      %211 = vst.msk [vmem:[#allocation2 + $0x1a4] sm:$0xf] %vm32, 0
      %212 = vst.msk [vmem:[#allocation2 + $0x1a8] sm:$0xf] %vm32, 0
      %v213 = vld [vmem:[#allocation2 + $0x1ac] sm:$0x1]
      %v214 = vsel %vm37, 0, %v213
      %215 = vst [vmem:[#allocation2 + $0x1ac] sm:$0x1] %v214
      %216 = vst.msk [vmem:[#allocation2 + $0x1b0] sm:$0xf] %vm32, 0
      %217 = vst.msk [vmem:[#allocation2 + $0x1b4] sm:$0xf] %vm32, 0
      %v218 = vld [vmem:[#allocation2 + $0x1b8] sm:$0x1]
      %v219 = vsel %vm37, 0, %v218
      %220 = vst [vmem:[#allocation2 + $0x1b8] sm:$0x1] %v219
      %221 = vst.msk [vmem:[#allocation2 + $0x1bc] sm:$0xf] %vm32, 0
      %222 = vst.msk [vmem:[#allocation2 + $0x1c0] sm:$0xf] %vm32, 0
      %v223 = vld [vmem:[#allocation2 + $0x1c4] sm:$0x1]
      %v224 = vsel %vm37, 0, %v223
      %225 = vst [vmem:[#allocation2 + $0x1c4] sm:$0x1] %v224
      %226 = vst.msk [vmem:[#allocation2 + $0x1c8] sm:$0xf] %vm32, 0
      %227 = vst.msk [vmem:[#allocation2 + $0x1cc] sm:$0xf] %vm32, 0
      %v228 = vld [vmem:[#allocation2 + $0x1d0] sm:$0x1]
      %v229 = vsel %vm37, 0, %v228
      %230 = vst [vmem:[#allocation2 + $0x1d0] sm:$0x1] %v229
      %231 = vst.msk [vmem:[#allocation2 + $0x1d4] sm:$0xf] %vm32, 0
      %232 = vst.msk [vmem:[#allocation2 + $0x1d8] sm:$0xf] %vm32, 0
      %v233 = vld [vmem:[#allocation2 + $0x1dc] sm:$0x1]
      %v234 = vsel %vm37, 0, %v233
      %235 = vst [vmem:[#allocation2 + $0x1dc] sm:$0x1] %v234
    $region33: #{bottleneck_forward.1} parent=1 // pred_fallthru
      _
    %v236 = vld [vmem:[%s0] sm:$0xf]
    %v237 = vld [vmem:[%s0 + $0x4] sm:$0xf]
    %v238 = vld [vmem:[%s0 + $0x8] sm:$0xf]
    %v239 = vld [vmem:[%s0 + $0xc] sm:$0xf]
    %v240 = vld [vmem:[%s0 + $0x10] sm:$0xf]
    %v241 = vld [vmem:[%s0 + $0x14] sm:$0xf]
    %v242 = vld [vmem:[%s0 + $0x18] sm:$0xf]
    %v243 = vld [vmem:[%s0 + $0x1c] sm:$0xf]
    %v244 = vld [vmem:[%s0 + $0x20] sm:$0xf]
    %v245 = vld [vmem:[%s0 + $0x24] sm:$0xf]
    %v246 = vld [vmem:[%s0 + $0x28] sm:$0xf]
    %v247 = vld [vmem:[%s0 + $0x2c] sm:$0xf]
    %v248 = vld [vmem:[%s0 + $0x30] sm:$0xf]
    %v249 = vld [vmem:[%s0 + $0x34] sm:$0xf]
    %v250 = vld [vmem:[%s0 + $0x38] sm:$0xf]
    %v251 = vld [vmem:[%s0 + $0x3c] sm:$0xf]
    %v252 = vld [vmem:[%s0 + $0x40] sm:$0xf]
    %v253 = vld [vmem:[%s0 + $0x44] sm:$0xf]
    %v254 = vld [vmem:[%s0 + $0x48] sm:$0xf]
    %v255 = vld [vmem:[%s0 + $0x4c] sm:$0xf]
    %v256 = vld [vmem:[%s0 + $0x50] sm:$0xf]
    %v257 = vld [vmem:[%s0 + $0x54] sm:$0xf]
    %v258 = vld [vmem:[%s0 + $0x58] sm:$0xf]
    %v259 = vld [vmem:[%s0 + $0x5c] sm:$0xf]
    %v260 = vld [vmem:[%s0 + $0x60] sm:$0xf]
    %v261 = vld [vmem:[%s0 + $0x64] sm:$0xf]
    %v262 = vld [vmem:[%s0 + $0x68] sm:$0xf]
    %v263 = vld [vmem:[%s0 + $0x6c] sm:$0xf]
    %v264 = vld [vmem:[%s0 + $0x70] sm:$0xf]
    %v265 = vld [vmem:[%s0 + $0x74] sm:$0xf]
    %v266 = vld [vmem:[%s0 + $0x78] sm:$0xf]
    %v267 = vld [vmem:[%s0 + $0x7c] sm:$0xf]
    %v268 = vld [vmem:[%s1] sm:$0xf]
    %v269 = vld [vmem:[%s1 + $0x4] sm:$0xf]
    %v270 = vld [vmem:[%s1 + $0x8] sm:$0xf]
    %v271 = vld [vmem:[%s1 + $0xc] sm:$0xf]
    %v272 = vld [vmem:[%s2] sm:$0x1]
    %v274 = vlaneseq
    %v275 = vshrl.u32 %v274, 7
    %v276 = vsub.s32 0, %v275
    %v277 = vrot.slane %v272, %v276
    %v311 = vunpack.c.l.b16 %v236
    %v312 = vunpack.c.l.b16 %v237
    %v313 = vunpack.c.l.b16 %v238
    %v314 = vunpack.c.l.b16 %v239
    %v315 = vunpack.c.l.b16 %v240
    %v316 = vunpack.c.l.b16 %v241
    %v317 = vunpack.c.l.b16 %v242
    %v318 = vunpack.c.l.b16 %v243
    %v319 = vunpack.c.l.b16 %v244
    %v320 = vunpack.c.l.b16 %v245
    %v321 = vunpack.c.l.b16 %v246
    %v322 = vunpack.c.l.b16 %v247
    %v323 = vunpack.c.l.b16 %v248
    %v324 = vunpack.c.l.b16 %v249
    %v325 = vunpack.c.l.b16 %v250
    %v326 = vunpack.c.l.b16 %v251
    %v327 = vunpack.c.l.b16 %v252
    %v328 = vunpack.c.l.b16 %v253
    %v329 = vunpack.c.l.b16 %v254
    %v330 = vunpack.c.l.b16 %v255
    %v331 = vunpack.c.l.b16 %v256
    %v332 = vunpack.c.l.b16 %v257
    %v333 = vunpack.c.l.b16 %v258
    %v334 = vunpack.c.l.b16 %v259
    %v335 = vunpack.c.l.b16 %v260
    %v336 = vunpack.c.l.b16 %v261
    %v337 = vunpack.c.l.b16 %v262
    %v338 = vunpack.c.l.b16 %v263
    %v339 = vunpack.c.l.b16 %v264
    %v340 = vunpack.c.l.b16 %v265
    %v341 = vunpack.c.l.b16 %v266
    %v342 = vunpack.c.l.b16 %v267
    %v343 = vpack.c.b16 %v312, %v311
    %v344 = vpack.c.b16 %v314, %v313
    %v345 = vpack.c.b16 %v316, %v315
    %v346 = vpack.c.b16 %v318, %v317
    %v347 = vpack.c.b16 %v320, %v319
    %v348 = vpack.c.b16 %v322, %v321
    %v349 = vpack.c.b16 %v324, %v323
    %v350 = vpack.c.b16 %v326, %v325
    %v351 = vpack.c.b16 %v328, %v327
    %v352 = vpack.c.b16 %v330, %v329
    %v353 = vpack.c.b16 %v332, %v331
    %v354 = vpack.c.b16 %v334, %v333
    %v355 = vpack.c.b16 %v336, %v335
    %v356 = vpack.c.b16 %v338, %v337
    %v357 = vpack.c.b16 %v340, %v339
    %v358 = vpack.c.b16 %v342, %v341
    %v363 = vunpack.c.l.b16 %v268
    %v364 = vunpack.c.l.b16 %v269
    %v365 = vunpack.c.l.b16 %v270
    %v366 = vunpack.c.l.b16 %v271
    %v367 = vpack.c.b16 %v364, %v363
    %v368 = vpack.c.b16 %v366, %v365
    %vm371 = vcmask 261120
    %v373 = vsel %vm371, %v343, 0
    %v376 = vsel %vm371, %v344, 0
    %v379 = vsel %vm371, %v345, 0
    %v382 = vsel %vm371, %v346, 0
    %v385 = vsel %vm371, %v347, 0
    %v388 = vsel %vm371, %v348, 0
    %v391 = vsel %vm371, %v349, 0
    %v394 = vsel %vm371, %v350, 0
    %v397 = vsel %vm371, %v351, 0
    %v400 = vsel %vm371, %v352, 0
    %v403 = vsel %vm371, %v353, 0
    %v406 = vsel %vm371, %v354, 0
    %v409 = vsel %vm371, %v355, 0
    %v412 = vsel %vm371, %v356, 0
    %v415 = vsel %vm371, %v357, 0
    %v418 = vsel %vm371, %v358, 0
    %420 = vmatprep.subr.bf16.mxu0 0
    %421 = vmatpush1.bf16.msra.mxu0 0
    %422 = vmatprep.subr.bf16.mxu0 0
    %423 = vmatpush1.bf16.msra.mxu0 0
    %424 = vmatprep.subr.bf16.mxu0 0
    %425 = vmatpush1.bf16.msra.mxu0 0
    %426 = vmatprep.subr.bf16.mxu0 0
    %427 = vmatpush1.bf16.msra.mxu0 0
    %428 = vmatprep.subr.bf16.mxu0 0
    %429 = vmatpush1.bf16.msra.mxu0 0
    %430 = vmatprep.subr.bf16.mxu0 0
    %431 = vmatpush1.bf16.msra.mxu0 0
    %432 = vmatprep.subr.bf16.mxu0 0
    %433 = vmatpush1.bf16.msra.mxu0 %v368
    %434 = vmatprep.subr.bf16.mxu0 0
    %435 = vmatpush1.bf16.msra.mxu0 %v367
    %436 = vmatprep.subr.bf16.mxu0 0
    %437 = vmatpush2.bf16.msra.mxu0 0
    %438 = vmatprep.subr.bf16.mxu0 0
    %439 = vmatpush2.bf16.msra.mxu0 0
    %440 = vmatprep.subr.bf16.mxu0 0
    %441 = vmatpush2.bf16.msra.mxu0 0
    %442 = vmatprep.subr.bf16.mxu0 0
    %443 = vmatpush2.bf16.msra.mxu0 0
    %444 = vmatprep.subr.bf16.mxu0 0
    %445 = vmatpush2.bf16.msra.mxu0 0
    %446 = vmatprep.subr.bf16.mxu0 0
    %447 = vmatpush2.bf16.msra.mxu0 0
    %448 = vmatprep.subr.bf16.mxu0 0
    %449 = vmatpush2.bf16.msra.mxu0 0
    %450 = vmatprep.subr.bf16.mxu0 0
    %451 = vmatpush2.bf16.msra.mxu0 0
    %452 = vmatprep.mubr.bf16.mxu0 0
    %453 = vmatmul.mubr.bf16.gmra.mxu0 %v373
    %v454 = vpop.f32.mrf.mxu0
    %v455 = vadd.f32 %v277, %v454
    %v456 = vpop.f32.mrf.mxu0
    %v457 = vpop.f32.mrf.mxu0
    %v458 = vadd.f32 %v277, %v457
    %v459 = vpop.f32.mrf.mxu0
    %460 = vmatprep.mubr.bf16.mxu0 0
    %461 = vmatmul.mubr.bf16.gmra.mxu0 %v376
    %v462 = vpop.f32.mrf.mxu0
    %v463 = vadd.f32 %v277, %v462
    %v464 = vpop.f32.mrf.mxu0
    %v465 = vpop.f32.mrf.mxu0
    %v466 = vadd.f32 %v277, %v465
    %v467 = vpop.f32.mrf.mxu0
    %468 = vmatprep.mubr.bf16.mxu0 0
    %469 = vmatmul.mubr.bf16.gmra.mxu0 %v379
    %v470 = vpop.f32.mrf.mxu0
    %v471 = vadd.f32 %v277, %v470
    %v472 = vpop.f32.mrf.mxu0
    %v473 = vpop.f32.mrf.mxu0
    %v474 = vadd.f32 %v277, %v473
    %v475 = vpop.f32.mrf.mxu0
    %476 = vmatprep.mubr.bf16.mxu0 0
    %477 = vmatmul.mubr.bf16.gmra.mxu0 %v382
    %v478 = vpop.f32.mrf.mxu0
    %v479 = vadd.f32 %v277, %v478
    %v480 = vpop.f32.mrf.mxu0
    %v481 = vpop.f32.mrf.mxu0
    %v482 = vadd.f32 %v277, %v481
    %v483 = vpop.f32.mrf.mxu0
    %484 = vmatprep.mubr.bf16.mxu0 0
    %485 = vmatmul.mubr.bf16.gmra.mxu0 %v385
    %v486 = vpop.f32.mrf.mxu0
    %v487 = vadd.f32 %v277, %v486
    %v488 = vpop.f32.mrf.mxu0
    %v489 = vpop.f32.mrf.mxu0
    %v490 = vadd.f32 %v277, %v489
    %v491 = vpop.f32.mrf.mxu0
    %492 = vmatprep.mubr.bf16.mxu0 0
    %493 = vmatmul.mubr.bf16.gmra.mxu0 %v388
    %v494 = vpop.f32.mrf.mxu0
    %v495 = vadd.f32 %v277, %v494
    %v496 = vpop.f32.mrf.mxu0
    %v497 = vpop.f32.mrf.mxu0
    %v498 = vadd.f32 %v277, %v497
    %v499 = vpop.f32.mrf.mxu0
    %500 = vmatprep.mubr.bf16.mxu0 0
    %501 = vmatmul.mubr.bf16.gmra.mxu0 %v391
    %v502 = vpop.f32.mrf.mxu0
    %v503 = vadd.f32 %v277, %v502
    %v504 = vpop.f32.mrf.mxu0
    %v505 = vpop.f32.mrf.mxu0
    %v506 = vadd.f32 %v277, %v505
    %v507 = vpop.f32.mrf.mxu0
    %508 = vmatprep.mubr.bf16.mxu0 0
    %509 = vmatmul.mubr.bf16.gmra.mxu0 %v394
    %v510 = vpop.f32.mrf.mxu0
    %v511 = vadd.f32 %v277, %v510
    %v512 = vpop.f32.mrf.mxu0
    %v513 = vpop.f32.mrf.mxu0
    %v514 = vadd.f32 %v277, %v513
    %v515 = vpop.f32.mrf.mxu0
    %516 = vmatprep.mubr.bf16.mxu0 0
    %517 = vmatmul.mubr.bf16.gmra.mxu0 %v397
    %v518 = vpop.f32.mrf.mxu0
    %v519 = vadd.f32 %v277, %v518
    %v520 = vpop.f32.mrf.mxu0
    %v521 = vpop.f32.mrf.mxu0
    %v522 = vadd.f32 %v277, %v521
    %v523 = vpop.f32.mrf.mxu0
    %524 = vmatprep.mubr.bf16.mxu0 0
    %525 = vmatmul.mubr.bf16.gmra.mxu0 %v400
    %v526 = vpop.f32.mrf.mxu0
    %v527 = vadd.f32 %v277, %v526
    %v528 = vpop.f32.mrf.mxu0
    %v529 = vpop.f32.mrf.mxu0
    %v530 = vadd.f32 %v277, %v529
    %v531 = vpop.f32.mrf.mxu0
    %532 = vmatprep.mubr.bf16.mxu0 0
    %533 = vmatmul.mubr.bf16.gmra.mxu0 %v403
    %v534 = vpop.f32.mrf.mxu0
    %v535 = vadd.f32 %v277, %v534
    %v536 = vpop.f32.mrf.mxu0
    %v537 = vpop.f32.mrf.mxu0
    %v538 = vadd.f32 %v277, %v537
    %v539 = vpop.f32.mrf.mxu0
    %540 = vmatprep.mubr.bf16.mxu0 0
    %541 = vmatmul.mubr.bf16.gmra.mxu0 %v406
    %v542 = vpop.f32.mrf.mxu0
    %v543 = vadd.f32 %v277, %v542
    %v544 = vpop.f32.mrf.mxu0
    %v545 = vpop.f32.mrf.mxu0
    %v546 = vadd.f32 %v277, %v545
    %v547 = vpop.f32.mrf.mxu0
    %548 = vmatprep.mubr.bf16.mxu0 0
    %549 = vmatmul.mubr.bf16.gmra.mxu0 %v409
    %v550 = vpop.f32.mrf.mxu0
    %v551 = vadd.f32 %v277, %v550
    %v552 = vpop.f32.mrf.mxu0
    %v553 = vpop.f32.mrf.mxu0
    %v554 = vadd.f32 %v277, %v553
    %v555 = vpop.f32.mrf.mxu0
    %556 = vmatprep.mubr.bf16.mxu0 0
    %557 = vmatmul.mubr.bf16.gmra.mxu0 %v412
    %v558 = vpop.f32.mrf.mxu0
    %v559 = vadd.f32 %v277, %v558
    %v560 = vpop.f32.mrf.mxu0
    %v561 = vpop.f32.mrf.mxu0
    %v562 = vadd.f32 %v277, %v561
    %v563 = vpop.f32.mrf.mxu0
    %564 = vmatprep.mubr.bf16.mxu0 0
    %565 = vmatmul.mubr.bf16.gmra.mxu0 %v415
    %v566 = vpop.f32.mrf.mxu0
    %v567 = vadd.f32 %v277, %v566
    %v568 = vpop.f32.mrf.mxu0
    %v569 = vpop.f32.mrf.mxu0
    %v570 = vadd.f32 %v277, %v569
    %v571 = vpop.f32.mrf.mxu0
    %572 = vmatprep.mubr.bf16.mxu0 0
    %573 = vmatmul.mubr.bf16.gmra.mxu0 %v418
    %v574 = vpop.f32.mrf.mxu0
    %v575 = vadd.f32 %v277, %v574
    %v576 = vpop.f32.mrf.mxu0
    %v577 = vpop.f32.mrf.mxu0
    %v578 = vadd.f32 %v277, %v577
    %v579 = vpop.f32.mrf.mxu0
    %580 = vdwg.mxu0
    %v581 = vmax.f32 %v455, 0.0
    %v582 = vmax.f32 %v458, 0.0
    %v583 = vmax.f32 %v463, 0.0
    %v584 = vmax.f32 %v466, 0.0
    %v585 = vmax.f32 %v471, 0.0
    %v586 = vmax.f32 %v474, 0.0
    %v587 = vmax.f32 %v479, 0.0
    %v588 = vmax.f32 %v482, 0.0
    %v589 = vmax.f32 %v487, 0.0
    %v590 = vmax.f32 %v490, 0.0
    %v591 = vmax.f32 %v495, 0.0
    %v592 = vmax.f32 %v498, 0.0
    %v593 = vmax.f32 %v503, 0.0
    %v594 = vmax.f32 %v506, 0.0
    %v595 = vmax.f32 %v511, 0.0
    %v596 = vmax.f32 %v514, 0.0
    %v597 = vmax.f32 %v519, 0.0
    %v598 = vmax.f32 %v522, 0.0
    %v599 = vmax.f32 %v527, 0.0
    %v600 = vmax.f32 %v530, 0.0
    %v601 = vmax.f32 %v535, 0.0
    %v602 = vmax.f32 %v538, 0.0
    %v603 = vmax.f32 %v543, 0.0
    %v604 = vmax.f32 %v546, 0.0
    %v605 = vmax.f32 %v551, 0.0
    %v606 = vmax.f32 %v554, 0.0
    %v607 = vmax.f32 %v559, 0.0
    %v608 = vmax.f32 %v562, 0.0
    %v609 = vmax.f32 %v567, 0.0
    %v610 = vmax.f32 %v570, 0.0
    %v611 = vmax.f32 %v575, 0.0
    %v612 = vmax.f32 %v578, 0.0
    %v613 = vpack.c.bf16 %v581, %v581
    %v614 = vpack.c.bf16 %v582, %v582
    %v615 = vpack.c.bf16 %v583, %v583
    %v616 = vpack.c.bf16 %v584, %v584
    %v617 = vpack.c.bf16 %v585, %v585
    %v618 = vpack.c.bf16 %v586, %v586
    %v619 = vpack.c.bf16 %v587, %v587
    %v620 = vpack.c.bf16 %v588, %v588
    %v621 = vpack.c.bf16 %v589, %v589
    %v622 = vpack.c.bf16 %v590, %v590
    %v623 = vpack.c.bf16 %v591, %v591
    %v624 = vpack.c.bf16 %v592, %v592
    %v625 = vpack.c.bf16 %v593, %v593
    %v626 = vpack.c.bf16 %v594, %v594
    %v627 = vpack.c.bf16 %v595, %v595
    %v628 = vpack.c.bf16 %v596, %v596
    %v629 = vpack.c.bf16 %v597, %v597
    %v630 = vpack.c.bf16 %v598, %v598
    %v631 = vpack.c.bf16 %v599, %v599
    %v632 = vpack.c.bf16 %v600, %v600
    %v633 = vpack.c.bf16 %v601, %v601
    %v634 = vpack.c.bf16 %v602, %v602
    %v635 = vpack.c.bf16 %v603, %v603
    %v636 = vpack.c.bf16 %v604, %v604
    %v637 = vpack.c.bf16 %v605, %v605
    %v638 = vpack.c.bf16 %v606, %v606
    %v639 = vpack.c.bf16 %v607, %v607
    %v640 = vpack.c.bf16 %v608, %v608
    %v641 = vpack.c.bf16 %v609, %v609
    %v642 = vpack.c.bf16 %v610, %v610
    %v643 = vpack.c.bf16 %v611, %v611
    %v644 = vpack.c.bf16 %v612, %v612
    %s645 = scalar_lea.vmem [#allocation2], 12
    %vm646 = vcmask 125952
    %647 = vst.msk [vmem:[%s645 + $0x4] sm:$0xf] %vm646, %v613
    %648 = vst.msk [vmem:[%s645 + $0x10] sm:$0xf] %vm646, %v614
    %649 = vst.msk [vmem:[%s645 + $0x1c] sm:$0xf] %vm646, %v615
    %650 = vst.msk [vmem:[%s645 + $0x28] sm:$0xf] %vm646, %v616
    %651 = vst.msk [vmem:[%s645 + $0x34] sm:$0xf] %vm646, %v617
    %652 = vst.msk [vmem:[%s645 + $0x40] sm:$0xf] %vm646, %v618
    %653 = vst.msk [vmem:[%s645 + $0x4c] sm:$0xf] %vm646, %v619
    %654 = vst.msk [vmem:[%s645 + $0x58] sm:$0xf] %vm646, %v620
    %655 = vst.msk [vmem:[%s645 + $0x7c] sm:$0xf] %vm646, %v621
    %656 = vst.msk [vmem:[%s645 + $0x88] sm:$0xf] %vm646, %v622
    %657 = vst.msk [vmem:[%s645 + $0x94] sm:$0xf] %vm646, %v623
    %658 = vst.msk [vmem:[%s645 + $0xa0] sm:$0xf] %vm646, %v624
    %659 = vst.msk [vmem:[%s645 + $0xac] sm:$0xf] %vm646, %v625
    %660 = vst.msk [vmem:[%s645 + $0xb8] sm:$0xf] %vm646, %v626
    %661 = vst.msk [vmem:[%s645 + $0xc4] sm:$0xf] %vm646, %v627
    %662 = vst.msk [vmem:[%s645 + $0xd0] sm:$0xf] %vm646, %v628
    %663 = vst.msk [vmem:[%s645 + $0xf4] sm:$0xf] %vm646, %v629
    %664 = vst.msk [vmem:[%s645 + $0x100] sm:$0xf] %vm646, %v630
    %665 = vst.msk [vmem:[%s645 + $0x10c] sm:$0xf] %vm646, %v631
    %666 = vst.msk [vmem:[%s645 + $0x118] sm:$0xf] %vm646, %v632
    %667 = vst.msk [vmem:[%s645 + $0x124] sm:$0xf] %vm646, %v633
    %668 = vst.msk [vmem:[%s645 + $0x130] sm:$0xf] %vm646, %v634
    %669 = vst.msk [vmem:[%s645 + $0x13c] sm:$0xf] %vm646, %v635
    %670 = vst.msk [vmem:[%s645 + $0x148] sm:$0xf] %vm646, %v636
    %671 = vst.msk [vmem:[%s645 + $0x16c] sm:$0xf] %vm646, %v637
    %672 = vst.msk [vmem:[%s645 + $0x178] sm:$0xf] %vm646, %v638
    %673 = vst.msk [vmem:[%s645 + $0x184] sm:$0xf] %vm646, %v639
    %674 = vst.msk [vmem:[%s645 + $0x190] sm:$0xf] %vm646, %v640
    %675 = vst.msk [vmem:[%s645 + $0x19c] sm:$0xf] %vm646, %v641
    %676 = vst.msk [vmem:[%s645 + $0x1a8] sm:$0xf] %vm646, %v642
    %677 = vst.msk [vmem:[%s645 + $0x1b4] sm:$0xf] %vm646, %v643
    %678 = vst.msk [vmem:[%s645 + $0x1c0] sm:$0xf] %vm646, %v644
    %v679 = vld [vmem:[#allocation2] sm:$0x8]
    %v680 = vld [vmem:[#allocation2 + $0x4] sm:$0xf]
    %v681 = vld [vmem:[#allocation2 + $0xc] sm:$0x8]
    %v682 = vld [vmem:[#allocation2 + $0x10] sm:$0xf]
    %v683 = vld [vmem:[#allocation2 + $0x18] sm:$0x8]
    %v684 = vld [vmem:[#allocation2 + $0x1c] sm:$0xf]
    %v685 = vld [vmem:[#allocation2 + $0x24] sm:$0x8]
    %v686 = vld [vmem:[#allocation2 + $0x28] sm:$0xf]
    %v687 = vld [vmem:[#allocation2 + $0x30] sm:$0x8]
    %v688 = vld [vmem:[#allocation2 + $0x34] sm:$0xf]
    %v689 = vld [vmem:[#allocation2 + $0x3c] sm:$0x8]
    %v690 = vld [vmem:[#allocation2 + $0x40] sm:$0xf]
    %v691 = vld [vmem:[#allocation2 + $0x48] sm:$0x8]
    %v692 = vld [vmem:[#allocation2 + $0x4c] sm:$0xf]
    %v693 = vld [vmem:[#allocation2 + $0x54] sm:$0x8]
    %v694 = vld [vmem:[#allocation2 + $0x58] sm:$0xf]
    %v695 = vld [vmem:[#allocation2 + $0x78] sm:$0x8]
    %v696 = vld [vmem:[#allocation2 + $0x7c] sm:$0xf]
    %v697 = vld [vmem:[#allocation2 + $0x84] sm:$0x8]
    %v698 = vld [vmem:[#allocation2 + $0x88] sm:$0xf]
    %v699 = vld [vmem:[#allocation2 + $0x90] sm:$0x8]
    %v700 = vld [vmem:[#allocation2 + $0x94] sm:$0xf]
    %v701 = vld [vmem:[#allocation2 + $0x9c] sm:$0x8]
    %v702 = vld [vmem:[#allocation2 + $0xa0] sm:$0xf]
    %v703 = vld [vmem:[#allocation2 + $0xa8] sm:$0x8]
    %v704 = vld [vmem:[#allocation2 + $0xac] sm:$0xf]
    %v705 = vld [vmem:[#allocation2 + $0xb4] sm:$0x8]
    %v706 = vld [vmem:[#allocation2 + $0xb8] sm:$0xf]
    %v707 = vld [vmem:[#allocation2 + $0xc0] sm:$0x8]
    %v708 = vld [vmem:[#allocation2 + $0xc4] sm:$0xf]
    %v709 = vld [vmem:[#allocation2 + $0xcc] sm:$0x8]
    %v710 = vld [vmem:[#allocation2 + $0xd0] sm:$0xf]
    %v711 = vld [vmem:[#allocation2 + $0xf0] sm:$0x8]
    %v712 = vld [vmem:[#allocation2 + $0xf4] sm:$0xf]
    %v713 = vld [vmem:[#allocation2 + $0xfc] sm:$0x8]
    %v714 = vld [vmem:[#allocation2 + $0x100] sm:$0xf]
    %v715 = vld [vmem:[#allocation2 + $0x108] sm:$0x8]
    %v716 = vld [vmem:[#allocation2 + $0x10c] sm:$0xf]
    %v717 = vld [vmem:[#allocation2 + $0x114] sm:$0x8]
    %v718 = vld [vmem:[#allocation2 + $0x118] sm:$0xf]
    %v719 = vld [vmem:[#allocation2 + $0x120] sm:$0x8]
    %v720 = vld [vmem:[#allocation2 + $0x124] sm:$0xf]
    %v721 = vld [vmem:[#allocation2 + $0x12c] sm:$0x8]
    %v722 = vld [vmem:[#allocation2 + $0x130] sm:$0xf]
    %v723 = vld [vmem:[#allocation2 + $0x138] sm:$0x8]
    %v724 = vld [vmem:[#allocation2 + $0x13c] sm:$0xf]
    %v725 = vld [vmem:[#allocation2 + $0x144] sm:$0x8]
    %v726 = vld [vmem:[#allocation2 + $0x148] sm:$0xf]
    %v727 = vld [vmem:[#allocation2 + $0x168] sm:$0x8]
    %v728 = vld [vmem:[#allocation2 + $0x16c] sm:$0xf]
    %v729 = vld [vmem:[#allocation2 + $0x174] sm:$0x8]
    %v730 = vld [vmem:[#allocation2 + $0x178] sm:$0xf]
    %v731 = vld [vmem:[#allocation2 + $0x180] sm:$0x8]
    %v732 = vld [vmem:[#allocation2 + $0x184] sm:$0xf]
    %v733 = vld [vmem:[#allocation2 + $0x18c] sm:$0x8]
    %v734 = vld [vmem:[#allocation2 + $0x190] sm:$0xf]
    %v735 = vld [vmem:[#allocation2 + $0x198] sm:$0x8]
    %v736 = vld [vmem:[#allocation2 + $0x19c] sm:$0xf]
    %v737 = vld [vmem:[#allocation2 + $0x1a4] sm:$0x8]
    %v738 = vld [vmem:[#allocation2 + $0x1a8] sm:$0xf]
    %v739 = vld [vmem:[#allocation2 + $0x1b0] sm:$0x8]
    %v740 = vld [vmem:[#allocation2 + $0x1b4] sm:$0xf]
    %v741 = vld [vmem:[#allocation2 + $0x1bc] sm:$0x8]
    %v742 = vld [vmem:[#allocation2 + $0x1c0] sm:$0xf]
    %vm743 = vsmask.f32 256
    %vm744 = vsmask.f32 4368
    %vm745 = vmor %vm743, %vm744
    %v747 = vshrl.u32 %v679, 16
    %v749 = vrot.slane %v747, 7
    %v750 = vrot.slane %v749, 4
    %v752 = vshrl.u32 %v680, 16
    %v754 = vrot.slane %v752, 7
    %v755 = vshll.u32 %v680, 16
    %v757 = vor.u32 %v754, %v755
    %v758 = vsel %vm745, %v750, %v757
    %v760 = vshrl.u32 %v681, 16
    %v762 = vrot.slane %v760, 7
    %v763 = vrot.slane %v762, 4
    %v765 = vshrl.u32 %v682, 16
    %v767 = vrot.slane %v765, 7
    %v768 = vshll.u32 %v682, 16
    %v770 = vor.u32 %v767, %v768
    %v771 = vsel %vm745, %v763, %v770
    %v773 = vshrl.u32 %v683, 16
    %v775 = vrot.slane %v773, 7
    %v776 = vrot.slane %v775, 4
    %v778 = vshrl.u32 %v684, 16
    %v780 = vrot.slane %v778, 7
    %v781 = vshll.u32 %v684, 16
    %v783 = vor.u32 %v780, %v781
    %v784 = vsel %vm745, %v776, %v783
    %v786 = vshrl.u32 %v685, 16
    %v788 = vrot.slane %v786, 7
    %v789 = vrot.slane %v788, 4
    %v791 = vshrl.u32 %v686, 16
    %v793 = vrot.slane %v791, 7
    %v794 = vshll.u32 %v686, 16
    %v796 = vor.u32 %v793, %v794
    %v797 = vsel %vm745, %v789, %v796
    %v799 = vshrl.u32 %v687, 16
    %v801 = vrot.slane %v799, 7
    %v802 = vrot.slane %v801, 4
    %v804 = vshrl.u32 %v688, 16
    %v806 = vrot.slane %v804, 7
    %v807 = vshll.u32 %v688, 16
    %v809 = vor.u32 %v806, %v807
    %v810 = vsel %vm745, %v802, %v809
    %v812 = vshrl.u32 %v689, 16
    %v814 = vrot.slane %v812, 7
    %v815 = vrot.slane %v814, 4
    %v817 = vshrl.u32 %v690, 16
    %v819 = vrot.slane %v817, 7
    %v820 = vshll.u32 %v690, 16
    %v822 = vor.u32 %v819, %v820
    %v823 = vsel %vm745, %v815, %v822
    %v825 = vshrl.u32 %v691, 16
    %v827 = vrot.slane %v825, 7
    %v828 = vrot.slane %v827, 4
    %v830 = vshrl.u32 %v692, 16
    %v832 = vrot.slane %v830, 7
    %v833 = vshll.u32 %v692, 16
    %v835 = vor.u32 %v832, %v833
    %v836 = vsel %vm745, %v828, %v835
    %v838 = vshrl.u32 %v693, 16
    %v840 = vrot.slane %v838, 7
    %v841 = vrot.slane %v840, 4
    %v843 = vshrl.u32 %v694, 16
    %v845 = vrot.slane %v843, 7
    %v846 = vshll.u32 %v694, 16
    %v848 = vor.u32 %v845, %v846
    %v849 = vsel %vm745, %v841, %v848
    %v851 = vshrl.u32 %v695, 16
    %v853 = vrot.slane %v851, 7
    %v854 = vrot.slane %v853, 4
    %v856 = vshrl.u32 %v696, 16
    %v858 = vrot.slane %v856, 7
    %v859 = vshll.u32 %v696, 16
    %v861 = vor.u32 %v858, %v859
    %v862 = vsel %vm745, %v854, %v861
    %v864 = vshrl.u32 %v697, 16
    %v866 = vrot.slane %v864, 7
    %v867 = vrot.slane %v866, 4
    %v869 = vshrl.u32 %v698, 16
    %v871 = vrot.slane %v869, 7
    %v872 = vshll.u32 %v698, 16
    %v874 = vor.u32 %v871, %v872
    %v875 = vsel %vm745, %v867, %v874
    %v877 = vshrl.u32 %v699, 16
    %v879 = vrot.slane %v877, 7
    %v880 = vrot.slane %v879, 4
    %v882 = vshrl.u32 %v700, 16
    %v884 = vrot.slane %v882, 7
    %v885 = vshll.u32 %v700, 16
    %v887 = vor.u32 %v884, %v885
    %v888 = vsel %vm745, %v880, %v887
    %v890 = vshrl.u32 %v701, 16
    %v892 = vrot.slane %v890, 7
    %v893 = vrot.slane %v892, 4
    %v895 = vshrl.u32 %v702, 16
    %v897 = vrot.slane %v895, 7
    %v898 = vshll.u32 %v702, 16
    %v900 = vor.u32 %v897, %v898
    %v901 = vsel %vm745, %v893, %v900
    %v903 = vshrl.u32 %v703, 16
    %v905 = vrot.slane %v903, 7
    %v906 = vrot.slane %v905, 4
    %v908 = vshrl.u32 %v704, 16
    %v910 = vrot.slane %v908, 7
    %v911 = vshll.u32 %v704, 16
    %v913 = vor.u32 %v910, %v911
    %v914 = vsel %vm745, %v906, %v913
    %v916 = vshrl.u32 %v705, 16
    %v918 = vrot.slane %v916, 7
    %v919 = vrot.slane %v918, 4
    %v921 = vshrl.u32 %v706, 16
    %v923 = vrot.slane %v921, 7
    %v924 = vshll.u32 %v706, 16
    %v926 = vor.u32 %v923, %v924
    %v927 = vsel %vm745, %v919, %v926
    %v929 = vshrl.u32 %v707, 16
    %v931 = vrot.slane %v929, 7
    %v932 = vrot.slane %v931, 4
    %v934 = vshrl.u32 %v708, 16
    %v936 = vrot.slane %v934, 7
    %v937 = vshll.u32 %v708, 16
    %v939 = vor.u32 %v936, %v937
    %v940 = vsel %vm745, %v932, %v939
    %v942 = vshrl.u32 %v709, 16
    %v944 = vrot.slane %v942, 7
    %v945 = vrot.slane %v944, 4
    %v947 = vshrl.u32 %v710, 16
    %v949 = vrot.slane %v947, 7
    %v950 = vshll.u32 %v710, 16
    %v952 = vor.u32 %v949, %v950
    %v953 = vsel %vm745, %v945, %v952
    %v955 = vshrl.u32 %v711, 16
    %v957 = vrot.slane %v955, 7
    %v958 = vrot.slane %v957, 4
    %v960 = vshrl.u32 %v712, 16
    %v962 = vrot.slane %v960, 7
    %v963 = vshll.u32 %v712, 16
    %v965 = vor.u32 %v962, %v963
    %v966 = vsel %vm745, %v958, %v965
    %v968 = vshrl.u32 %v713, 16
    %v970 = vrot.slane %v968, 7
    %v971 = vrot.slane %v970, 4
    %v973 = vshrl.u32 %v714, 16
    %v975 = vrot.slane %v973, 7
    %v976 = vshll.u32 %v714, 16
    %v978 = vor.u32 %v975, %v976
    %v979 = vsel %vm745, %v971, %v978
    %v981 = vshrl.u32 %v715, 16
    %v983 = vrot.slane %v981, 7
    %v984 = vrot.slane %v983, 4
    %v986 = vshrl.u32 %v716, 16
    %v988 = vrot.slane %v986, 7
    %v989 = vshll.u32 %v716, 16
    %v991 = vor.u32 %v988, %v989
    %v992 = vsel %vm745, %v984, %v991
    %v994 = vshrl.u32 %v717, 16
    %v996 = vrot.slane %v994, 7
    %v997 = vrot.slane %v996, 4
    %v999 = vshrl.u32 %v718, 16
    %v1001 = vrot.slane %v999, 7
    %v1002 = vshll.u32 %v718, 16
    %v1004 = vor.u32 %v1001, %v1002
    %v1005 = vsel %vm745, %v997, %v1004
    %v1007 = vshrl.u32 %v719, 16
    %v1009 = vrot.slane %v1007, 7
    %v1010 = vrot.slane %v1009, 4
    %v1012 = vshrl.u32 %v720, 16
    %v1014 = vrot.slane %v1012, 7
    %v1015 = vshll.u32 %v720, 16
    %v1017 = vor.u32 %v1014, %v1015
    %v1018 = vsel %vm745, %v1010, %v1017
    %v1020 = vshrl.u32 %v721, 16
    %v1022 = vrot.slane %v1020, 7
    %v1023 = vrot.slane %v1022, 4
    %v1025 = vshrl.u32 %v722, 16
    %v1027 = vrot.slane %v1025, 7
    %v1028 = vshll.u32 %v722, 16
    %v1030 = vor.u32 %v1027, %v1028
    %v1031 = vsel %vm745, %v1023, %v1030
    %v1033 = vshrl.u32 %v723, 16
    %v1035 = vrot.slane %v1033, 7
    %v1036 = vrot.slane %v1035, 4
    %v1038 = vshrl.u32 %v724, 16
    %v1040 = vrot.slane %v1038, 7
    %v1041 = vshll.u32 %v724, 16
    %v1043 = vor.u32 %v1040, %v1041
    %v1044 = vsel %vm745, %v1036, %v1043
    %v1046 = vshrl.u32 %v725, 16
    %v1048 = vrot.slane %v1046, 7
    %v1049 = vrot.slane %v1048, 4
    %v1051 = vshrl.u32 %v726, 16
    %v1053 = vrot.slane %v1051, 7
    %v1054 = vshll.u32 %v726, 16
    %v1056 = vor.u32 %v1053, %v1054
    %v1057 = vsel %vm745, %v1049, %v1056
    %v1059 = vshrl.u32 %v727, 16
    %v1061 = vrot.slane %v1059, 7
    %v1062 = vrot.slane %v1061, 4
    %v1064 = vshrl.u32 %v728, 16
    %v1066 = vrot.slane %v1064, 7
    %v1067 = vshll.u32 %v728, 16
    %v1069 = vor.u32 %v1066, %v1067
    %v1070 = vsel %vm745, %v1062, %v1069
    %v1072 = vshrl.u32 %v729, 16
    %v1074 = vrot.slane %v1072, 7
    %v1075 = vrot.slane %v1074, 4
    %v1077 = vshrl.u32 %v730, 16
    %v1079 = vrot.slane %v1077, 7
    %v1080 = vshll.u32 %v730, 16
    %v1082 = vor.u32 %v1079, %v1080
    %v1083 = vsel %vm745, %v1075, %v1082
    %v1085 = vshrl.u32 %v731, 16
    %v1087 = vrot.slane %v1085, 7
    %v1088 = vrot.slane %v1087, 4
    %v1090 = vshrl.u32 %v732, 16
    %v1092 = vrot.slane %v1090, 7
    %v1093 = vshll.u32 %v732, 16
    %v1095 = vor.u32 %v1092, %v1093
    %v1096 = vsel %vm745, %v1088, %v1095
    %v1098 = vshrl.u32 %v733, 16
    %v1100 = vrot.slane %v1098, 7
    %v1101 = vrot.slane %v1100, 4
    %v1103 = vshrl.u32 %v734, 16
    %v1105 = vrot.slane %v1103, 7
    %v1106 = vshll.u32 %v734, 16
    %v1108 = vor.u32 %v1105, %v1106
    %v1109 = vsel %vm745, %v1101, %v1108
    %v1111 = vshrl.u32 %v735, 16
    %v1113 = vrot.slane %v1111, 7
    %v1114 = vrot.slane %v1113, 4
    %v1116 = vshrl.u32 %v736, 16
    %v1118 = vrot.slane %v1116, 7
    %v1119 = vshll.u32 %v736, 16
    %v1121 = vor.u32 %v1118, %v1119
    %v1122 = vsel %vm745, %v1114, %v1121
    %v1124 = vshrl.u32 %v737, 16
    %v1126 = vrot.slane %v1124, 7
    %v1127 = vrot.slane %v1126, 4
    %v1129 = vshrl.u32 %v738, 16
    %v1131 = vrot.slane %v1129, 7
    %v1132 = vshll.u32 %v738, 16
    %v1134 = vor.u32 %v1131, %v1132
    %v1135 = vsel %vm745, %v1127, %v1134
    %v1137 = vshrl.u32 %v739, 16
    %v1139 = vrot.slane %v1137, 7
    %v1140 = vrot.slane %v1139, 4
    %v1142 = vshrl.u32 %v740, 16
    %v1144 = vrot.slane %v1142, 7
    %v1145 = vshll.u32 %v740, 16
    %v1147 = vor.u32 %v1144, %v1145
    %v1148 = vsel %vm745, %v1140, %v1147
    %v1150 = vshrl.u32 %v741, 16
    %v1152 = vrot.slane %v1150, 7
    %v1153 = vrot.slane %v1152, 4
    %v1155 = vshrl.u32 %v742, 16
    %v1157 = vrot.slane %v1155, 7
    %v1158 = vshll.u32 %v742, 16
    %v1160 = vor.u32 %v1157, %v1158
    %v1161 = vsel %vm745, %v1153, %v1160
    %v1162 = vld [vmem:[#allocation2 + $0x8] sm:$0x1]
    %v1163 = vld [vmem:[#allocation2 + $0x14] sm:$0x1]
    %v1164 = vld [vmem:[#allocation2 + $0x20] sm:$0x1]
    %v1165 = vld [vmem:[#allocation2 + $0x2c] sm:$0x1]
    %v1166 = vld [vmem:[#allocation2 + $0x38] sm:$0x1]
    %v1167 = vld [vmem:[#allocation2 + $0x44] sm:$0x1]
    %v1168 = vld [vmem:[#allocation2 + $0x50] sm:$0x1]
    %v1169 = vld [vmem:[#allocation2 + $0x5c] sm:$0x1]
    %v1170 = vld [vmem:[#allocation2 + $0x80] sm:$0x1]
    %v1171 = vld [vmem:[#allocation2 + $0x8c] sm:$0x1]
    %v1172 = vld [vmem:[#allocation2 + $0x98] sm:$0x1]
    %v1173 = vld [vmem:[#allocation2 + $0xa4] sm:$0x1]
    %v1174 = vld [vmem:[#allocation2 + $0xb0] sm:$0x1]
    %v1175 = vld [vmem:[#allocation2 + $0xbc] sm:$0x1]
    %v1176 = vld [vmem:[#allocation2 + $0xc8] sm:$0x1]
    %v1177 = vld [vmem:[#allocation2 + $0xd4] sm:$0x1]
    %v1178 = vld [vmem:[#allocation2 + $0xf8] sm:$0x1]
    %v1179 = vld [vmem:[#allocation2 + $0x104] sm:$0x1]
    %v1180 = vld [vmem:[#allocation2 + $0x110] sm:$0x1]
    %v1181 = vld [vmem:[#allocation2 + $0x11c] sm:$0x1]
    %v1182 = vld [vmem:[#allocation2 + $0x128] sm:$0x1]
    %v1183 = vld [vmem:[#allocation2 + $0x134] sm:$0x1]
    %v1184 = vld [vmem:[#allocation2 + $0x140] sm:$0x1]
    %v1185 = vld [vmem:[#allocation2 + $0x14c] sm:$0x1]
    %v1186 = vld [vmem:[#allocation2 + $0x170] sm:$0x1]
    %v1187 = vld [vmem:[#allocation2 + $0x17c] sm:$0x1]
    %v1188 = vld [vmem:[#allocation2 + $0x188] sm:$0x1]
    %v1189 = vld [vmem:[#allocation2 + $0x194] sm:$0x1]
    %v1190 = vld [vmem:[#allocation2 + $0x1a0] sm:$0x1]
    %v1191 = vld [vmem:[#allocation2 + $0x1ac] sm:$0x1]
    %v1192 = vld [vmem:[#allocation2 + $0x1b8] sm:$0x1]
    %v1193 = vld [vmem:[#allocation2 + $0x1c4] sm:$0x1]
    %vm1194 = vsmask.f32 3328
    %vm1195 = vsmask.f32 7440
    %vm1196 = vmor %vm1194, %vm1195
    %v1197 = vrot.slane %v752, 4
    %v1198 = vrot.slane %v755, 5
    %v1199 = vor.u32 %v1197, %v1198
    %v1200 = vrot.slane %v1199, 4
    %v1202 = vshll.u32 %v1162, 16
    %v1204 = vrot.slane %v1202, 5
    %v1205 = vsel %vm1196, %v1200, %v1204
    %v1206 = vrot.slane %v765, 4
    %v1207 = vrot.slane %v768, 5
    %v1208 = vor.u32 %v1206, %v1207
    %v1209 = vrot.slane %v1208, 4
    %v1211 = vshll.u32 %v1163, 16
    %v1213 = vrot.slane %v1211, 5
    %v1214 = vsel %vm1196, %v1209, %v1213
    %v1215 = vrot.slane %v778, 4
    %v1216 = vrot.slane %v781, 5
    %v1217 = vor.u32 %v1215, %v1216
    %v1218 = vrot.slane %v1217, 4
    %v1220 = vshll.u32 %v1164, 16
    %v1222 = vrot.slane %v1220, 5
    %v1223 = vsel %vm1196, %v1218, %v1222
    %v1224 = vrot.slane %v791, 4
    %v1225 = vrot.slane %v794, 5
    %v1226 = vor.u32 %v1224, %v1225
    %v1227 = vrot.slane %v1226, 4
    %v1229 = vshll.u32 %v1165, 16
    %v1231 = vrot.slane %v1229, 5
    %v1232 = vsel %vm1196, %v1227, %v1231
    %v1233 = vrot.slane %v804, 4
    %v1234 = vrot.slane %v807, 5
    %v1235 = vor.u32 %v1233, %v1234
    %v1236 = vrot.slane %v1235, 4
    %v1238 = vshll.u32 %v1166, 16
    %v1240 = vrot.slane %v1238, 5
    %v1241 = vsel %vm1196, %v1236, %v1240
    %v1242 = vrot.slane %v817, 4
    %v1243 = vrot.slane %v820, 5
    %v1244 = vor.u32 %v1242, %v1243
    %v1245 = vrot.slane %v1244, 4
    %v1247 = vshll.u32 %v1167, 16
    %v1249 = vrot.slane %v1247, 5
    %v1250 = vsel %vm1196, %v1245, %v1249
    %v1251 = vrot.slane %v830, 4
    %v1252 = vrot.slane %v833, 5
    %v1253 = vor.u32 %v1251, %v1252
    %v1254 = vrot.slane %v1253, 4
    %v1256 = vshll.u32 %v1168, 16
    %v1258 = vrot.slane %v1256, 5
    %v1259 = vsel %vm1196, %v1254, %v1258
    %v1260 = vrot.slane %v843, 4
    %v1261 = vrot.slane %v846, 5
    %v1262 = vor.u32 %v1260, %v1261
    %v1263 = vrot.slane %v1262, 4
    %v1265 = vshll.u32 %v1169, 16
    %v1267 = vrot.slane %v1265, 5
    %v1268 = vsel %vm1196, %v1263, %v1267
    %v1269 = vrot.slane %v856, 4
    %v1270 = vrot.slane %v859, 5
    %v1271 = vor.u32 %v1269, %v1270
    %v1272 = vrot.slane %v1271, 4
    %v1274 = vshll.u32 %v1170, 16
    %v1276 = vrot.slane %v1274, 5
    %v1277 = vsel %vm1196, %v1272, %v1276
    %v1278 = vrot.slane %v869, 4
    %v1279 = vrot.slane %v872, 5
    %v1280 = vor.u32 %v1278, %v1279
    %v1281 = vrot.slane %v1280, 4
    %v1283 = vshll.u32 %v1171, 16
    %v1285 = vrot.slane %v1283, 5
    %v1286 = vsel %vm1196, %v1281, %v1285
    %v1287 = vrot.slane %v882, 4
    %v1288 = vrot.slane %v885, 5
    %v1289 = vor.u32 %v1287, %v1288
    %v1290 = vrot.slane %v1289, 4
    %v1292 = vshll.u32 %v1172, 16
    %v1294 = vrot.slane %v1292, 5
    %v1295 = vsel %vm1196, %v1290, %v1294
    %v1296 = vrot.slane %v895, 4
    %v1297 = vrot.slane %v898, 5
    %v1298 = vor.u32 %v1296, %v1297
    %v1299 = vrot.slane %v1298, 4
    %v1301 = vshll.u32 %v1173, 16
    %v1303 = vrot.slane %v1301, 5
    %v1304 = vsel %vm1196, %v1299, %v1303
    %v1305 = vrot.slane %v908, 4
    %v1306 = vrot.slane %v911, 5
    %v1307 = vor.u32 %v1305, %v1306
    %v1308 = vrot.slane %v1307, 4
    %v1310 = vshll.u32 %v1174, 16
    %v1312 = vrot.slane %v1310, 5
    %v1313 = vsel %vm1196, %v1308, %v1312
    %v1314 = vrot.slane %v921, 4
    %v1315 = vrot.slane %v924, 5
    %v1316 = vor.u32 %v1314, %v1315
    %v1317 = vrot.slane %v1316, 4
    %v1319 = vshll.u32 %v1175, 16
    %v1321 = vrot.slane %v1319, 5
    %v1322 = vsel %vm1196, %v1317, %v1321
    %v1323 = vrot.slane %v934, 4
    %v1324 = vrot.slane %v937, 5
    %v1325 = vor.u32 %v1323, %v1324
    %v1326 = vrot.slane %v1325, 4
    %v1328 = vshll.u32 %v1176, 16
    %v1330 = vrot.slane %v1328, 5
    %v1331 = vsel %vm1196, %v1326, %v1330
    %v1332 = vrot.slane %v947, 4
    %v1333 = vrot.slane %v950, 5
    %v1334 = vor.u32 %v1332, %v1333
    %v1335 = vrot.slane %v1334, 4
    %v1337 = vshll.u32 %v1177, 16
    %v1339 = vrot.slane %v1337, 5
    %v1340 = vsel %vm1196, %v1335, %v1339
    %v1341 = vrot.slane %v960, 4
    %v1342 = vrot.slane %v963, 5
    %v1343 = vor.u32 %v1341, %v1342
    %v1344 = vrot.slane %v1343, 4
    %v1346 = vshll.u32 %v1178, 16
    %v1348 = vrot.slane %v1346, 5
    %v1349 = vsel %vm1196, %v1344, %v1348
    %v1350 = vrot.slane %v973, 4
    %v1351 = vrot.slane %v976, 5
    %v1352 = vor.u32 %v1350, %v1351
    %v1353 = vrot.slane %v1352, 4
    %v1355 = vshll.u32 %v1179, 16
    %v1357 = vrot.slane %v1355, 5
    %v1358 = vsel %vm1196, %v1353, %v1357
    %v1359 = vrot.slane %v986, 4
    %v1360 = vrot.slane %v989, 5
    %v1361 = vor.u32 %v1359, %v1360
    %v1362 = vrot.slane %v1361, 4
    %v1364 = vshll.u32 %v1180, 16
    %v1366 = vrot.slane %v1364, 5
    %v1367 = vsel %vm1196, %v1362, %v1366
    %v1368 = vrot.slane %v999, 4
    %v1369 = vrot.slane %v1002, 5
    %v1370 = vor.u32 %v1368, %v1369
    %v1371 = vrot.slane %v1370, 4
    %v1373 = vshll.u32 %v1181, 16
    %v1375 = vrot.slane %v1373, 5
    %v1376 = vsel %vm1196, %v1371, %v1375
    %v1377 = vrot.slane %v1012, 4
    %v1378 = vrot.slane %v1015, 5
    %v1379 = vor.u32 %v1377, %v1378
    %v1380 = vrot.slane %v1379, 4
    %v1382 = vshll.u32 %v1182, 16
    %v1384 = vrot.slane %v1382, 5
    %v1385 = vsel %vm1196, %v1380, %v1384
    %v1386 = vrot.slane %v1025, 4
    %v1387 = vrot.slane %v1028, 5
    %v1388 = vor.u32 %v1386, %v1387
    %v1389 = vrot.slane %v1388, 4
    %v1391 = vshll.u32 %v1183, 16
    %v1393 = vrot.slane %v1391, 5
    %v1394 = vsel %vm1196, %v1389, %v1393
    %v1395 = vrot.slane %v1038, 4
    %v1396 = vrot.slane %v1041, 5
    %v1397 = vor.u32 %v1395, %v1396
    %v1398 = vrot.slane %v1397, 4
    %v1400 = vshll.u32 %v1184, 16
    %v1402 = vrot.slane %v1400, 5
    %v1403 = vsel %vm1196, %v1398, %v1402
    %v1404 = vrot.slane %v1051, 4
    %v1405 = vrot.slane %v1054, 5
    %v1406 = vor.u32 %v1404, %v1405
    %v1407 = vrot.slane %v1406, 4
    %v1409 = vshll.u32 %v1185, 16
    %v1411 = vrot.slane %v1409, 5
    %v1412 = vsel %vm1196, %v1407, %v1411
    %v1413 = vrot.slane %v1064, 4
    %v1414 = vrot.slane %v1067, 5
    %v1415 = vor.u32 %v1413, %v1414
    %v1416 = vrot.slane %v1415, 4
    %v1418 = vshll.u32 %v1186, 16
    %v1420 = vrot.slane %v1418, 5
    %v1421 = vsel %vm1196, %v1416, %v1420
    %v1422 = vrot.slane %v1077, 4
    %v1423 = vrot.slane %v1080, 5
    %v1424 = vor.u32 %v1422, %v1423
    %v1425 = vrot.slane %v1424, 4
    %v1427 = vshll.u32 %v1187, 16
    %v1429 = vrot.slane %v1427, 5
    %v1430 = vsel %vm1196, %v1425, %v1429
    %v1431 = vrot.slane %v1090, 4
    %v1432 = vrot.slane %v1093, 5
    %v1433 = vor.u32 %v1431, %v1432
    %v1434 = vrot.slane %v1433, 4
    %v1436 = vshll.u32 %v1188, 16
    %v1438 = vrot.slane %v1436, 5
    %v1439 = vsel %vm1196, %v1434, %v1438
    %v1440 = vrot.slane %v1103, 4
    %v1441 = vrot.slane %v1106, 5
    %v1442 = vor.u32 %v1440, %v1441
    %v1443 = vrot.slane %v1442, 4
    %v1445 = vshll.u32 %v1189, 16
    %v1447 = vrot.slane %v1445, 5
    %v1448 = vsel %vm1196, %v1443, %v1447
    %v1449 = vrot.slane %v1116, 4
    %v1450 = vrot.slane %v1119, 5
    %v1451 = vor.u32 %v1449, %v1450
    %v1452 = vrot.slane %v1451, 4
    %v1454 = vshll.u32 %v1190, 16
    %v1456 = vrot.slane %v1454, 5
    %v1457 = vsel %vm1196, %v1452, %v1456
    %v1458 = vrot.slane %v1129, 4
    %v1459 = vrot.slane %v1132, 5
    %v1460 = vor.u32 %v1458, %v1459
    %v1461 = vrot.slane %v1460, 4
    %v1463 = vshll.u32 %v1191, 16
    %v1465 = vrot.slane %v1463, 5
    %v1466 = vsel %vm1196, %v1461, %v1465
    %v1467 = vrot.slane %v1142, 4
    %v1468 = vrot.slane %v1145, 5
    %v1469 = vor.u32 %v1467, %v1468
    %v1470 = vrot.slane %v1469, 4
    %v1472 = vshll.u32 %v1192, 16
    %v1474 = vrot.slane %v1472, 5
    %v1475 = vsel %vm1196, %v1470, %v1474
    %v1476 = vrot.slane %v1155, 4
    %v1477 = vrot.slane %v1158, 5
    %v1478 = vor.u32 %v1476, %v1477
    %v1479 = vrot.slane %v1478, 4
    %v1481 = vshll.u32 %v1193, 16
    %v1483 = vrot.slane %v1481, 5
    %v1484 = vsel %vm1196, %v1479, %v1483
    %v1485 = vld [vmem:[%s645] sm:$0x8]
    %v1486 = vld [vmem:[%s645 + $0x4] sm:$0xf]
    %v1487 = vld [vmem:[%s645 + $0xc] sm:$0x8]
    %v1488 = vld [vmem:[%s645 + $0x10] sm:$0xf]
    %v1489 = vld [vmem:[%s645 + $0x18] sm:$0x8]
    %v1490 = vld [vmem:[%s645 + $0x1c] sm:$0xf]
    %v1491 = vld [vmem:[%s645 + $0x24] sm:$0x8]
    %v1492 = vld [vmem:[%s645 + $0x28] sm:$0xf]
    %v1493 = vld [vmem:[%s645 + $0x30] sm:$0x8]
    %v1494 = vld [vmem:[%s645 + $0x34] sm:$0xf]
    %v1495 = vld [vmem:[%s645 + $0x3c] sm:$0x8]
    %v1496 = vld [vmem:[%s645 + $0x40] sm:$0xf]
    %v1497 = vld [vmem:[%s645 + $0x48] sm:$0x8]
    %v1498 = vld [vmem:[%s645 + $0x4c] sm:$0xf]
    %v1499 = vld [vmem:[%s645 + $0x54] sm:$0x8]
    %v1500 = vld [vmem:[%s645 + $0x58] sm:$0xf]
    %v1501 = vld [vmem:[%s645 + $0x78] sm:$0x8]
    %v1502 = vld [vmem:[%s645 + $0x7c] sm:$0xf]
    %v1503 = vld [vmem:[%s645 + $0x84] sm:$0x8]
    %v1504 = vld [vmem:[%s645 + $0x88] sm:$0xf]
    %v1505 = vld [vmem:[%s645 + $0x90] sm:$0x8]
    %v1506 = vld [vmem:[%s645 + $0x94] sm:$0xf]
    %v1507 = vld [vmem:[%s645 + $0x9c] sm:$0x8]
    %v1508 = vld [vmem:[%s645 + $0xa0] sm:$0xf]
    %v1509 = vld [vmem:[%s645 + $0xa8] sm:$0x8]
    %v1510 = vld [vmem:[%s645 + $0xac] sm:$0xf]
    %v1511 = vld [vmem:[%s645 + $0xb4] sm:$0x8]
    %v1512 = vld [vmem:[%s645 + $0xb8] sm:$0xf]
    %v1513 = vld [vmem:[%s645 + $0xc0] sm:$0x8]
    %v1514 = vld [vmem:[%s645 + $0xc4] sm:$0xf]
    %v1515 = vld [vmem:[%s645 + $0xcc] sm:$0x8]
    %v1516 = vld [vmem:[%s645 + $0xd0] sm:$0xf]
    %v1517 = vld [vmem:[%s645 + $0xf0] sm:$0x8]
    %v1518 = vld [vmem:[%s645 + $0xf4] sm:$0xf]
    %v1519 = vld [vmem:[%s645 + $0xfc] sm:$0x8]
    %v1520 = vld [vmem:[%s645 + $0x100] sm:$0xf]
    %v1521 = vld [vmem:[%s645 + $0x108] sm:$0x8]
    %v1522 = vld [vmem:[%s645 + $0x10c] sm:$0xf]
    %v1523 = vld [vmem:[%s645 + $0x114] sm:$0x8]
    %v1524 = vld [vmem:[%s645 + $0x118] sm:$0xf]
    %v1525 = vld [vmem:[%s645 + $0x120] sm:$0x8]
    %v1526 = vld [vmem:[%s645 + $0x124] sm:$0xf]
    %v1527 = vld [vmem:[%s645 + $0x12c] sm:$0x8]
    %v1528 = vld [vmem:[%s645 + $0x130] sm:$0xf]
    %v1529 = vld [vmem:[%s645 + $0x138] sm:$0x8]
    %v1530 = vld [vmem:[%s645 + $0x13c] sm:$0xf]
    %v1531 = vld [vmem:[%s645 + $0x144] sm:$0x8]
    %v1532 = vld [vmem:[%s645 + $0x148] sm:$0xf]
    %v1533 = vld [vmem:[%s645 + $0x168] sm:$0x8]
    %v1534 = vld [vmem:[%s645 + $0x16c] sm:$0xf]
    %v1535 = vld [vmem:[%s645 + $0x174] sm:$0x8]
    %v1536 = vld [vmem:[%s645 + $0x178] sm:$0xf]
    %v1537 = vld [vmem:[%s645 + $0x180] sm:$0x8]
    %v1538 = vld [vmem:[%s645 + $0x184] sm:$0xf]
    %v1539 = vld [vmem:[%s645 + $0x18c] sm:$0x8]
    %v1540 = vld [vmem:[%s645 + $0x190] sm:$0xf]
    %v1541 = vld [vmem:[%s645 + $0x198] sm:$0x8]
    %v1542 = vld [vmem:[%s645 + $0x19c] sm:$0xf]
    %v1543 = vld [vmem:[%s645 + $0x1a4] sm:$0x8]
    %v1544 = vld [vmem:[%s645 + $0x1a8] sm:$0xf]
    %v1545 = vld [vmem:[%s645 + $0x1b0] sm:$0x8]
    %v1546 = vld [vmem:[%s645 + $0x1b4] sm:$0xf]
    %v1547 = vld [vmem:[%s645 + $0x1bc] sm:$0x8]
    %v1548 = vld [vmem:[%s645 + $0x1c0] sm:$0xf]
    %v1550 = vshrl.u32 %v1485, 16
    %v1552 = vrot.slane %v1550, 7
    %v1553 = vrot.slane %v1552, 4
    %v1555 = vshrl.u32 %v1486, 16
    %v1557 = vrot.slane %v1555, 7
    %v1558 = vshll.u32 %v1486, 16
    %v1560 = vor.u32 %v1557, %v1558
    %v1561 = vsel %vm745, %v1553, %v1560
    %v1563 = vshrl.u32 %v1487, 16
    %v1565 = vrot.slane %v1563, 7
    %v1566 = vrot.slane %v1565, 4
    %v1568 = vshrl.u32 %v1488, 16
    %v1570 = vrot.slane %v1568, 7
    %v1571 = vshll.u32 %v1488, 16
    %v1573 = vor.u32 %v1570, %v1571
    %v1574 = vsel %vm745, %v1566, %v1573
    %v1576 = vshrl.u32 %v1489, 16
    %v1578 = vrot.slane %v1576, 7
    %v1579 = vrot.slane %v1578, 4
    %v1581 = vshrl.u32 %v1490, 16
    %v1583 = vrot.slane %v1581, 7
    %v1584 = vshll.u32 %v1490, 16
    %v1586 = vor.u32 %v1583, %v1584
    %v1587 = vsel %vm745, %v1579, %v1586
    %v1589 = vshrl.u32 %v1491, 16
    %v1591 = vrot.slane %v1589, 7
    %v1592 = vrot.slane %v1591, 4
    %v1594 = vshrl.u32 %v1492, 16
    %v1596 = vrot.slane %v1594, 7
    %v1597 = vshll.u32 %v1492, 16
    %v1599 = vor.u32 %v1596, %v1597
    %v1600 = vsel %vm745, %v1592, %v1599
    %v1602 = vshrl.u32 %v1493, 16
    %v1604 = vrot.slane %v1602, 7
    %v1605 = vrot.slane %v1604, 4
    %v1607 = vshrl.u32 %v1494, 16
    %v1609 = vrot.slane %v1607, 7
    %v1610 = vshll.u32 %v1494, 16
    %v1612 = vor.u32 %v1609, %v1610
    %v1613 = vsel %vm745, %v1605, %v1612
    %v1615 = vshrl.u32 %v1495, 16
    %v1617 = vrot.slane %v1615, 7
    %v1618 = vrot.slane %v1617, 4
    %v1620 = vshrl.u32 %v1496, 16
    %v1622 = vrot.slane %v1620, 7
    %v1623 = vshll.u32 %v1496, 16
    %v1625 = vor.u32 %v1622, %v1623
    %v1626 = vsel %vm745, %v1618, %v1625
    %v1628 = vshrl.u32 %v1497, 16
    %v1630 = vrot.slane %v1628, 7
    %v1631 = vrot.slane %v1630, 4
    %v1633 = vshrl.u32 %v1498, 16
    %v1635 = vrot.slane %v1633, 7
    %v1636 = vshll.u32 %v1498, 16
    %v1638 = vor.u32 %v1635, %v1636
    %v1639 = vsel %vm745, %v1631, %v1638
    %v1641 = vshrl.u32 %v1499, 16
    %v1643 = vrot.slane %v1641, 7
    %v1644 = vrot.slane %v1643, 4
    %v1646 = vshrl.u32 %v1500, 16
    %v1648 = vrot.slane %v1646, 7
    %v1649 = vshll.u32 %v1500, 16
    %v1651 = vor.u32 %v1648, %v1649
    %v1652 = vsel %vm745, %v1644, %v1651
    %v1654 = vshrl.u32 %v1501, 16
    %v1656 = vrot.slane %v1654, 7
    %v1657 = vrot.slane %v1656, 4
    %v1659 = vshrl.u32 %v1502, 16
    %v1661 = vrot.slane %v1659, 7
    %v1662 = vshll.u32 %v1502, 16
    %v1664 = vor.u32 %v1661, %v1662
    %v1665 = vsel %vm745, %v1657, %v1664
    %v1667 = vshrl.u32 %v1503, 16
    %v1669 = vrot.slane %v1667, 7
    %v1670 = vrot.slane %v1669, 4
    %v1672 = vshrl.u32 %v1504, 16
    %v1674 = vrot.slane %v1672, 7
    %v1675 = vshll.u32 %v1504, 16
    %v1677 = vor.u32 %v1674, %v1675
    %v1678 = vsel %vm745, %v1670, %v1677
    %v1680 = vshrl.u32 %v1505, 16
    %v1682 = vrot.slane %v1680, 7
    %v1683 = vrot.slane %v1682, 4
    %v1685 = vshrl.u32 %v1506, 16
    %v1687 = vrot.slane %v1685, 7
    %v1688 = vshll.u32 %v1506, 16
    %v1690 = vor.u32 %v1687, %v1688
    %v1691 = vsel %vm745, %v1683, %v1690
    %v1693 = vshrl.u32 %v1507, 16
    %v1695 = vrot.slane %v1693, 7
    %v1696 = vrot.slane %v1695, 4
    %v1698 = vshrl.u32 %v1508, 16
    %v1700 = vrot.slane %v1698, 7
    %v1701 = vshll.u32 %v1508, 16
    %v1703 = vor.u32 %v1700, %v1701
    %v1704 = vsel %vm745, %v1696, %v1703
    %v1706 = vshrl.u32 %v1509, 16
    %v1708 = vrot.slane %v1706, 7
    %v1709 = vrot.slane %v1708, 4
    %v1711 = vshrl.u32 %v1510, 16
    %v1713 = vrot.slane %v1711, 7
    %v1714 = vshll.u32 %v1510, 16
    %v1716 = vor.u32 %v1713, %v1714
    %v1717 = vsel %vm745, %v1709, %v1716
    %v1719 = vshrl.u32 %v1511, 16
    %v1721 = vrot.slane %v1719, 7
    %v1722 = vrot.slane %v1721, 4
    %v1724 = vshrl.u32 %v1512, 16
    %v1726 = vrot.slane %v1724, 7
    %v1727 = vshll.u32 %v1512, 16
    %v1729 = vor.u32 %v1726, %v1727
    %v1730 = vsel %vm745, %v1722, %v1729
    %v1732 = vshrl.u32 %v1513, 16
    %v1734 = vrot.slane %v1732, 7
    %v1735 = vrot.slane %v1734, 4
    %v1737 = vshrl.u32 %v1514, 16
    %v1739 = vrot.slane %v1737, 7
    %v1740 = vshll.u32 %v1514, 16
    %v1742 = vor.u32 %v1739, %v1740
    %v1743 = vsel %vm745, %v1735, %v1742
    %v1745 = vshrl.u32 %v1515, 16
    %v1747 = vrot.slane %v1745, 7
    %v1748 = vrot.slane %v1747, 4
    %v1750 = vshrl.u32 %v1516, 16
    %v1752 = vrot.slane %v1750, 7
    %v1753 = vshll.u32 %v1516, 16
    %v1755 = vor.u32 %v1752, %v1753
    %v1756 = vsel %vm745, %v1748, %v1755
    %v1758 = vshrl.u32 %v1517, 16
    %v1760 = vrot.slane %v1758, 7
    %v1761 = vrot.slane %v1760, 4
    %v1763 = vshrl.u32 %v1518, 16
    %v1765 = vrot.slane %v1763, 7
    %v1766 = vshll.u32 %v1518, 16
    %v1768 = vor.u32 %v1765, %v1766
    %v1769 = vsel %vm745, %v1761, %v1768
    %v1771 = vshrl.u32 %v1519, 16
    %v1773 = vrot.slane %v1771, 7
    %v1774 = vrot.slane %v1773, 4
    %v1776 = vshrl.u32 %v1520, 16
    %v1778 = vrot.slane %v1776, 7
    %v1779 = vshll.u32 %v1520, 16
    %v1781 = vor.u32 %v1778, %v1779
    %v1782 = vsel %vm745, %v1774, %v1781
    %v1784 = vshrl.u32 %v1521, 16
    %v1786 = vrot.slane %v1784, 7
    %v1787 = vrot.slane %v1786, 4
    %v1789 = vshrl.u32 %v1522, 16
    %v1791 = vrot.slane %v1789, 7
    %v1792 = vshll.u32 %v1522, 16
    %v1794 = vor.u32 %v1791, %v1792
    %v1795 = vsel %vm745, %v1787, %v1794
    %v1797 = vshrl.u32 %v1523, 16
    %v1799 = vrot.slane %v1797, 7
    %v1800 = vrot.slane %v1799, 4
    %v1802 = vshrl.u32 %v1524, 16
    %v1804 = vrot.slane %v1802, 7
    %v1805 = vshll.u32 %v1524, 16
    %v1807 = vor.u32 %v1804, %v1805
    %v1808 = vsel %vm745, %v1800, %v1807
    %v1810 = vshrl.u32 %v1525, 16
    %v1812 = vrot.slane %v1810, 7
    %v1813 = vrot.slane %v1812, 4
    %v1815 = vshrl.u32 %v1526, 16
    %v1817 = vrot.slane %v1815, 7
    %v1818 = vshll.u32 %v1526, 16
    %v1820 = vor.u32 %v1817, %v1818
    %v1821 = vsel %vm745, %v1813, %v1820
    %v1823 = vshrl.u32 %v1527, 16
    %v1825 = vrot.slane %v1823, 7
    %v1826 = vrot.slane %v1825, 4
    %v1828 = vshrl.u32 %v1528, 16
    %v1830 = vrot.slane %v1828, 7
    %v1831 = vshll.u32 %v1528, 16
    %v1833 = vor.u32 %v1830, %v1831
    %v1834 = vsel %vm745, %v1826, %v1833
    %v1836 = vshrl.u32 %v1529, 16
    %v1838 = vrot.slane %v1836, 7
    %v1839 = vrot.slane %v1838, 4
    %v1841 = vshrl.u32 %v1530, 16
    %v1843 = vrot.slane %v1841, 7
    %v1844 = vshll.u32 %v1530, 16
    %v1846 = vor.u32 %v1843, %v1844
    %v1847 = vsel %vm745, %v1839, %v1846
    %v1849 = vshrl.u32 %v1531, 16
    %v1851 = vrot.slane %v1849, 7
    %v1852 = vrot.slane %v1851, 4
    %v1854 = vshrl.u32 %v1532, 16
    %v1856 = vrot.slane %v1854, 7
    %v1857 = vshll.u32 %v1532, 16
    %v1859 = vor.u32 %v1856, %v1857
    %v1860 = vsel %vm745, %v1852, %v1859
    %v1862 = vshrl.u32 %v1533, 16
    %v1864 = vrot.slane %v1862, 7
    %v1865 = vrot.slane %v1864, 4
    %v1867 = vshrl.u32 %v1534, 16
    %v1869 = vrot.slane %v1867, 7
    %v1870 = vshll.u32 %v1534, 16
    %v1872 = vor.u32 %v1869, %v1870
    %v1873 = vsel %vm745, %v1865, %v1872
    %v1875 = vshrl.u32 %v1535, 16
    %v1877 = vrot.slane %v1875, 7
    %v1878 = vrot.slane %v1877, 4
    %v1880 = vshrl.u32 %v1536, 16
    %v1882 = vrot.slane %v1880, 7
    %v1883 = vshll.u32 %v1536, 16
    %v1885 = vor.u32 %v1882, %v1883
    %v1886 = vsel %vm745, %v1878, %v1885
    %v1888 = vshrl.u32 %v1537, 16
    %v1890 = vrot.slane %v1888, 7
    %v1891 = vrot.slane %v1890, 4
    %v1893 = vshrl.u32 %v1538, 16
    %v1895 = vrot.slane %v1893, 7
    %v1896 = vshll.u32 %v1538, 16
    %v1898 = vor.u32 %v1895, %v1896
    %v1899 = vsel %vm745, %v1891, %v1898
    %v1901 = vshrl.u32 %v1539, 16
    %v1903 = vrot.slane %v1901, 7
    %v1904 = vrot.slane %v1903, 4
    %v1906 = vshrl.u32 %v1540, 16
    %v1908 = vrot.slane %v1906, 7
    %v1909 = vshll.u32 %v1540, 16
    %v1911 = vor.u32 %v1908, %v1909
    %v1912 = vsel %vm745, %v1904, %v1911
    %v1914 = vshrl.u32 %v1541, 16
    %v1916 = vrot.slane %v1914, 7
    %v1917 = vrot.slane %v1916, 4
    %v1919 = vshrl.u32 %v1542, 16
    %v1921 = vrot.slane %v1919, 7
    %v1922 = vshll.u32 %v1542, 16
    %v1924 = vor.u32 %v1921, %v1922
    %v1925 = vsel %vm745, %v1917, %v1924
    %v1927 = vshrl.u32 %v1543, 16
    %v1929 = vrot.slane %v1927, 7
    %v1930 = vrot.slane %v1929, 4
    %v1932 = vshrl.u32 %v1544, 16
    %v1934 = vrot.slane %v1932, 7
    %v1935 = vshll.u32 %v1544, 16
    %v1937 = vor.u32 %v1934, %v1935
    %v1938 = vsel %vm745, %v1930, %v1937
    %v1940 = vshrl.u32 %v1545, 16
    %v1942 = vrot.slane %v1940, 7
    %v1943 = vrot.slane %v1942, 4
    %v1945 = vshrl.u32 %v1546, 16
    %v1947 = vrot.slane %v1945, 7
    %v1948 = vshll.u32 %v1546, 16
    %v1950 = vor.u32 %v1947, %v1948
    %v1951 = vsel %vm745, %v1943, %v1950
    %v1953 = vshrl.u32 %v1547, 16
    %v1955 = vrot.slane %v1953, 7
    %v1956 = vrot.slane %v1955, 4
    %v1958 = vshrl.u32 %v1548, 16
    %v1960 = vrot.slane %v1958, 7
    %v1961 = vshll.u32 %v1548, 16
    %v1963 = vor.u32 %v1960, %v1961
    %v1964 = vsel %vm745, %v1956, %v1963
    %v1965 = vld [vmem:[%s645 + $0x8] sm:$0x1]
    %v1966 = vld [vmem:[%s645 + $0x14] sm:$0x1]
    %v1967 = vld [vmem:[%s645 + $0x20] sm:$0x1]
    %v1968 = vld [vmem:[%s645 + $0x2c] sm:$0x1]
    %v1969 = vld [vmem:[%s645 + $0x38] sm:$0x1]
    %v1970 = vld [vmem:[%s645 + $0x44] sm:$0x1]
    %v1971 = vld [vmem:[%s645 + $0x50] sm:$0x1]
    %v1972 = vld [vmem:[%s645 + $0x5c] sm:$0x1]
    %v1973 = vld [vmem:[%s645 + $0x80] sm:$0x1]
    %v1974 = vld [vmem:[%s645 + $0x8c] sm:$0x1]
    %v1975 = vld [vmem:[%s645 + $0x98] sm:$0x1]
    %v1976 = vld [vmem:[%s645 + $0xa4] sm:$0x1]
    %v1977 = vld [vmem:[%s645 + $0xb0] sm:$0x1]
    %v1978 = vld [vmem:[%s645 + $0xbc] sm:$0x1]
    %v1979 = vld [vmem:[%s645 + $0xc8] sm:$0x1]
    %v1980 = vld [vmem:[%s645 + $0xd4] sm:$0x1]
    %v1981 = vld [vmem:[%s645 + $0xf8] sm:$0x1]
    %v1982 = vld [vmem:[%s645 + $0x104] sm:$0x1]
    %v1983 = vld [vmem:[%s645 + $0x110] sm:$0x1]
    %v1984 = vld [vmem:[%s645 + $0x11c] sm:$0x1]
    %v1985 = vld [vmem:[%s645 + $0x128] sm:$0x1]
    %v1986 = vld [vmem:[%s645 + $0x134] sm:$0x1]
    %v1987 = vld [vmem:[%s645 + $0x140] sm:$0x1]
    %v1988 = vld [vmem:[%s645 + $0x14c] sm:$0x1]
    %v1989 = vld [vmem:[%s645 + $0x170] sm:$0x1]
    %v1990 = vld [vmem:[%s645 + $0x17c] sm:$0x1]
    %v1991 = vld [vmem:[%s645 + $0x188] sm:$0x1]
    %v1992 = vld [vmem:[%s645 + $0x194] sm:$0x1]
    %v1993 = vld [vmem:[%s645 + $0x1a0] sm:$0x1]
    %v1994 = vld [vmem:[%s645 + $0x1ac] sm:$0x1]
    %v1995 = vld [vmem:[%s645 + $0x1b8] sm:$0x1]
    %v1996 = vld [vmem:[%s645 + $0x1c4] sm:$0x1]
    %v1997 = vrot.slane %v1555, 4
    %v1998 = vrot.slane %v1558, 5
    %v1999 = vor.u32 %v1997, %v1998
    %v2000 = vrot.slane %v1999, 4
    %v2002 = vshll.u32 %v1965, 16
    %v2004 = vrot.slane %v2002, 5
    %v2005 = vsel %vm1196, %v2000, %v2004
    %v2006 = vrot.slane %v1568, 4
    %v2007 = vrot.slane %v1571, 5
    %v2008 = vor.u32 %v2006, %v2007
    %v2009 = vrot.slane %v2008, 4
    %v2011 = vshll.u32 %v1966, 16
    %v2013 = vrot.slane %v2011, 5
    %v2014 = vsel %vm1196, %v2009, %v2013
    %v2015 = vrot.slane %v1581, 4
    %v2016 = vrot.slane %v1584, 5
    %v2017 = vor.u32 %v2015, %v2016
    %v2018 = vrot.slane %v2017, 4
    %v2020 = vshll.u32 %v1967, 16
    %v2022 = vrot.slane %v2020, 5
    %v2023 = vsel %vm1196, %v2018, %v2022
    %v2024 = vrot.slane %v1594, 4
    %v2025 = vrot.slane %v1597, 5
    %v2026 = vor.u32 %v2024, %v2025
    %v2027 = vrot.slane %v2026, 4
    %v2029 = vshll.u32 %v1968, 16
    %v2031 = vrot.slane %v2029, 5
    %v2032 = vsel %vm1196, %v2027, %v2031
    %v2033 = vrot.slane %v1607, 4
    %v2034 = vrot.slane %v1610, 5
    %v2035 = vor.u32 %v2033, %v2034
    %v2036 = vrot.slane %v2035, 4
    %v2038 = vshll.u32 %v1969, 16
    %v2040 = vrot.slane %v2038, 5
    %v2041 = vsel %vm1196, %v2036, %v2040
    %v2042 = vrot.slane %v1620, 4
    %v2043 = vrot.slane %v1623, 5
    %v2044 = vor.u32 %v2042, %v2043
    %v2045 = vrot.slane %v2044, 4
    %v2047 = vshll.u32 %v1970, 16
    %v2049 = vrot.slane %v2047, 5
    %v2050 = vsel %vm1196, %v2045, %v2049
    %v2051 = vrot.slane %v1633, 4
    %v2052 = vrot.slane %v1636, 5
    %v2053 = vor.u32 %v2051, %v2052
    %v2054 = vrot.slane %v2053, 4
    %v2056 = vshll.u32 %v1971, 16
    %v2058 = vrot.slane %v2056, 5
    %v2059 = vsel %vm1196, %v2054, %v2058
    %v2060 = vrot.slane %v1646, 4
    %v2061 = vrot.slane %v1649, 5
    %v2062 = vor.u32 %v2060, %v2061
    %v2063 = vrot.slane %v2062, 4
    %v2065 = vshll.u32 %v1972, 16
    %v2067 = vrot.slane %v2065, 5
    %v2068 = vsel %vm1196, %v2063, %v2067
    %v2069 = vrot.slane %v1659, 4
    %v2070 = vrot.slane %v1662, 5
    %v2071 = vor.u32 %v2069, %v2070
    %v2072 = vrot.slane %v2071, 4
    %v2074 = vshll.u32 %v1973, 16
    %v2076 = vrot.slane %v2074, 5
    %v2077 = vsel %vm1196, %v2072, %v2076
    %v2078 = vrot.slane %v1672, 4
    %v2079 = vrot.slane %v1675, 5
    %v2080 = vor.u32 %v2078, %v2079
    %v2081 = vrot.slane %v2080, 4
    %v2083 = vshll.u32 %v1974, 16
    %v2085 = vrot.slane %v2083, 5
    %v2086 = vsel %vm1196, %v2081, %v2085
    %v2087 = vrot.slane %v1685, 4
    %v2088 = vrot.slane %v1688, 5
    %v2089 = vor.u32 %v2087, %v2088
    %v2090 = vrot.slane %v2089, 4
    %v2092 = vshll.u32 %v1975, 16
    %v2094 = vrot.slane %v2092, 5
    %v2095 = vsel %vm1196, %v2090, %v2094
    %v2096 = vrot.slane %v1698, 4
    %v2097 = vrot.slane %v1701, 5
    %v2098 = vor.u32 %v2096, %v2097
    %v2099 = vrot.slane %v2098, 4
    %v2101 = vshll.u32 %v1976, 16
    %v2103 = vrot.slane %v2101, 5
    %v2104 = vsel %vm1196, %v2099, %v2103
    %v2105 = vrot.slane %v1711, 4
    %v2106 = vrot.slane %v1714, 5
    %v2107 = vor.u32 %v2105, %v2106
    %v2108 = vrot.slane %v2107, 4
    %v2110 = vshll.u32 %v1977, 16
    %v2112 = vrot.slane %v2110, 5
    %v2113 = vsel %vm1196, %v2108, %v2112
    %v2114 = vrot.slane %v1724, 4
    %v2115 = vrot.slane %v1727, 5
    %v2116 = vor.u32 %v2114, %v2115
    %v2117 = vrot.slane %v2116, 4
    %v2119 = vshll.u32 %v1978, 16
    %v2121 = vrot.slane %v2119, 5
    %v2122 = vsel %vm1196, %v2117, %v2121
    %v2123 = vrot.slane %v1737, 4
    %v2124 = vrot.slane %v1740, 5
    %v2125 = vor.u32 %v2123, %v2124
    %v2126 = vrot.slane %v2125, 4
    %v2128 = vshll.u32 %v1979, 16
    %v2130 = vrot.slane %v2128, 5
    %v2131 = vsel %vm1196, %v2126, %v2130
    %v2132 = vrot.slane %v1750, 4
    %v2133 = vrot.slane %v1753, 5
    %v2134 = vor.u32 %v2132, %v2133
    %v2135 = vrot.slane %v2134, 4
    %v2137 = vshll.u32 %v1980, 16
    %v2139 = vrot.slane %v2137, 5
    %v2140 = vsel %vm1196, %v2135, %v2139
    %v2141 = vrot.slane %v1763, 4
    %v2142 = vrot.slane %v1766, 5
    %v2143 = vor.u32 %v2141, %v2142
    %v2144 = vrot.slane %v2143, 4
    %v2146 = vshll.u32 %v1981, 16
    %v2148 = vrot.slane %v2146, 5
    %v2149 = vsel %vm1196, %v2144, %v2148
    %v2150 = vrot.slane %v1776, 4
    %v2151 = vrot.slane %v1779, 5
    %v2152 = vor.u32 %v2150, %v2151
    %v2153 = vrot.slane %v2152, 4
    %v2155 = vshll.u32 %v1982, 16
    %v2157 = vrot.slane %v2155, 5
    %v2158 = vsel %vm1196, %v2153, %v2157
    %v2159 = vrot.slane %v1789, 4
    %v2160 = vrot.slane %v1792, 5
    %v2161 = vor.u32 %v2159, %v2160
    %v2162 = vrot.slane %v2161, 4
    %v2164 = vshll.u32 %v1983, 16
    %v2166 = vrot.slane %v2164, 5
    %v2167 = vsel %vm1196, %v2162, %v2166
    %v2168 = vrot.slane %v1802, 4
    %v2169 = vrot.slane %v1805, 5
    %v2170 = vor.u32 %v2168, %v2169
    %v2171 = vrot.slane %v2170, 4
    %v2173 = vshll.u32 %v1984, 16
    %v2175 = vrot.slane %v2173, 5
    %v2176 = vsel %vm1196, %v2171, %v2175
    %v2177 = vrot.slane %v1815, 4
    %v2178 = vrot.slane %v1818, 5
    %v2179 = vor.u32 %v2177, %v2178
    %v2180 = vrot.slane %v2179, 4
    %v2182 = vshll.u32 %v1985, 16
    %v2184 = vrot.slane %v2182, 5
    %v2185 = vsel %vm1196, %v2180, %v2184
    %v2186 = vrot.slane %v1828, 4
    %v2187 = vrot.slane %v1831, 5
    %v2188 = vor.u32 %v2186, %v2187
    %v2189 = vrot.slane %v2188, 4
    %v2191 = vshll.u32 %v1986, 16
    %v2193 = vrot.slane %v2191, 5
    %v2194 = vsel %vm1196, %v2189, %v2193
    %v2195 = vrot.slane %v1841, 4
    %v2196 = vrot.slane %v1844, 5
    %v2197 = vor.u32 %v2195, %v2196
    %v2198 = vrot.slane %v2197, 4
    %v2200 = vshll.u32 %v1987, 16
    %v2202 = vrot.slane %v2200, 5
    %v2203 = vsel %vm1196, %v2198, %v2202
    %v2204 = vrot.slane %v1854, 4
    %v2205 = vrot.slane %v1857, 5
    %v2206 = vor.u32 %v2204, %v2205
    %v2207 = vrot.slane %v2206, 4
    %v2209 = vshll.u32 %v1988, 16
    %v2211 = vrot.slane %v2209, 5
    %v2212 = vsel %vm1196, %v2207, %v2211
    %v2213 = vrot.slane %v1867, 4
    %v2214 = vrot.slane %v1870, 5
    %v2215 = vor.u32 %v2213, %v2214
    %v2216 = vrot.slane %v2215, 4
    %v2218 = vshll.u32 %v1989, 16
    %v2220 = vrot.slane %v2218, 5
    %v2221 = vsel %vm1196, %v2216, %v2220
    %v2222 = vrot.slane %v1880, 4
    %v2223 = vrot.slane %v1883, 5
    %v2224 = vor.u32 %v2222, %v2223
    %v2225 = vrot.slane %v2224, 4
    %v2227 = vshll.u32 %v1990, 16
    %v2229 = vrot.slane %v2227, 5
    %v2230 = vsel %vm1196, %v2225, %v2229
    %v2231 = vrot.slane %v1893, 4
    %v2232 = vrot.slane %v1896, 5
    %v2233 = vor.u32 %v2231, %v2232
    %v2234 = vrot.slane %v2233, 4
    %v2236 = vshll.u32 %v1991, 16
    %v2238 = vrot.slane %v2236, 5
    %v2239 = vsel %vm1196, %v2234, %v2238
    %v2240 = vrot.slane %v1906, 4
    %v2241 = vrot.slane %v1909, 5
    %v2242 = vor.u32 %v2240, %v2241
    %v2243 = vrot.slane %v2242, 4
    %v2245 = vshll.u32 %v1992, 16
    %v2247 = vrot.slane %v2245, 5
    %v2248 = vsel %vm1196, %v2243, %v2247
    %v2249 = vrot.slane %v1919, 4
    %v2250 = vrot.slane %v1922, 5
    %v2251 = vor.u32 %v2249, %v2250
    %v2252 = vrot.slane %v2251, 4
    %v2254 = vshll.u32 %v1993, 16
    %v2256 = vrot.slane %v2254, 5
    %v2257 = vsel %vm1196, %v2252, %v2256
    %v2258 = vrot.slane %v1932, 4
    %v2259 = vrot.slane %v1935, 5
    %v2260 = vor.u32 %v2258, %v2259
    %v2261 = vrot.slane %v2260, 4
    %v2263 = vshll.u32 %v1994, 16
    %v2265 = vrot.slane %v2263, 5
    %v2266 = vsel %vm1196, %v2261, %v2265
    %v2267 = vrot.slane %v1945, 4
    %v2268 = vrot.slane %v1948, 5
    %v2269 = vor.u32 %v2267, %v2268
    %v2270 = vrot.slane %v2269, 4
    %v2272 = vshll.u32 %v1995, 16
    %v2274 = vrot.slane %v2272, 5
    %v2275 = vsel %vm1196, %v2270, %v2274
    %v2276 = vrot.slane %v1958, 4
    %v2277 = vrot.slane %v1961, 5
    %v2278 = vor.u32 %v2276, %v2277
    %v2279 = vrot.slane %v2278, 4
    %v2281 = vshll.u32 %v1996, 16
    %v2283 = vrot.slane %v2281, 5
    %v2284 = vsel %vm1196, %v2279, %v2283
    %s2285 = scalar_lea.vmem [#allocation2], 24
    %v2286 = vld [vmem:[%s2285] sm:$0x8]
    %v2287 = vld [vmem:[%s2285 + $0x4] sm:$0xf]
    %v2288 = vld [vmem:[%s2285 + $0xc] sm:$0x8]
    %v2289 = vld [vmem:[%s2285 + $0x10] sm:$0xf]
    %v2290 = vld [vmem:[%s2285 + $0x18] sm:$0x8]
    %v2291 = vld [vmem:[%s2285 + $0x1c] sm:$0xf]
    %v2292 = vld [vmem:[%s2285 + $0x24] sm:$0x8]
    %v2293 = vld [vmem:[%s2285 + $0x28] sm:$0xf]
    %v2294 = vld [vmem:[%s2285 + $0x30] sm:$0x8]
    %v2295 = vld [vmem:[%s2285 + $0x34] sm:$0xf]
    %v2296 = vld [vmem:[%s2285 + $0x3c] sm:$0x8]
    %v2297 = vld [vmem:[%s2285 + $0x40] sm:$0xf]
    %v2298 = vld [vmem:[%s2285 + $0x48] sm:$0x8]
    %v2299 = vld [vmem:[%s2285 + $0x4c] sm:$0xf]
    %v2300 = vld [vmem:[%s2285 + $0x54] sm:$0x8]
    %v2301 = vld [vmem:[%s2285 + $0x58] sm:$0xf]
    %v2302 = vld [vmem:[%s2285 + $0x78] sm:$0x8]
    %v2303 = vld [vmem:[%s2285 + $0x7c] sm:$0xf]
    %v2304 = vld [vmem:[%s2285 + $0x84] sm:$0x8]
    %v2305 = vld [vmem:[%s2285 + $0x88] sm:$0xf]
    %v2306 = vld [vmem:[%s2285 + $0x90] sm:$0x8]
    %v2307 = vld [vmem:[%s2285 + $0x94] sm:$0xf]
    %v2308 = vld [vmem:[%s2285 + $0x9c] sm:$0x8]
    %v2309 = vld [vmem:[%s2285 + $0xa0] sm:$0xf]
    %v2310 = vld [vmem:[%s2285 + $0xa8] sm:$0x8]
    %v2311 = vld [vmem:[%s2285 + $0xac] sm:$0xf]
    %v2312 = vld [vmem:[%s2285 + $0xb4] sm:$0x8]
    %v2313 = vld [vmem:[%s2285 + $0xb8] sm:$0xf]
    %v2314 = vld [vmem:[%s2285 + $0xc0] sm:$0x8]
    %v2315 = vld [vmem:[%s2285 + $0xc4] sm:$0xf]
    %v2316 = vld [vmem:[%s2285 + $0xcc] sm:$0x8]
    %v2317 = vld [vmem:[%s2285 + $0xd0] sm:$0xf]
    %v2318 = vld [vmem:[%s2285 + $0xf0] sm:$0x8]
    %v2319 = vld [vmem:[%s2285 + $0xf4] sm:$0xf]
    %v2320 = vld [vmem:[%s2285 + $0xfc] sm:$0x8]
    %v2321 = vld [vmem:[%s2285 + $0x100] sm:$0xf]
    %v2322 = vld [vmem:[%s2285 + $0x108] sm:$0x8]
    %v2323 = vld [vmem:[%s2285 + $0x10c] sm:$0xf]
    %v2324 = vld [vmem:[%s2285 + $0x114] sm:$0x8]
    %v2325 = vld [vmem:[%s2285 + $0x118] sm:$0xf]
    %v2326 = vld [vmem:[%s2285 + $0x120] sm:$0x8]
    %v2327 = vld [vmem:[%s2285 + $0x124] sm:$0xf]
    %v2328 = vld [vmem:[%s2285 + $0x12c] sm:$0x8]
    %v2329 = vld [vmem:[%s2285 + $0x130] sm:$0xf]
    %v2330 = vld [vmem:[%s2285 + $0x138] sm:$0x8]
    %v2331 = vld [vmem:[%s2285 + $0x13c] sm:$0xf]
    %v2332 = vld [vmem:[%s2285 + $0x144] sm:$0x8]
    %v2333 = vld [vmem:[%s2285 + $0x148] sm:$0xf]
    %v2334 = vld [vmem:[%s2285 + $0x168] sm:$0x8]
    %v2335 = vld [vmem:[%s2285 + $0x16c] sm:$0xf]
    %v2336 = vld [vmem:[%s2285 + $0x174] sm:$0x8]
    %v2337 = vld [vmem:[%s2285 + $0x178] sm:$0xf]
    %v2338 = vld [vmem:[%s2285 + $0x180] sm:$0x8]
    %v2339 = vld [vmem:[%s2285 + $0x184] sm:$0xf]
    %v2340 = vld [vmem:[%s2285 + $0x18c] sm:$0x8]
    %v2341 = vld [vmem:[%s2285 + $0x190] sm:$0xf]
    %v2342 = vld [vmem:[%s2285 + $0x198] sm:$0x8]
    %v2343 = vld [vmem:[%s2285 + $0x19c] sm:$0xf]
    %v2344 = vld [vmem:[%s2285 + $0x1a4] sm:$0x8]
    %v2345 = vld [vmem:[%s2285 + $0x1a8] sm:$0xf]
    %v2346 = vld [vmem:[%s2285 + $0x1b0] sm:$0x8]
    %v2347 = vld [vmem:[%s2285 + $0x1b4] sm:$0xf]
    %v2348 = vld [vmem:[%s2285 + $0x1bc] sm:$0x8]
    %v2349 = vld [vmem:[%s2285 + $0x1c0] sm:$0xf]
    %v2351 = vshrl.u32 %v2286, 16
    %v2353 = vrot.slane %v2351, 7
    %v2354 = vrot.slane %v2353, 4
    %v2356 = vshrl.u32 %v2287, 16
    %v2358 = vrot.slane %v2356, 7
    %v2359 = vshll.u32 %v2287, 16
    %v2361 = vor.u32 %v2358, %v2359
    %v2362 = vsel %vm745, %v2354, %v2361
    %v2364 = vshrl.u32 %v2288, 16
    %v2366 = vrot.slane %v2364, 7
    %v2367 = vrot.slane %v2366, 4
    %v2369 = vshrl.u32 %v2289, 16
    %v2371 = vrot.slane %v2369, 7
    %v2372 = vshll.u32 %v2289, 16
    %v2374 = vor.u32 %v2371, %v2372
    %v2375 = vsel %vm745, %v2367, %v2374
    %v2377 = vshrl.u32 %v2290, 16
    %v2379 = vrot.slane %v2377, 7
    %v2380 = vrot.slane %v2379, 4
    %v2382 = vshrl.u32 %v2291, 16
    %v2384 = vrot.slane %v2382, 7
    %v2385 = vshll.u32 %v2291, 16
    %v2387 = vor.u32 %v2384, %v2385
    %v2388 = vsel %vm745, %v2380, %v2387
    %v2390 = vshrl.u32 %v2292, 16
    %v2392 = vrot.slane %v2390, 7
    %v2393 = vrot.slane %v2392, 4
    %v2395 = vshrl.u32 %v2293, 16
    %v2397 = vrot.slane %v2395, 7
    %v2398 = vshll.u32 %v2293, 16
    %v2400 = vor.u32 %v2397, %v2398
    %v2401 = vsel %vm745, %v2393, %v2400
    %v2403 = vshrl.u32 %v2294, 16
    %v2405 = vrot.slane %v2403, 7
    %v2406 = vrot.slane %v2405, 4
    %v2408 = vshrl.u32 %v2295, 16
    %v2410 = vrot.slane %v2408, 7
    %v2411 = vshll.u32 %v2295, 16
    %v2413 = vor.u32 %v2410, %v2411
    %v2414 = vsel %vm745, %v2406, %v2413
    %v2416 = vshrl.u32 %v2296, 16
    %v2418 = vrot.slane %v2416, 7
    %v2419 = vrot.slane %v2418, 4
    %v2421 = vshrl.u32 %v2297, 16
    %v2423 = vrot.slane %v2421, 7
    %v2424 = vshll.u32 %v2297, 16
    %v2426 = vor.u32 %v2423, %v2424
    %v2427 = vsel %vm745, %v2419, %v2426
    %v2429 = vshrl.u32 %v2298, 16
    %v2431 = vrot.slane %v2429, 7
    %v2432 = vrot.slane %v2431, 4
    %v2434 = vshrl.u32 %v2299, 16
    %v2436 = vrot.slane %v2434, 7
    %v2437 = vshll.u32 %v2299, 16
    %v2439 = vor.u32 %v2436, %v2437
    %v2440 = vsel %vm745, %v2432, %v2439
    %v2442 = vshrl.u32 %v2300, 16
    %v2444 = vrot.slane %v2442, 7
    %v2445 = vrot.slane %v2444, 4
    %v2447 = vshrl.u32 %v2301, 16
    %v2449 = vrot.slane %v2447, 7
    %v2450 = vshll.u32 %v2301, 16
    %v2452 = vor.u32 %v2449, %v2450
    %v2453 = vsel %vm745, %v2445, %v2452
    %v2455 = vshrl.u32 %v2302, 16
    %v2457 = vrot.slane %v2455, 7
    %v2458 = vrot.slane %v2457, 4
    %v2460 = vshrl.u32 %v2303, 16
    %v2462 = vrot.slane %v2460, 7
    %v2463 = vshll.u32 %v2303, 16
    %v2465 = vor.u32 %v2462, %v2463
    %v2466 = vsel %vm745, %v2458, %v2465
    %v2468 = vshrl.u32 %v2304, 16
    %v2470 = vrot.slane %v2468, 7
    %v2471 = vrot.slane %v2470, 4
    %v2473 = vshrl.u32 %v2305, 16
    %v2475 = vrot.slane %v2473, 7
    %v2476 = vshll.u32 %v2305, 16
    %v2478 = vor.u32 %v2475, %v2476
    %v2479 = vsel %vm745, %v2471, %v2478
    %v2481 = vshrl.u32 %v2306, 16
    %v2483 = vrot.slane %v2481, 7
    %v2484 = vrot.slane %v2483, 4
    %v2486 = vshrl.u32 %v2307, 16
    %v2488 = vrot.slane %v2486, 7
    %v2489 = vshll.u32 %v2307, 16
    %v2491 = vor.u32 %v2488, %v2489
    %v2492 = vsel %vm745, %v2484, %v2491
    %v2494 = vshrl.u32 %v2308, 16
    %v2496 = vrot.slane %v2494, 7
    %v2497 = vrot.slane %v2496, 4
    %v2499 = vshrl.u32 %v2309, 16
    %v2501 = vrot.slane %v2499, 7
    %v2502 = vshll.u32 %v2309, 16
    %v2504 = vor.u32 %v2501, %v2502
    %v2505 = vsel %vm745, %v2497, %v2504
    %v2507 = vshrl.u32 %v2310, 16
    %v2509 = vrot.slane %v2507, 7
    %v2510 = vrot.slane %v2509, 4
    %v2512 = vshrl.u32 %v2311, 16
    %v2514 = vrot.slane %v2512, 7
    %v2515 = vshll.u32 %v2311, 16
    %v2517 = vor.u32 %v2514, %v2515
    %v2518 = vsel %vm745, %v2510, %v2517
    %v2520 = vshrl.u32 %v2312, 16
    %v2522 = vrot.slane %v2520, 7
    %v2523 = vrot.slane %v2522, 4
    %v2525 = vshrl.u32 %v2313, 16
    %v2527 = vrot.slane %v2525, 7
    %v2528 = vshll.u32 %v2313, 16
    %v2530 = vor.u32 %v2527, %v2528
    %v2531 = vsel %vm745, %v2523, %v2530
    %v2533 = vshrl.u32 %v2314, 16
    %v2535 = vrot.slane %v2533, 7
    %v2536 = vrot.slane %v2535, 4
    %v2538 = vshrl.u32 %v2315, 16
    %v2540 = vrot.slane %v2538, 7
    %v2541 = vshll.u32 %v2315, 16
    %v2543 = vor.u32 %v2540, %v2541
    %v2544 = vsel %vm745, %v2536, %v2543
    %v2546 = vshrl.u32 %v2316, 16
    %v2548 = vrot.slane %v2546, 7
    %v2549 = vrot.slane %v2548, 4
    %v2551 = vshrl.u32 %v2317, 16
    %v2553 = vrot.slane %v2551, 7
    %v2554 = vshll.u32 %v2317, 16
    %v2556 = vor.u32 %v2553, %v2554
    %v2557 = vsel %vm745, %v2549, %v2556
    %v2559 = vshrl.u32 %v2318, 16
    %v2561 = vrot.slane %v2559, 7
    %v2562 = vrot.slane %v2561, 4
    %v2564 = vshrl.u32 %v2319, 16
    %v2566 = vrot.slane %v2564, 7
    %v2567 = vshll.u32 %v2319, 16
    %v2569 = vor.u32 %v2566, %v2567
    %v2570 = vsel %vm745, %v2562, %v2569
    %v2572 = vshrl.u32 %v2320, 16
    %v2574 = vrot.slane %v2572, 7
    %v2575 = vrot.slane %v2574, 4
    %v2577 = vshrl.u32 %v2321, 16
    %v2579 = vrot.slane %v2577, 7
    %v2580 = vshll.u32 %v2321, 16
    %v2582 = vor.u32 %v2579, %v2580
    %v2583 = vsel %vm745, %v2575, %v2582
    %v2585 = vshrl.u32 %v2322, 16
    %v2587 = vrot.slane %v2585, 7
    %v2588 = vrot.slane %v2587, 4
    %v2590 = vshrl.u32 %v2323, 16
    %v2592 = vrot.slane %v2590, 7
    %v2593 = vshll.u32 %v2323, 16
    %v2595 = vor.u32 %v2592, %v2593
    %v2596 = vsel %vm745, %v2588, %v2595
    %v2598 = vshrl.u32 %v2324, 16
    %v2600 = vrot.slane %v2598, 7
    %v2601 = vrot.slane %v2600, 4
    %v2603 = vshrl.u32 %v2325, 16
    %v2605 = vrot.slane %v2603, 7
    %v2606 = vshll.u32 %v2325, 16
    %v2608 = vor.u32 %v2605, %v2606
    %v2609 = vsel %vm745, %v2601, %v2608
    %v2611 = vshrl.u32 %v2326, 16
    %v2613 = vrot.slane %v2611, 7
    %v2614 = vrot.slane %v2613, 4
    %v2616 = vshrl.u32 %v2327, 16
    %v2618 = vrot.slane %v2616, 7
    %v2619 = vshll.u32 %v2327, 16
    %v2621 = vor.u32 %v2618, %v2619
    %v2622 = vsel %vm745, %v2614, %v2621
    %v2624 = vshrl.u32 %v2328, 16
    %v2626 = vrot.slane %v2624, 7
    %v2627 = vrot.slane %v2626, 4
    %v2629 = vshrl.u32 %v2329, 16
    %v2631 = vrot.slane %v2629, 7
    %v2632 = vshll.u32 %v2329, 16
    %v2634 = vor.u32 %v2631, %v2632
    %v2635 = vsel %vm745, %v2627, %v2634
    %v2637 = vshrl.u32 %v2330, 16
    %v2639 = vrot.slane %v2637, 7
    %v2640 = vrot.slane %v2639, 4
    %v2642 = vshrl.u32 %v2331, 16
    %v2644 = vrot.slane %v2642, 7
    %v2645 = vshll.u32 %v2331, 16
    %v2647 = vor.u32 %v2644, %v2645
    %v2648 = vsel %vm745, %v2640, %v2647
    %v2650 = vshrl.u32 %v2332, 16
    %v2652 = vrot.slane %v2650, 7
    %v2653 = vrot.slane %v2652, 4
    %v2655 = vshrl.u32 %v2333, 16
    %v2657 = vrot.slane %v2655, 7
    %v2658 = vshll.u32 %v2333, 16
    %v2660 = vor.u32 %v2657, %v2658
    %v2661 = vsel %vm745, %v2653, %v2660
    %v2663 = vshrl.u32 %v2334, 16
    %v2665 = vrot.slane %v2663, 7
    %v2666 = vrot.slane %v2665, 4
    %v2668 = vshrl.u32 %v2335, 16
    %v2670 = vrot.slane %v2668, 7
    %v2671 = vshll.u32 %v2335, 16
    %v2673 = vor.u32 %v2670, %v2671
    %v2674 = vsel %vm745, %v2666, %v2673
    %v2676 = vshrl.u32 %v2336, 16
    %v2678 = vrot.slane %v2676, 7
    %v2679 = vrot.slane %v2678, 4
    %v2681 = vshrl.u32 %v2337, 16
    %v2683 = vrot.slane %v2681, 7
    %v2684 = vshll.u32 %v2337, 16
    %v2686 = vor.u32 %v2683, %v2684
    %v2687 = vsel %vm745, %v2679, %v2686
    %v2689 = vshrl.u32 %v2338, 16
    %v2691 = vrot.slane %v2689, 7
    %v2692 = vrot.slane %v2691, 4
    %v2694 = vshrl.u32 %v2339, 16
    %v2696 = vrot.slane %v2694, 7
    %v2697 = vshll.u32 %v2339, 16
    %v2699 = vor.u32 %v2696, %v2697
    %v2700 = vsel %vm745, %v2692, %v2699
    %v2702 = vshrl.u32 %v2340, 16
    %v2704 = vrot.slane %v2702, 7
    %v2705 = vrot.slane %v2704, 4
    %v2707 = vshrl.u32 %v2341, 16
    %v2709 = vrot.slane %v2707, 7
    %v2710 = vshll.u32 %v2341, 16
    %v2712 = vor.u32 %v2709, %v2710
    %v2713 = vsel %vm745, %v2705, %v2712
    %v2715 = vshrl.u32 %v2342, 16
    %v2717 = vrot.slane %v2715, 7
    %v2718 = vrot.slane %v2717, 4
    %v2720 = vshrl.u32 %v2343, 16
    %v2722 = vrot.slane %v2720, 7
    %v2723 = vshll.u32 %v2343, 16
    %v2725 = vor.u32 %v2722, %v2723
    %v2726 = vsel %vm745, %v2718, %v2725
    %v2728 = vshrl.u32 %v2344, 16
    %v2730 = vrot.slane %v2728, 7
    %v2731 = vrot.slane %v2730, 4
    %v2733 = vshrl.u32 %v2345, 16
    %v2735 = vrot.slane %v2733, 7
    %v2736 = vshll.u32 %v2345, 16
    %v2738 = vor.u32 %v2735, %v2736
    %v2739 = vsel %vm745, %v2731, %v2738
    %v2741 = vshrl.u32 %v2346, 16
    %v2743 = vrot.slane %v2741, 7
    %v2744 = vrot.slane %v2743, 4
    %v2746 = vshrl.u32 %v2347, 16
    %v2748 = vrot.slane %v2746, 7
    %v2749 = vshll.u32 %v2347, 16
    %v2751 = vor.u32 %v2748, %v2749
    %v2752 = vsel %vm745, %v2744, %v2751
    %v2754 = vshrl.u32 %v2348, 16
    %v2756 = vrot.slane %v2754, 7
    %v2757 = vrot.slane %v2756, 4
    %v2759 = vshrl.u32 %v2349, 16
    %v2761 = vrot.slane %v2759, 7
    %v2762 = vshll.u32 %v2349, 16
    %v2764 = vor.u32 %v2761, %v2762
    %v2765 = vsel %vm745, %v2757, %v2764
    %v2766 = vld [vmem:[%s2285 + $0x8] sm:$0x1]
    %v2767 = vld [vmem:[%s2285 + $0x14] sm:$0x1]
    %v2768 = vld [vmem:[%s2285 + $0x20] sm:$0x1]
    %v2769 = vld [vmem:[%s2285 + $0x2c] sm:$0x1]
    %v2770 = vld [vmem:[%s2285 + $0x38] sm:$0x1]
    %v2771 = vld [vmem:[%s2285 + $0x44] sm:$0x1]
    %v2772 = vld [vmem:[%s2285 + $0x50] sm:$0x1]
    %v2773 = vld [vmem:[%s2285 + $0x5c] sm:$0x1]
    %v2774 = vld [vmem:[%s2285 + $0x80] sm:$0x1]
    %v2775 = vld [vmem:[%s2285 + $0x8c] sm:$0x1]
    %v2776 = vld [vmem:[%s2285 + $0x98] sm:$0x1]
    %v2777 = vld [vmem:[%s2285 + $0xa4] sm:$0x1]
    %v2778 = vld [vmem:[%s2285 + $0xb0] sm:$0x1]
    %v2779 = vld [vmem:[%s2285 + $0xbc] sm:$0x1]
    %v2780 = vld [vmem:[%s2285 + $0xc8] sm:$0x1]
    %v2781 = vld [vmem:[%s2285 + $0xd4] sm:$0x1]
    %v2782 = vld [vmem:[%s2285 + $0xf8] sm:$0x1]
    %v2783 = vld [vmem:[%s2285 + $0x104] sm:$0x1]
    %v2784 = vld [vmem:[%s2285 + $0x110] sm:$0x1]
    %v2785 = vld [vmem:[%s2285 + $0x11c] sm:$0x1]
    %v2786 = vld [vmem:[%s2285 + $0x128] sm:$0x1]
    %v2787 = vld [vmem:[%s2285 + $0x134] sm:$0x1]
    %v2788 = vld [vmem:[%s2285 + $0x140] sm:$0x1]
    %v2789 = vld [vmem:[%s2285 + $0x14c] sm:$0x1]
    %v2790 = vld [vmem:[%s2285 + $0x170] sm:$0x1]
    %v2791 = vld [vmem:[%s2285 + $0x17c] sm:$0x1]
    %v2792 = vld [vmem:[%s2285 + $0x188] sm:$0x1]
    %v2793 = vld [vmem:[%s2285 + $0x194] sm:$0x1]
    %v2794 = vld [vmem:[%s2285 + $0x1a0] sm:$0x1]
    %v2795 = vld [vmem:[%s2285 + $0x1ac] sm:$0x1]
    %v2796 = vld [vmem:[%s2285 + $0x1b8] sm:$0x1]
    %v2797 = vld [vmem:[%s2285 + $0x1c4] sm:$0x1]
    %v2798 = vrot.slane %v2356, 4
    %v2799 = vrot.slane %v2359, 5
    %v2800 = vor.u32 %v2798, %v2799
    %v2801 = vrot.slane %v2800, 4
    %v2803 = vshll.u32 %v2766, 16
    %v2805 = vrot.slane %v2803, 5
    %v2806 = vsel %vm1196, %v2801, %v2805
    %v2807 = vrot.slane %v2369, 4
    %v2808 = vrot.slane %v2372, 5
    %v2809 = vor.u32 %v2807, %v2808
    %v2810 = vrot.slane %v2809, 4
    %v2812 = vshll.u32 %v2767, 16
    %v2814 = vrot.slane %v2812, 5
    %v2815 = vsel %vm1196, %v2810, %v2814
    %v2816 = vrot.slane %v2382, 4
    %v2817 = vrot.slane %v2385, 5
    %v2818 = vor.u32 %v2816, %v2817
    %v2819 = vrot.slane %v2818, 4
    %v2821 = vshll.u32 %v2768, 16
    %v2823 = vrot.slane %v2821, 5
    %v2824 = vsel %vm1196, %v2819, %v2823
    %v2825 = vrot.slane %v2395, 4
    %v2826 = vrot.slane %v2398, 5
    %v2827 = vor.u32 %v2825, %v2826
    %v2828 = vrot.slane %v2827, 4
    %v2830 = vshll.u32 %v2769, 16
    %v2832 = vrot.slane %v2830, 5
    %v2833 = vsel %vm1196, %v2828, %v2832
    %v2834 = vrot.slane %v2408, 4
    %v2835 = vrot.slane %v2411, 5
    %v2836 = vor.u32 %v2834, %v2835
    %v2837 = vrot.slane %v2836, 4
    %v2839 = vshll.u32 %v2770, 16
    %v2841 = vrot.slane %v2839, 5
    %v2842 = vsel %vm1196, %v2837, %v2841
    %v2843 = vrot.slane %v2421, 4
    %v2844 = vrot.slane %v2424, 5
    %v2845 = vor.u32 %v2843, %v2844
    %v2846 = vrot.slane %v2845, 4
    %v2848 = vshll.u32 %v2771, 16
    %v2850 = vrot.slane %v2848, 5
    %v2851 = vsel %vm1196, %v2846, %v2850
    %v2852 = vrot.slane %v2434, 4
    %v2853 = vrot.slane %v2437, 5
    %v2854 = vor.u32 %v2852, %v2853
    %v2855 = vrot.slane %v2854, 4
    %v2857 = vshll.u32 %v2772, 16
    %v2859 = vrot.slane %v2857, 5
    %v2860 = vsel %vm1196, %v2855, %v2859
    %v2861 = vrot.slane %v2447, 4
    %v2862 = vrot.slane %v2450, 5
    %v2863 = vor.u32 %v2861, %v2862
    %v2864 = vrot.slane %v2863, 4
    %v2866 = vshll.u32 %v2773, 16
    %v2868 = vrot.slane %v2866, 5
    %v2869 = vsel %vm1196, %v2864, %v2868
    %v2870 = vrot.slane %v2460, 4
    %v2871 = vrot.slane %v2463, 5
    %v2872 = vor.u32 %v2870, %v2871
    %v2873 = vrot.slane %v2872, 4
    %v2875 = vshll.u32 %v2774, 16
    %v2877 = vrot.slane %v2875, 5
    %v2878 = vsel %vm1196, %v2873, %v2877
    %v2879 = vrot.slane %v2473, 4
    %v2880 = vrot.slane %v2476, 5
    %v2881 = vor.u32 %v2879, %v2880
    %v2882 = vrot.slane %v2881, 4
    %v2884 = vshll.u32 %v2775, 16
    %v2886 = vrot.slane %v2884, 5
    %v2887 = vsel %vm1196, %v2882, %v2886
    %v2888 = vrot.slane %v2486, 4
    %v2889 = vrot.slane %v2489, 5
    %v2890 = vor.u32 %v2888, %v2889
    %v2891 = vrot.slane %v2890, 4
    %v2893 = vshll.u32 %v2776, 16
    %v2895 = vrot.slane %v2893, 5
    %v2896 = vsel %vm1196, %v2891, %v2895
    %v2897 = vrot.slane %v2499, 4
    %v2898 = vrot.slane %v2502, 5
    %v2899 = vor.u32 %v2897, %v2898
    %v2900 = vrot.slane %v2899, 4
    %v2902 = vshll.u32 %v2777, 16
    %v2904 = vrot.slane %v2902, 5
    %v2905 = vsel %vm1196, %v2900, %v2904
    %v2906 = vrot.slane %v2512, 4
    %v2907 = vrot.slane %v2515, 5
    %v2908 = vor.u32 %v2906, %v2907
    %v2909 = vrot.slane %v2908, 4
    %v2911 = vshll.u32 %v2778, 16
    %v2913 = vrot.slane %v2911, 5
    %v2914 = vsel %vm1196, %v2909, %v2913
    %v2915 = vrot.slane %v2525, 4
    %v2916 = vrot.slane %v2528, 5
    %v2917 = vor.u32 %v2915, %v2916
    %v2918 = vrot.slane %v2917, 4
    %v2920 = vshll.u32 %v2779, 16
    %v2922 = vrot.slane %v2920, 5
    %v2923 = vsel %vm1196, %v2918, %v2922
    %v2924 = vrot.slane %v2538, 4
    %v2925 = vrot.slane %v2541, 5
    %v2926 = vor.u32 %v2924, %v2925
    %v2927 = vrot.slane %v2926, 4
    %v2929 = vshll.u32 %v2780, 16
    %v2931 = vrot.slane %v2929, 5
    %v2932 = vsel %vm1196, %v2927, %v2931
    %v2933 = vrot.slane %v2551, 4
    %v2934 = vrot.slane %v2554, 5
    %v2935 = vor.u32 %v2933, %v2934
    %v2936 = vrot.slane %v2935, 4
    %v2938 = vshll.u32 %v2781, 16
    %v2940 = vrot.slane %v2938, 5
    %v2941 = vsel %vm1196, %v2936, %v2940
    %v2942 = vrot.slane %v2564, 4
    %v2943 = vrot.slane %v2567, 5
    %v2944 = vor.u32 %v2942, %v2943
    %v2945 = vrot.slane %v2944, 4
    %v2947 = vshll.u32 %v2782, 16
    %v2949 = vrot.slane %v2947, 5
    %v2950 = vsel %vm1196, %v2945, %v2949
    %v2951 = vrot.slane %v2577, 4
    %v2952 = vrot.slane %v2580, 5
    %v2953 = vor.u32 %v2951, %v2952
    %v2954 = vrot.slane %v2953, 4
    %v2956 = vshll.u32 %v2783, 16
    %v2958 = vrot.slane %v2956, 5
    %v2959 = vsel %vm1196, %v2954, %v2958
    %v2960 = vrot.slane %v2590, 4
    %v2961 = vrot.slane %v2593, 5
    %v2962 = vor.u32 %v2960, %v2961
    %v2963 = vrot.slane %v2962, 4
    %v2965 = vshll.u32 %v2784, 16
    %v2967 = vrot.slane %v2965, 5
    %v2968 = vsel %vm1196, %v2963, %v2967
    %v2969 = vrot.slane %v2603, 4
    %v2970 = vrot.slane %v2606, 5
    %v2971 = vor.u32 %v2969, %v2970
    %v2972 = vrot.slane %v2971, 4
    %v2974 = vshll.u32 %v2785, 16
    %v2976 = vrot.slane %v2974, 5
    %v2977 = vsel %vm1196, %v2972, %v2976
    %v2978 = vrot.slane %v2616, 4
    %v2979 = vrot.slane %v2619, 5
    %v2980 = vor.u32 %v2978, %v2979
    %v2981 = vrot.slane %v2980, 4
    %v2983 = vshll.u32 %v2786, 16
    %v2985 = vrot.slane %v2983, 5
    %v2986 = vsel %vm1196, %v2981, %v2985
    %v2987 = vrot.slane %v2629, 4
    %v2988 = vrot.slane %v2632, 5
    %v2989 = vor.u32 %v2987, %v2988
    %v2990 = vrot.slane %v2989, 4
    %v2992 = vshll.u32 %v2787, 16
    %v2994 = vrot.slane %v2992, 5
    %v2995 = vsel %vm1196, %v2990, %v2994
    %v2996 = vrot.slane %v2642, 4
    %v2997 = vrot.slane %v2645, 5
    %v2998 = vor.u32 %v2996, %v2997
    %v2999 = vrot.slane %v2998, 4
    %v3001 = vshll.u32 %v2788, 16
    %v3003 = vrot.slane %v3001, 5
    %v3004 = vsel %vm1196, %v2999, %v3003
    %v3005 = vrot.slane %v2655, 4
    %v3006 = vrot.slane %v2658, 5
    %v3007 = vor.u32 %v3005, %v3006
    %v3008 = vrot.slane %v3007, 4
    %v3010 = vshll.u32 %v2789, 16
    %v3012 = vrot.slane %v3010, 5
    %v3013 = vsel %vm1196, %v3008, %v3012
    %v3014 = vrot.slane %v2668, 4
    %v3015 = vrot.slane %v2671, 5
    %v3016 = vor.u32 %v3014, %v3015
    %v3017 = vrot.slane %v3016, 4
    %v3019 = vshll.u32 %v2790, 16
    %v3021 = vrot.slane %v3019, 5
    %v3022 = vsel %vm1196, %v3017, %v3021
    %v3023 = vrot.slane %v2681, 4
    %v3024 = vrot.slane %v2684, 5
    %v3025 = vor.u32 %v3023, %v3024
    %v3026 = vrot.slane %v3025, 4
    %v3028 = vshll.u32 %v2791, 16
    %v3030 = vrot.slane %v3028, 5
    %v3031 = vsel %vm1196, %v3026, %v3030
    %v3032 = vrot.slane %v2694, 4
    %v3033 = vrot.slane %v2697, 5
    %v3034 = vor.u32 %v3032, %v3033
    %v3035 = vrot.slane %v3034, 4
    %v3037 = vshll.u32 %v2792, 16
    %v3039 = vrot.slane %v3037, 5
    %v3040 = vsel %vm1196, %v3035, %v3039
    %v3041 = vrot.slane %v2707, 4
    %v3042 = vrot.slane %v2710, 5
    %v3043 = vor.u32 %v3041, %v3042
    %v3044 = vrot.slane %v3043, 4
    %v3046 = vshll.u32 %v2793, 16
    %v3048 = vrot.slane %v3046, 5
    %v3049 = vsel %vm1196, %v3044, %v3048
    %v3050 = vrot.slane %v2720, 4
    %v3051 = vrot.slane %v2723, 5
    %v3052 = vor.u32 %v3050, %v3051
    %v3053 = vrot.slane %v3052, 4
    %v3055 = vshll.u32 %v2794, 16
    %v3057 = vrot.slane %v3055, 5
    %v3058 = vsel %vm1196, %v3053, %v3057
    %v3059 = vrot.slane %v2733, 4
    %v3060 = vrot.slane %v2736, 5
    %v3061 = vor.u32 %v3059, %v3060
    %v3062 = vrot.slane %v3061, 4
    %v3064 = vshll.u32 %v2795, 16
    %v3066 = vrot.slane %v3064, 5
    %v3067 = vsel %vm1196, %v3062, %v3066
    %v3068 = vrot.slane %v2746, 4
    %v3069 = vrot.slane %v2749, 5
    %v3070 = vor.u32 %v3068, %v3069
    %v3071 = vrot.slane %v3070, 4
    %v3073 = vshll.u32 %v2796, 16
    %v3075 = vrot.slane %v3073, 5
    %v3076 = vsel %vm1196, %v3071, %v3075
    %v3077 = vrot.slane %v2759, 4
    %v3078 = vrot.slane %v2762, 5
    %v3079 = vor.u32 %v3077, %v3078
    %v3080 = vrot.slane %v3079, 4
    %v3082 = vshll.u32 %v2797, 16
    %v3084 = vrot.slane %v3082, 5
    %v3085 = vsel %vm1196, %v3080, %v3084
    %v3086 = vunpack.c.l.b16 %v758
    %v3087 = vunpack.c.l.b16 %v771
    %v3088 = vunpack.c.l.b16 %v784
    %v3089 = vunpack.c.l.b16 %v797
    %v3090 = vunpack.c.l.b16 %v810
    %v3091 = vunpack.c.l.b16 %v823
    %v3092 = vunpack.c.l.b16 %v836
    %v3093 = vunpack.c.l.b16 %v849
    %v3094 = vunpack.c.l.b16 %v862
    %v3095 = vunpack.c.l.b16 %v875
    %v3096 = vunpack.c.l.b16 %v888
    %v3097 = vunpack.c.l.b16 %v901
    %v3098 = vunpack.c.l.b16 %v914
    %v3099 = vunpack.c.l.b16 %v927
    %v3100 = vunpack.c.l.b16 %v940
    %v3101 = vunpack.c.l.b16 %v953
    %v3102 = vunpack.c.l.b16 %v966
    %v3103 = vunpack.c.l.b16 %v979
    %v3104 = vunpack.c.l.b16 %v992
    %v3105 = vunpack.c.l.b16 %v1005
    %v3106 = vunpack.c.l.b16 %v1018
    %v3107 = vunpack.c.l.b16 %v1031
    %v3108 = vunpack.c.l.b16 %v1044
    %v3109 = vunpack.c.l.b16 %v1057
    %v3110 = vunpack.c.l.b16 %v1070
    %v3111 = vunpack.c.l.b16 %v1083
    %v3112 = vunpack.c.l.b16 %v1096
    %v3113 = vunpack.c.l.b16 %v1109
    %v3114 = vunpack.c.l.b16 %v1122
    %v3115 = vunpack.c.l.b16 %v1135
    %v3116 = vunpack.c.l.b16 %v1148
    %v3117 = vunpack.c.l.b16 %v1161
    %v3118 = vpack.c.b16 %v3087, %v3086
    %v3119 = vpack.c.b16 %v3089, %v3088
    %v3120 = vpack.c.b16 %v3091, %v3090
    %v3121 = vpack.c.b16 %v3093, %v3092
    %v3122 = vpack.c.b16 %v3095, %v3094
    %v3123 = vpack.c.b16 %v3097, %v3096
    %v3124 = vpack.c.b16 %v3099, %v3098
    %v3125 = vpack.c.b16 %v3101, %v3100
    %v3126 = vpack.c.b16 %v3103, %v3102
    %v3127 = vpack.c.b16 %v3105, %v3104
    %v3128 = vpack.c.b16 %v3107, %v3106
    %v3129 = vpack.c.b16 %v3109, %v3108
    %v3130 = vpack.c.b16 %v3111, %v3110
    %v3131 = vpack.c.b16 %v3113, %v3112
    %v3132 = vpack.c.b16 %v3115, %v3114
    %v3133 = vpack.c.b16 %v3117, %v3116
    %v3166 = vunpack.c.l.b16 %v680
    %v3167 = vunpack.c.l.b16 %v682
    %v3168 = vunpack.c.l.b16 %v684
    %v3169 = vunpack.c.l.b16 %v686
    %v3170 = vunpack.c.l.b16 %v688
    %v3171 = vunpack.c.l.b16 %v690
    %v3172 = vunpack.c.l.b16 %v692
    %v3173 = vunpack.c.l.b16 %v694
    %v3174 = vunpack.c.l.b16 %v696
    %v3175 = vunpack.c.l.b16 %v698
    %v3176 = vunpack.c.l.b16 %v700
    %v3177 = vunpack.c.l.b16 %v702
    %v3178 = vunpack.c.l.b16 %v704
    %v3179 = vunpack.c.l.b16 %v706
    %v3180 = vunpack.c.l.b16 %v708
    %v3181 = vunpack.c.l.b16 %v710
    %v3182 = vunpack.c.l.b16 %v712
    %v3183 = vunpack.c.l.b16 %v714
    %v3184 = vunpack.c.l.b16 %v716
    %v3185 = vunpack.c.l.b16 %v718
    %v3186 = vunpack.c.l.b16 %v720
    %v3187 = vunpack.c.l.b16 %v722
    %v3188 = vunpack.c.l.b16 %v724
    %v3189 = vunpack.c.l.b16 %v726
    %v3190 = vunpack.c.l.b16 %v728
    %v3191 = vunpack.c.l.b16 %v730
    %v3192 = vunpack.c.l.b16 %v732
    %v3193 = vunpack.c.l.b16 %v734
    %v3194 = vunpack.c.l.b16 %v736
    %v3195 = vunpack.c.l.b16 %v738
    %v3196 = vunpack.c.l.b16 %v740
    %v3197 = vunpack.c.l.b16 %v742
    %v3198 = vpack.c.b16 %v3167, %v3166
    %v3199 = vpack.c.b16 %v3169, %v3168
    %v3200 = vpack.c.b16 %v3171, %v3170
    %v3201 = vpack.c.b16 %v3173, %v3172
    %v3202 = vpack.c.b16 %v3175, %v3174
    %v3203 = vpack.c.b16 %v3177, %v3176
    %v3204 = vpack.c.b16 %v3179, %v3178
    %v3205 = vpack.c.b16 %v3181, %v3180
    %v3206 = vpack.c.b16 %v3183, %v3182
    %v3207 = vpack.c.b16 %v3185, %v3184
    %v3208 = vpack.c.b16 %v3187, %v3186
    %v3209 = vpack.c.b16 %v3189, %v3188
    %v3210 = vpack.c.b16 %v3191, %v3190
    %v3211 = vpack.c.b16 %v3193, %v3192
    %v3212 = vpack.c.b16 %v3195, %v3194
    %v3213 = vpack.c.b16 %v3197, %v3196
    %3214 = vrot.lane.b32.xlu0 %v3198, 16
    %v3215 = vpop.permute.xlu0 %3214
    %3216 = vrot.lane.b32.xlu0 %v3199, 16
    %v3217 = vpop.permute.xlu0 %3216
    %3218 = vrot.lane.b32.xlu0 %v3200, 16
    %v3219 = vpop.permute.xlu0 %3218
    %3220 = vrot.lane.b32.xlu0 %v3201, 16
    %v3221 = vpop.permute.xlu0 %3220
    %3222 = vrot.lane.b32.xlu0 %v3202, 16
    %v3223 = vpop.permute.xlu0 %3222
    %3224 = vrot.lane.b32.xlu0 %v3203, 16
    %v3225 = vpop.permute.xlu0 %3224
    %3226 = vrot.lane.b32.xlu0 %v3204, 16
    %v3227 = vpop.permute.xlu0 %3226
    %3228 = vrot.lane.b32.xlu0 %v3205, 16
    %v3229 = vpop.permute.xlu0 %3228
    %3230 = vrot.lane.b32.xlu0 %v3206, 16
    %v3231 = vpop.permute.xlu0 %3230
    %3232 = vrot.lane.b32.xlu0 %v3207, 16
    %v3233 = vpop.permute.xlu0 %3232
    %3234 = vrot.lane.b32.xlu0 %v3208, 16
    %v3235 = vpop.permute.xlu0 %3234
    %3236 = vrot.lane.b32.xlu0 %v3209, 16
    %v3237 = vpop.permute.xlu0 %3236
    %3238 = vrot.lane.b32.xlu0 %v3210, 16
    %v3239 = vpop.permute.xlu0 %3238
    %3240 = vrot.lane.b32.xlu0 %v3211, 16
    %v3241 = vpop.permute.xlu0 %3240
    %3242 = vrot.lane.b32.xlu0 %v3212, 16
    %v3243 = vpop.permute.xlu0 %3242
    %3244 = vrot.lane.b32.xlu0 %v3213, 16
    %v3245 = vpop.permute.xlu0 %3244
    %v3246 = vunpack.c.l.b16 %v1205
    %v3247 = vunpack.c.l.b16 %v1214
    %v3248 = vunpack.c.l.b16 %v1223
    %v3249 = vunpack.c.l.b16 %v1232
    %v3250 = vunpack.c.l.b16 %v1241
    %v3251 = vunpack.c.l.b16 %v1250
    %v3252 = vunpack.c.l.b16 %v1259
    %v3253 = vunpack.c.l.b16 %v1268
    %v3254 = vunpack.c.l.b16 %v1277
    %v3255 = vunpack.c.l.b16 %v1286
    %v3256 = vunpack.c.l.b16 %v1295
    %v3257 = vunpack.c.l.b16 %v1304
    %v3258 = vunpack.c.l.b16 %v1313
    %v3259 = vunpack.c.l.b16 %v1322
    %v3260 = vunpack.c.l.b16 %v1331
    %v3261 = vunpack.c.l.b16 %v1340
    %v3262 = vunpack.c.l.b16 %v1349
    %v3263 = vunpack.c.l.b16 %v1358
    %v3264 = vunpack.c.l.b16 %v1367
    %v3265 = vunpack.c.l.b16 %v1376
    %v3266 = vunpack.c.l.b16 %v1385
    %v3267 = vunpack.c.l.b16 %v1394
    %v3268 = vunpack.c.l.b16 %v1403
    %v3269 = vunpack.c.l.b16 %v1412
    %v3270 = vunpack.c.l.b16 %v1421
    %v3271 = vunpack.c.l.b16 %v1430
    %v3272 = vunpack.c.l.b16 %v1439
    %v3273 = vunpack.c.l.b16 %v1448
    %v3274 = vunpack.c.l.b16 %v1457
    %v3275 = vunpack.c.l.b16 %v1466
    %v3276 = vunpack.c.l.b16 %v1475
    %v3277 = vunpack.c.l.b16 %v1484
    %v3278 = vpack.c.b16 %v3247, %v3246
    %v3279 = vpack.c.b16 %v3249, %v3248
    %v3280 = vpack.c.b16 %v3251, %v3250
    %v3281 = vpack.c.b16 %v3253, %v3252
    %v3282 = vpack.c.b16 %v3255, %v3254
    %v3283 = vpack.c.b16 %v3257, %v3256
    %v3284 = vpack.c.b16 %v3259, %v3258
    %v3285 = vpack.c.b16 %v3261, %v3260
    %v3286 = vpack.c.b16 %v3263, %v3262
    %v3287 = vpack.c.b16 %v3265, %v3264
    %v3288 = vpack.c.b16 %v3267, %v3266
    %v3289 = vpack.c.b16 %v3269, %v3268
    %v3290 = vpack.c.b16 %v3271, %v3270
    %v3291 = vpack.c.b16 %v3273, %v3272
    %v3292 = vpack.c.b16 %v3275, %v3274
    %v3293 = vpack.c.b16 %v3277, %v3276
    %3294 = vrot.lane.b32.xlu0 %v3278, 32
    %v3295 = vpop.permute.xlu0 %3294
    %3296 = vrot.lane.b32.xlu0 %v3279, 32
    %v3297 = vpop.permute.xlu0 %3296
    %3298 = vrot.lane.b32.xlu0 %v3280, 32
    %v3299 = vpop.permute.xlu0 %3298
    %3300 = vrot.lane.b32.xlu0 %v3281, 32
    %v3301 = vpop.permute.xlu0 %3300
    %3302 = vrot.lane.b32.xlu0 %v3282, 32
    %v3303 = vpop.permute.xlu0 %3302
    %3304 = vrot.lane.b32.xlu0 %v3283, 32
    %v3305 = vpop.permute.xlu0 %3304
    %3306 = vrot.lane.b32.xlu0 %v3284, 32
    %v3307 = vpop.permute.xlu0 %3306
    %3308 = vrot.lane.b32.xlu0 %v3285, 32
    %v3309 = vpop.permute.xlu0 %3308
    %3310 = vrot.lane.b32.xlu0 %v3286, 32
    %v3311 = vpop.permute.xlu0 %3310
    %3312 = vrot.lane.b32.xlu0 %v3287, 32
    %v3313 = vpop.permute.xlu0 %3312
    %3314 = vrot.lane.b32.xlu0 %v3288, 32
    %v3315 = vpop.permute.xlu0 %3314
    %3316 = vrot.lane.b32.xlu0 %v3289, 32
    %v3317 = vpop.permute.xlu0 %3316
    %3318 = vrot.lane.b32.xlu0 %v3290, 32
    %v3319 = vpop.permute.xlu0 %3318
    %3320 = vrot.lane.b32.xlu0 %v3291, 32
    %v3321 = vpop.permute.xlu0 %3320
    %3322 = vrot.lane.b32.xlu0 %v3292, 32
    %v3323 = vpop.permute.xlu0 %3322
    %3324 = vrot.lane.b32.xlu0 %v3293, 32
    %v3325 = vpop.permute.xlu0 %3324
    %v3326 = vunpack.c.l.b16 %v1561
    %v3327 = vunpack.c.l.b16 %v1574
    %v3328 = vunpack.c.l.b16 %v1587
    %v3329 = vunpack.c.l.b16 %v1600
    %v3330 = vunpack.c.l.b16 %v1613
    %v3331 = vunpack.c.l.b16 %v1626
    %v3332 = vunpack.c.l.b16 %v1639
    %v3333 = vunpack.c.l.b16 %v1652
    %v3334 = vunpack.c.l.b16 %v1665
    %v3335 = vunpack.c.l.b16 %v1678
    %v3336 = vunpack.c.l.b16 %v1691
    %v3337 = vunpack.c.l.b16 %v1704
    %v3338 = vunpack.c.l.b16 %v1717
    %v3339 = vunpack.c.l.b16 %v1730
    %v3340 = vunpack.c.l.b16 %v1743
    %v3341 = vunpack.c.l.b16 %v1756
    %v3342 = vunpack.c.l.b16 %v1769
    %v3343 = vunpack.c.l.b16 %v1782
    %v3344 = vunpack.c.l.b16 %v1795
    %v3345 = vunpack.c.l.b16 %v1808
    %v3346 = vunpack.c.l.b16 %v1821
    %v3347 = vunpack.c.l.b16 %v1834
    %v3348 = vunpack.c.l.b16 %v1847
    %v3349 = vunpack.c.l.b16 %v1860
    %v3350 = vunpack.c.l.b16 %v1873
    %v3351 = vunpack.c.l.b16 %v1886
    %v3352 = vunpack.c.l.b16 %v1899
    %v3353 = vunpack.c.l.b16 %v1912
    %v3354 = vunpack.c.l.b16 %v1925
    %v3355 = vunpack.c.l.b16 %v1938
    %v3356 = vunpack.c.l.b16 %v1951
    %v3357 = vunpack.c.l.b16 %v1964
    %v3358 = vpack.c.b16 %v3327, %v3326
    %v3359 = vpack.c.b16 %v3329, %v3328
    %v3360 = vpack.c.b16 %v3331, %v3330
    %v3361 = vpack.c.b16 %v3333, %v3332
    %v3362 = vpack.c.b16 %v3335, %v3334
    %v3363 = vpack.c.b16 %v3337, %v3336
    %v3364 = vpack.c.b16 %v3339, %v3338
    %v3365 = vpack.c.b16 %v3341, %v3340
    %v3366 = vpack.c.b16 %v3343, %v3342
    %v3367 = vpack.c.b16 %v3345, %v3344
    %v3368 = vpack.c.b16 %v3347, %v3346
    %v3369 = vpack.c.b16 %v3349, %v3348
    %v3370 = vpack.c.b16 %v3351, %v3350
    %v3371 = vpack.c.b16 %v3353, %v3352
    %v3372 = vpack.c.b16 %v3355, %v3354
    %v3373 = vpack.c.b16 %v3357, %v3356
    %3374 = vrot.lane.b32.xlu0 %v3358, 48
    %v3375 = vpop.permute.xlu0 %3374
    %3376 = vrot.lane.b32.xlu0 %v3359, 48
    %v3377 = vpop.permute.xlu0 %3376
    %3378 = vrot.lane.b32.xlu0 %v3360, 48
    %v3379 = vpop.permute.xlu0 %3378
    %3380 = vrot.lane.b32.xlu0 %v3361, 48
    %v3381 = vpop.permute.xlu0 %3380
    %3382 = vrot.lane.b32.xlu0 %v3362, 48
    %v3383 = vpop.permute.xlu0 %3382
    %3384 = vrot.lane.b32.xlu0 %v3363, 48
    %v3385 = vpop.permute.xlu0 %3384
    %3386 = vrot.lane.b32.xlu0 %v3364, 48
    %v3387 = vpop.permute.xlu0 %3386
    %3388 = vrot.lane.b32.xlu0 %v3365, 48
    %v3389 = vpop.permute.xlu0 %3388
    %3390 = vrot.lane.b32.xlu0 %v3366, 48
    %v3391 = vpop.permute.xlu0 %3390
    %3392 = vrot.lane.b32.xlu0 %v3367, 48
    %v3393 = vpop.permute.xlu0 %3392
    %3394 = vrot.lane.b32.xlu0 %v3368, 48
    %v3395 = vpop.permute.xlu0 %3394
    %3396 = vrot.lane.b32.xlu0 %v3369, 48
    %v3397 = vpop.permute.xlu0 %3396
    %3398 = vrot.lane.b32.xlu0 %v3370, 48
    %v3399 = vpop.permute.xlu0 %3398
    %3400 = vrot.lane.b32.xlu0 %v3371, 48
    %v3401 = vpop.permute.xlu0 %3400
    %3402 = vrot.lane.b32.xlu0 %v3372, 48
    %v3403 = vpop.permute.xlu0 %3402
    %3404 = vrot.lane.b32.xlu0 %v3373, 48
    %v3405 = vpop.permute.xlu0 %3404
    %v3438 = vunpack.c.l.b16 %v1486
    %v3439 = vunpack.c.l.b16 %v1488
    %v3440 = vunpack.c.l.b16 %v1490
    %v3441 = vunpack.c.l.b16 %v1492
    %v3442 = vunpack.c.l.b16 %v1494
    %v3443 = vunpack.c.l.b16 %v1496
    %v3444 = vunpack.c.l.b16 %v1498
    %v3445 = vunpack.c.l.b16 %v1500
    %v3446 = vunpack.c.l.b16 %v1502
    %v3447 = vunpack.c.l.b16 %v1504
    %v3448 = vunpack.c.l.b16 %v1506
    %v3449 = vunpack.c.l.b16 %v1508
    %v3450 = vunpack.c.l.b16 %v1510
    %v3451 = vunpack.c.l.b16 %v1512
    %v3452 = vunpack.c.l.b16 %v1514
    %v3453 = vunpack.c.l.b16 %v1516
    %v3454 = vunpack.c.l.b16 %v1518
    %v3455 = vunpack.c.l.b16 %v1520
    %v3456 = vunpack.c.l.b16 %v1522
    %v3457 = vunpack.c.l.b16 %v1524
    %v3458 = vunpack.c.l.b16 %v1526
    %v3459 = vunpack.c.l.b16 %v1528
    %v3460 = vunpack.c.l.b16 %v1530
    %v3461 = vunpack.c.l.b16 %v1532
    %v3462 = vunpack.c.l.b16 %v1534
    %v3463 = vunpack.c.l.b16 %v1536
    %v3464 = vunpack.c.l.b16 %v1538
    %v3465 = vunpack.c.l.b16 %v1540
    %v3466 = vunpack.c.l.b16 %v1542
    %v3467 = vunpack.c.l.b16 %v1544
    %v3468 = vunpack.c.l.b16 %v1546
    %v3469 = vunpack.c.l.b16 %v1548
    %v3470 = vpack.c.b16 %v3439, %v3438
    %v3471 = vpack.c.b16 %v3441, %v3440
    %v3472 = vpack.c.b16 %v3443, %v3442
    %v3473 = vpack.c.b16 %v3445, %v3444
    %v3474 = vpack.c.b16 %v3447, %v3446
    %v3475 = vpack.c.b16 %v3449, %v3448
    %v3476 = vpack.c.b16 %v3451, %v3450
    %v3477 = vpack.c.b16 %v3453, %v3452
    %v3478 = vpack.c.b16 %v3455, %v3454
    %v3479 = vpack.c.b16 %v3457, %v3456
    %v3480 = vpack.c.b16 %v3459, %v3458
    %v3481 = vpack.c.b16 %v3461, %v3460
    %v3482 = vpack.c.b16 %v3463, %v3462
    %v3483 = vpack.c.b16 %v3465, %v3464
    %v3484 = vpack.c.b16 %v3467, %v3466
    %v3485 = vpack.c.b16 %v3469, %v3468
    %3486 = vrot.lane.b32.xlu0 %v3470, 64
    %v3487 = vpop.permute.xlu0 %3486
    %3488 = vrot.lane.b32.xlu0 %v3471, 64
    %v3489 = vpop.permute.xlu0 %3488
    %3490 = vrot.lane.b32.xlu0 %v3472, 64
    %v3491 = vpop.permute.xlu0 %3490
    %3492 = vrot.lane.b32.xlu0 %v3473, 64
    %v3493 = vpop.permute.xlu0 %3492
    %3494 = vrot.lane.b32.xlu0 %v3474, 64
    %v3495 = vpop.permute.xlu0 %3494
    %3496 = vrot.lane.b32.xlu0 %v3475, 64
    %v3497 = vpop.permute.xlu0 %3496
    %3498 = vrot.lane.b32.xlu0 %v3476, 64
    %v3499 = vpop.permute.xlu0 %3498
    %3500 = vrot.lane.b32.xlu0 %v3477, 64
    %v3501 = vpop.permute.xlu0 %3500
    %3502 = vrot.lane.b32.xlu0 %v3478, 64
    %v3503 = vpop.permute.xlu0 %3502
    %3504 = vrot.lane.b32.xlu0 %v3479, 64
    %v3505 = vpop.permute.xlu0 %3504
    %3506 = vrot.lane.b32.xlu0 %v3480, 64
    %v3507 = vpop.permute.xlu0 %3506
    %3508 = vrot.lane.b32.xlu0 %v3481, 64
    %v3509 = vpop.permute.xlu0 %3508
    %3510 = vrot.lane.b32.xlu0 %v3482, 64
    %v3511 = vpop.permute.xlu0 %3510
    %3512 = vrot.lane.b32.xlu0 %v3483, 64
    %v3513 = vpop.permute.xlu0 %3512
    %3514 = vrot.lane.b32.xlu0 %v3484, 64
    %v3515 = vpop.permute.xlu0 %3514
    %3516 = vrot.lane.b32.xlu0 %v3485, 64
    %v3517 = vpop.permute.xlu0 %3516
    %v3518 = vunpack.c.l.b16 %v2005
    %v3519 = vunpack.c.l.b16 %v2014
    %v3520 = vunpack.c.l.b16 %v2023
    %v3521 = vunpack.c.l.b16 %v2032
    %v3522 = vunpack.c.l.b16 %v2041
    %v3523 = vunpack.c.l.b16 %v2050
    %v3524 = vunpack.c.l.b16 %v2059
    %v3525 = vunpack.c.l.b16 %v2068
    %v3526 = vunpack.c.l.b16 %v2077
    %v3527 = vunpack.c.l.b16 %v2086
    %v3528 = vunpack.c.l.b16 %v2095
    %v3529 = vunpack.c.l.b16 %v2104
    %v3530 = vunpack.c.l.b16 %v2113
    %v3531 = vunpack.c.l.b16 %v2122
    %v3532 = vunpack.c.l.b16 %v2131
    %v3533 = vunpack.c.l.b16 %v2140
    %v3534 = vunpack.c.l.b16 %v2149
    %v3535 = vunpack.c.l.b16 %v2158
    %v3536 = vunpack.c.l.b16 %v2167
    %v3537 = vunpack.c.l.b16 %v2176
    %v3538 = vunpack.c.l.b16 %v2185
    %v3539 = vunpack.c.l.b16 %v2194
    %v3540 = vunpack.c.l.b16 %v2203
    %v3541 = vunpack.c.l.b16 %v2212
    %v3542 = vunpack.c.l.b16 %v2221
    %v3543 = vunpack.c.l.b16 %v2230
    %v3544 = vunpack.c.l.b16 %v2239
    %v3545 = vunpack.c.l.b16 %v2248
    %v3546 = vunpack.c.l.b16 %v2257
    %v3547 = vunpack.c.l.b16 %v2266
    %v3548 = vunpack.c.l.b16 %v2275
    %v3549 = vunpack.c.l.b16 %v2284
    %v3550 = vpack.c.b16 %v3519, %v3518
    %v3551 = vpack.c.b16 %v3521, %v3520
    %v3552 = vpack.c.b16 %v3523, %v3522
    %v3553 = vpack.c.b16 %v3525, %v3524
    %v3554 = vpack.c.b16 %v3527, %v3526
    %v3555 = vpack.c.b16 %v3529, %v3528
    %v3556 = vpack.c.b16 %v3531, %v3530
    %v3557 = vpack.c.b16 %v3533, %v3532
    %v3558 = vpack.c.b16 %v3535, %v3534
    %v3559 = vpack.c.b16 %v3537, %v3536
    %v3560 = vpack.c.b16 %v3539, %v3538
    %v3561 = vpack.c.b16 %v3541, %v3540
    %v3562 = vpack.c.b16 %v3543, %v3542
    %v3563 = vpack.c.b16 %v3545, %v3544
    %v3564 = vpack.c.b16 %v3547, %v3546
    %v3565 = vpack.c.b16 %v3549, %v3548
    %3566 = vrot.lane.b32.xlu0 %v3550, 80
    %v3567 = vpop.permute.xlu0 %3566
    %3568 = vrot.lane.b32.xlu0 %v3551, 80
    %v3569 = vpop.permute.xlu0 %3568
    %3570 = vrot.lane.b32.xlu0 %v3552, 80
    %v3571 = vpop.permute.xlu0 %3570
    %3572 = vrot.lane.b32.xlu0 %v3553, 80
    %v3573 = vpop.permute.xlu0 %3572
    %3574 = vrot.lane.b32.xlu0 %v3554, 80
    %v3575 = vpop.permute.xlu0 %3574
    %3576 = vrot.lane.b32.xlu0 %v3555, 80
    %v3577 = vpop.permute.xlu0 %3576
    %3578 = vrot.lane.b32.xlu0 %v3556, 80
    %v3579 = vpop.permute.xlu0 %3578
    %3580 = vrot.lane.b32.xlu0 %v3557, 80
    %v3581 = vpop.permute.xlu0 %3580
    %3582 = vrot.lane.b32.xlu0 %v3558, 80
    %v3583 = vpop.permute.xlu0 %3582
    %3584 = vrot.lane.b32.xlu0 %v3559, 80
    %v3585 = vpop.permute.xlu0 %3584
    %3586 = vrot.lane.b32.xlu0 %v3560, 80
    %v3587 = vpop.permute.xlu0 %3586
    %3588 = vrot.lane.b32.xlu0 %v3561, 80
    %v3589 = vpop.permute.xlu0 %3588
    %3590 = vrot.lane.b32.xlu0 %v3562, 80
    %v3591 = vpop.permute.xlu0 %3590
    %3592 = vrot.lane.b32.xlu0 %v3563, 80
    %v3593 = vpop.permute.xlu0 %3592
    %3594 = vrot.lane.b32.xlu0 %v3564, 80
    %v3595 = vpop.permute.xlu0 %3594
    %3596 = vrot.lane.b32.xlu0 %v3565, 80
    %v3597 = vpop.permute.xlu0 %3596
    %v3598 = vunpack.c.l.b16 %v2362
    %v3599 = vunpack.c.l.b16 %v2375
    %v3600 = vunpack.c.l.b16 %v2388
    %v3601 = vunpack.c.l.b16 %v2401
    %v3602 = vunpack.c.l.b16 %v2414
    %v3603 = vunpack.c.l.b16 %v2427
    %v3604 = vunpack.c.l.b16 %v2440
    %v3605 = vunpack.c.l.b16 %v2453
    %v3606 = vunpack.c.l.b16 %v2466
    %v3607 = vunpack.c.l.b16 %v2479
    %v3608 = vunpack.c.l.b16 %v2492
    %v3609 = vunpack.c.l.b16 %v2505
    %v3610 = vunpack.c.l.b16 %v2518
    %v3611 = vunpack.c.l.b16 %v2531
    %v3612 = vunpack.c.l.b16 %v2544
    %v3613 = vunpack.c.l.b16 %v2557
    %v3614 = vunpack.c.l.b16 %v2570
    %v3615 = vunpack.c.l.b16 %v2583
    %v3616 = vunpack.c.l.b16 %v2596
    %v3617 = vunpack.c.l.b16 %v2609
    %v3618 = vunpack.c.l.b16 %v2622
    %v3619 = vunpack.c.l.b16 %v2635
    %v3620 = vunpack.c.l.b16 %v2648
    %v3621 = vunpack.c.l.b16 %v2661
    %v3622 = vunpack.c.l.b16 %v2674
    %v3623 = vunpack.c.l.b16 %v2687
    %v3624 = vunpack.c.l.b16 %v2700
    %v3625 = vunpack.c.l.b16 %v2713
    %v3626 = vunpack.c.l.b16 %v2726
    %v3627 = vunpack.c.l.b16 %v2739
    %v3628 = vunpack.c.l.b16 %v2752
    %v3629 = vunpack.c.l.b16 %v2765
    %v3630 = vpack.c.b16 %v3599, %v3598
    %v3631 = vpack.c.b16 %v3601, %v3600
    %v3632 = vpack.c.b16 %v3603, %v3602
    %v3633 = vpack.c.b16 %v3605, %v3604
    %v3634 = vpack.c.b16 %v3607, %v3606
    %v3635 = vpack.c.b16 %v3609, %v3608
    %v3636 = vpack.c.b16 %v3611, %v3610
    %v3637 = vpack.c.b16 %v3613, %v3612
    %v3638 = vpack.c.b16 %v3615, %v3614
    %v3639 = vpack.c.b16 %v3617, %v3616
    %v3640 = vpack.c.b16 %v3619, %v3618
    %v3641 = vpack.c.b16 %v3621, %v3620
    %v3642 = vpack.c.b16 %v3623, %v3622
    %v3643 = vpack.c.b16 %v3625, %v3624
    %v3644 = vpack.c.b16 %v3627, %v3626
    %v3645 = vpack.c.b16 %v3629, %v3628
    %3646 = vrot.lane.b32.xlu0 %v3630, 96
    %v3647 = vpop.permute.xlu0 %3646
    %3648 = vrot.lane.b32.xlu0 %v3631, 96
    %v3649 = vpop.permute.xlu0 %3648
    %3650 = vrot.lane.b32.xlu0 %v3632, 96
    %v3651 = vpop.permute.xlu0 %3650
    %3652 = vrot.lane.b32.xlu0 %v3633, 96
    %v3653 = vpop.permute.xlu0 %3652
    %3654 = vrot.lane.b32.xlu0 %v3634, 96
    %v3655 = vpop.permute.xlu0 %3654
    %3656 = vrot.lane.b32.xlu0 %v3635, 96
    %v3657 = vpop.permute.xlu0 %3656
    %3658 = vrot.lane.b32.xlu0 %v3636, 96
    %v3659 = vpop.permute.xlu0 %3658
    %3660 = vrot.lane.b32.xlu0 %v3637, 96
    %v3661 = vpop.permute.xlu0 %3660
    %3662 = vrot.lane.b32.xlu0 %v3638, 96
    %v3663 = vpop.permute.xlu0 %3662
    %3664 = vrot.lane.b32.xlu0 %v3639, 96
    %v3665 = vpop.permute.xlu0 %3664
    %3666 = vrot.lane.b32.xlu0 %v3640, 96
    %v3667 = vpop.permute.xlu0 %3666
    %3668 = vrot.lane.b32.xlu0 %v3641, 96
    %v3669 = vpop.permute.xlu0 %3668
    %3670 = vrot.lane.b32.xlu0 %v3642, 96
    %v3671 = vpop.permute.xlu0 %3670
    %3672 = vrot.lane.b32.xlu0 %v3643, 96
    %v3673 = vpop.permute.xlu0 %3672
    %3674 = vrot.lane.b32.xlu0 %v3644, 96
    %v3675 = vpop.permute.xlu0 %3674
    %3676 = vrot.lane.b32.xlu0 %v3645, 96
    %v3677 = vpop.permute.xlu0 %3676
    %v3710 = vunpack.c.l.b16 %v2287
    %v3711 = vunpack.c.l.b16 %v2289
    %v3712 = vunpack.c.l.b16 %v2291
    %v3713 = vunpack.c.l.b16 %v2293
    %v3714 = vunpack.c.l.b16 %v2295
    %v3715 = vunpack.c.l.b16 %v2297
    %v3716 = vunpack.c.l.b16 %v2299
    %v3717 = vunpack.c.l.b16 %v2301
    %v3718 = vunpack.c.l.b16 %v2303
    %v3719 = vunpack.c.l.b16 %v2305
    %v3720 = vunpack.c.l.b16 %v2307
    %v3721 = vunpack.c.l.b16 %v2309
    %v3722 = vunpack.c.l.b16 %v2311
    %v3723 = vunpack.c.l.b16 %v2313
    %v3724 = vunpack.c.l.b16 %v2315
    %v3725 = vunpack.c.l.b16 %v2317
    %v3726 = vunpack.c.l.b16 %v2319
    %v3727 = vunpack.c.l.b16 %v2321
    %v3728 = vunpack.c.l.b16 %v2323
    %v3729 = vunpack.c.l.b16 %v2325
    %v3730 = vunpack.c.l.b16 %v2327
    %v3731 = vunpack.c.l.b16 %v2329
    %v3732 = vunpack.c.l.b16 %v2331
    %v3733 = vunpack.c.l.b16 %v2333
    %v3734 = vunpack.c.l.b16 %v2335
    %v3735 = vunpack.c.l.b16 %v2337
    %v3736 = vunpack.c.l.b16 %v2339
    %v3737 = vunpack.c.l.b16 %v2341
    %v3738 = vunpack.c.l.b16 %v2343
    %v3739 = vunpack.c.l.b16 %v2345
    %v3740 = vunpack.c.l.b16 %v2347
    %v3741 = vunpack.c.l.b16 %v2349
    %v3742 = vpack.c.b16 %v3711, %v3710
    %v3743 = vpack.c.b16 %v3713, %v3712
    %v3744 = vpack.c.b16 %v3715, %v3714
    %v3745 = vpack.c.b16 %v3717, %v3716
    %v3746 = vpack.c.b16 %v3719, %v3718
    %v3747 = vpack.c.b16 %v3721, %v3720
    %v3748 = vpack.c.b16 %v3723, %v3722
    %v3749 = vpack.c.b16 %v3725, %v3724
    %v3750 = vpack.c.b16 %v3727, %v3726
    %v3751 = vpack.c.b16 %v3729, %v3728
    %v3752 = vpack.c.b16 %v3731, %v3730
    %v3753 = vpack.c.b16 %v3733, %v3732
    %v3754 = vpack.c.b16 %v3735, %v3734
    %v3755 = vpack.c.b16 %v3737, %v3736
    %v3756 = vpack.c.b16 %v3739, %v3738
    %v3757 = vpack.c.b16 %v3741, %v3740
    %3758 = vrot.lane.b32.xlu0 %v3742, 112
    %v3759 = vpop.permute.xlu0 %3758
    %3760 = vrot.lane.b32.xlu0 %v3743, 112
    %v3761 = vpop.permute.xlu0 %3760
    %3762 = vrot.lane.b32.xlu0 %v3744, 112
    %v3763 = vpop.permute.xlu0 %3762
    %3764 = vrot.lane.b32.xlu0 %v3745, 112
    %v3765 = vpop.permute.xlu0 %3764
    %3766 = vrot.lane.b32.xlu0 %v3746, 112
    %v3767 = vpop.permute.xlu0 %3766
    %3768 = vrot.lane.b32.xlu0 %v3747, 112
    %v3769 = vpop.permute.xlu0 %3768
    %3770 = vrot.lane.b32.xlu0 %v3748, 112
    %v3771 = vpop.permute.xlu0 %3770
    %3772 = vrot.lane.b32.xlu0 %v3749, 112
    %v3773 = vpop.permute.xlu0 %3772
    %3774 = vrot.lane.b32.xlu0 %v3750, 112
    %v3775 = vpop.permute.xlu0 %3774
    %3776 = vrot.lane.b32.xlu0 %v3751, 112
    %v3777 = vpop.permute.xlu0 %3776
    %3778 = vrot.lane.b32.xlu0 %v3752, 112
    %v3779 = vpop.permute.xlu0 %3778
    %3780 = vrot.lane.b32.xlu0 %v3753, 112
    %v3781 = vpop.permute.xlu0 %3780
    %3782 = vrot.lane.b32.xlu0 %v3754, 112
    %v3783 = vpop.permute.xlu0 %3782
    %3784 = vrot.lane.b32.xlu0 %v3755, 112
    %v3785 = vpop.permute.xlu0 %3784
    %3786 = vrot.lane.b32.xlu0 %v3756, 112
    %v3787 = vpop.permute.xlu0 %3786
    %3788 = vrot.lane.b32.xlu0 %v3757, 112
    %v3789 = vpop.permute.xlu0 %3788
    %v3790 = vunpack.c.l.b16 %v2806
    %v3791 = vunpack.c.l.b16 %v2815
    %v3792 = vunpack.c.l.b16 %v2824
    %v3793 = vunpack.c.l.b16 %v2833
    %v3794 = vunpack.c.l.b16 %v2842
    %v3795 = vunpack.c.l.b16 %v2851
    %v3796 = vunpack.c.l.b16 %v2860
    %v3797 = vunpack.c.l.b16 %v2869
    %v3798 = vunpack.c.l.b16 %v2878
    %v3799 = vunpack.c.l.b16 %v2887
    %v3800 = vunpack.c.l.b16 %v2896
    %v3801 = vunpack.c.l.b16 %v2905
    %v3802 = vunpack.c.l.b16 %v2914
    %v3803 = vunpack.c.l.b16 %v2923
    %v3804 = vunpack.c.l.b16 %v2932
    %v3805 = vunpack.c.l.b16 %v2941
    %v3806 = vunpack.c.l.b16 %v2950
    %v3807 = vunpack.c.l.b16 %v2959
    %v3808 = vunpack.c.l.b16 %v2968
    %v3809 = vunpack.c.l.b16 %v2977
    %v3810 = vunpack.c.l.b16 %v2986
    %v3811 = vunpack.c.l.b16 %v2995
    %v3812 = vunpack.c.l.b16 %v3004
    %v3813 = vunpack.c.l.b16 %v3013
    %v3814 = vunpack.c.l.b16 %v3022
    %v3815 = vunpack.c.l.b16 %v3031
    %v3816 = vunpack.c.l.b16 %v3040
    %v3817 = vunpack.c.l.b16 %v3049
    %v3818 = vunpack.c.l.b16 %v3058
    %v3819 = vunpack.c.l.b16 %v3067
    %v3820 = vunpack.c.l.b16 %v3076
    %v3821 = vunpack.c.l.b16 %v3085
    %v3822 = vpack.c.b16 %v3791, %v3790
    %v3823 = vpack.c.b16 %v3793, %v3792
    %v3824 = vpack.c.b16 %v3795, %v3794
    %v3825 = vpack.c.b16 %v3797, %v3796
    %v3826 = vpack.c.b16 %v3799, %v3798
    %v3827 = vpack.c.b16 %v3801, %v3800
    %v3828 = vpack.c.b16 %v3803, %v3802
    %v3829 = vpack.c.b16 %v3805, %v3804
    %v3830 = vpack.c.b16 %v3807, %v3806
    %v3831 = vpack.c.b16 %v3809, %v3808
    %v3832 = vpack.c.b16 %v3811, %v3810
    %v3833 = vpack.c.b16 %v3813, %v3812
    %v3834 = vpack.c.b16 %v3815, %v3814
    %v3835 = vpack.c.b16 %v3817, %v3816
    %v3836 = vpack.c.b16 %v3819, %v3818
    %v3837 = vpack.c.b16 %v3821, %v3820
    %vm3838 = vcmask 130048
    %v3841 = vsel %vm3838, %v3118, %v3215
    %v3844 = vsel %vm3838, %v3119, %v3217
    %v3847 = vsel %vm3838, %v3120, %v3219
    %v3850 = vsel %vm3838, %v3121, %v3221
    %v3853 = vsel %vm3838, %v3122, %v3223
    %v3856 = vsel %vm3838, %v3123, %v3225
    %v3859 = vsel %vm3838, %v3124, %v3227
    %v3862 = vsel %vm3838, %v3125, %v3229
    %v3865 = vsel %vm3838, %v3126, %v3231
    %v3868 = vsel %vm3838, %v3127, %v3233
    %v3871 = vsel %vm3838, %v3128, %v3235
    %v3874 = vsel %vm3838, %v3129, %v3237
    %v3877 = vsel %vm3838, %v3130, %v3239
    %v3880 = vsel %vm3838, %v3131, %v3241
    %v3883 = vsel %vm3838, %v3132, %v3243
    %v3886 = vsel %vm3838, %v3133, %v3245
    %v3888 = vsel %vm371, %v3841, %v3295
    %v3890 = vsel %vm371, %v3844, %v3297
    %v3892 = vsel %vm371, %v3847, %v3299
    %v3894 = vsel %vm371, %v3850, %v3301
    %v3896 = vsel %vm371, %v3853, %v3303
    %v3898 = vsel %vm371, %v3856, %v3305
    %v3900 = vsel %vm371, %v3859, %v3307
    %v3902 = vsel %vm371, %v3862, %v3309
    %v3904 = vsel %vm371, %v3865, %v3311
    %v3906 = vsel %vm371, %v3868, %v3313
    %v3908 = vsel %vm371, %v3871, %v3315
    %v3910 = vsel %vm371, %v3874, %v3317
    %v3912 = vsel %vm371, %v3877, %v3319
    %v3914 = vsel %vm371, %v3880, %v3321
    %v3916 = vsel %vm371, %v3883, %v3323
    %v3918 = vsel %vm371, %v3886, %v3325
    %vm3919 = vcmask 392192
    %v3921 = vsel %vm3919, %v3888, %v3375
    %v3923 = vsel %vm3919, %v3890, %v3377
    %v3925 = vsel %vm3919, %v3892, %v3379
    %v3927 = vsel %vm3919, %v3894, %v3381
    %v3929 = vsel %vm3919, %v3896, %v3383
    %v3931 = vsel %vm3919, %v3898, %v3385
    %v3933 = vsel %vm3919, %v3900, %v3387
    %v3935 = vsel %vm3919, %v3902, %v3389
    %v3937 = vsel %vm3919, %v3904, %v3391
    %v3939 = vsel %vm3919, %v3906, %v3393
    %v3941 = vsel %vm3919, %v3908, %v3395
    %v3943 = vsel %vm3919, %v3910, %v3397
    %v3945 = vsel %vm3919, %v3912, %v3399
    %v3947 = vsel %vm3919, %v3914, %v3401
    %v3949 = vsel %vm3919, %v3916, %v3403
    %v3951 = vsel %vm3919, %v3918, %v3405
    %vm3952 = vcmask 523264
    %v3954 = vsel %vm3952, %v3921, %v3487
    %v3956 = vsel %vm3952, %v3923, %v3489
    %v3958 = vsel %vm3952, %v3925, %v3491
    %v3960 = vsel %vm3952, %v3927, %v3493
    %v3962 = vsel %vm3952, %v3929, %v3495
    %v3964 = vsel %vm3952, %v3931, %v3497
    %v3966 = vsel %vm3952, %v3933, %v3499
    %v3968 = vsel %vm3952, %v3935, %v3501
    %v3970 = vsel %vm3952, %v3937, %v3503
    %v3972 = vsel %vm3952, %v3939, %v3505
    %v3974 = vsel %vm3952, %v3941, %v3507
    %v3976 = vsel %vm3952, %v3943, %v3509
    %v3978 = vsel %vm3952, %v3945, %v3511
    %v3980 = vsel %vm3952, %v3947, %v3513
    %v3982 = vsel %vm3952, %v3949, %v3515
    %v3984 = vsel %vm3952, %v3951, %v3517
    %vm3985 = vcmask 654336
    %v3987 = vsel %vm3985, %v3954, %v3567
    %v3989 = vsel %vm3985, %v3956, %v3569
    %v3991 = vsel %vm3985, %v3958, %v3571
    %v3993 = vsel %vm3985, %v3960, %v3573
    %v3995 = vsel %vm3985, %v3962, %v3575
    %v3997 = vsel %vm3985, %v3964, %v3577
    %v3999 = vsel %vm3985, %v3966, %v3579
    %v4001 = vsel %vm3985, %v3968, %v3581
    %v4003 = vsel %vm3985, %v3970, %v3583
    %v4005 = vsel %vm3985, %v3972, %v3585
    %v4007 = vsel %vm3985, %v3974, %v3587
    %v4009 = vsel %vm3985, %v3976, %v3589
    %v4011 = vsel %vm3985, %v3978, %v3591
    %v4013 = vsel %vm3985, %v3980, %v3593
    %v4015 = vsel %vm3985, %v3982, %v3595
    %v4017 = vsel %vm3985, %v3984, %v3597
    %vm4018 = vcmask 785408
    %v4020 = vsel %vm4018, %v3987, %v3647
    %v4022 = vsel %vm4018, %v3989, %v3649
    %v4024 = vsel %vm4018, %v3991, %v3651
    %v4026 = vsel %vm4018, %v3993, %v3653
    %v4028 = vsel %vm4018, %v3995, %v3655
    %v4030 = vsel %vm4018, %v3997, %v3657
    %v4032 = vsel %vm4018, %v3999, %v3659
    %v4034 = vsel %vm4018, %v4001, %v3661
    %v4036 = vsel %vm4018, %v4003, %v3663
    %v4038 = vsel %vm4018, %v4005, %v3665
    %v4040 = vsel %vm4018, %v4007, %v3667
    %v4042 = vsel %vm4018, %v4009, %v3669
    %v4044 = vsel %vm4018, %v4011, %v3671
    %v4046 = vsel %vm4018, %v4013, %v3673
    %v4048 = vsel %vm4018, %v4015, %v3675
    %v4050 = vsel %vm4018, %v4017, %v3677
    %vm4051 = vcmask 916480
    %v4053 = vsel %vm4051, %v4020, %v3759
    %v4056 = vsel %vm4051, %v4022, %v3761
    %v4059 = vsel %vm4051, %v4024, %v3763
    %v4062 = vsel %vm4051, %v4026, %v3765
    %v4065 = vsel %vm4051, %v4028, %v3767
    %v4068 = vsel %vm4051, %v4030, %v3769
    %v4071 = vsel %vm4051, %v4032, %v3771
    %v4074 = vsel %vm4051, %v4034, %v3773
    %v4077 = vsel %vm4051, %v4036, %v3775
    %v4080 = vsel %vm4051, %v4038, %v3777
    %v4083 = vsel %vm4051, %v4040, %v3779
    %v4086 = vsel %vm4051, %v4042, %v3781
    %v4089 = vsel %vm4051, %v4044, %v3783
    %v4092 = vsel %vm4051, %v4046, %v3785
    %v4095 = vsel %vm4051, %v4048, %v3787
    %v4098 = vsel %vm4051, %v4050, %v3789
    %v4100 = vld [vmem:[%s3] sm:$0xf]
    %v4101 = vld [vmem:[%s3 + $0x4] sm:$0xf]
    %v4102 = vld [vmem:[%s3 + $0x8] sm:$0xf]
    %v4103 = vld [vmem:[%s3 + $0xc] sm:$0xf]
    %v4104 = vld [vmem:[%s3 + $0x10] sm:$0xf]
    %v4105 = vld [vmem:[%s3 + $0x14] sm:$0xf]
    %v4106 = vld [vmem:[%s3 + $0x18] sm:$0xf]
    %v4107 = vld [vmem:[%s3 + $0x1c] sm:$0xf]
    %v4108 = vld [vmem:[%s3 + $0x20] sm:$0xf]
    %v4109 = vld [vmem:[%s3 + $0x24] sm:$0xf]
    %v4110 = vld [vmem:[%s3 + $0x28] sm:$0xf]
    %v4111 = vld [vmem:[%s3 + $0x2c] sm:$0xf]
    %v4112 = vld [vmem:[%s3 + $0x30] sm:$0xf]
    %v4113 = vld [vmem:[%s3 + $0x34] sm:$0xf]
    %v4114 = vld [vmem:[%s3 + $0x38] sm:$0xf]
    %v4115 = vld [vmem:[%s3 + $0x3c] sm:$0xf]
    %v4116 = vld [vmem:[%s3 + $0x40] sm:$0xf]
    %v4117 = vld [vmem:[%s3 + $0x44] sm:$0xf]
    %v4118 = vld [vmem:[%s4] sm:$0x1]
    %v4120 = vlaneseq
    %v4121 = vshrl.u32 %v4120, 7
    %v4122 = vsub.s32 0, %v4121
    %v4123 = vrot.slane %v4118, %v4122
    %v4143 = vunpack.c.l.b16 %v4100
    %v4144 = vunpack.c.l.b16 %v4101
    %v4145 = vunpack.c.l.b16 %v4102
    %v4146 = vunpack.c.l.b16 %v4103
    %v4147 = vunpack.c.l.b16 %v4104
    %v4148 = vunpack.c.l.b16 %v4105
    %v4149 = vunpack.c.l.b16 %v4106
    %v4150 = vunpack.c.l.b16 %v4107
    %v4151 = vunpack.c.l.b16 %v4108
    %v4152 = vunpack.c.l.b16 %v4109
    %v4153 = vunpack.c.l.b16 %v4110
    %v4154 = vunpack.c.l.b16 %v4111
    %v4155 = vunpack.c.l.b16 %v4112
    %v4156 = vunpack.c.l.b16 %v4113
    %v4157 = vunpack.c.l.b16 %v4114
    %v4158 = vunpack.c.l.b16 %v4115
    %v4159 = vunpack.c.l.b16 %v4116
    %v4160 = vunpack.c.l.b16 %v4117
    %v4161 = vpack.c.b16 %v4144, %v4143
    %v4162 = vpack.c.b16 %v4146, %v4145
    %v4163 = vpack.c.b16 %v4148, %v4147
    %v4164 = vpack.c.b16 %v4150, %v4149
    %v4165 = vpack.c.b16 %v4152, %v4151
    %v4166 = vpack.c.b16 %v4154, %v4153
    %v4167 = vpack.c.b16 %v4156, %v4155
    %v4168 = vpack.c.b16 %v4158, %v4157
    %v4169 = vpack.c.b16 %v4160, %v4159
    %v4180 = vsel %vm3838, %v3822, 0
    %v4183 = vsel %vm3838, %v3823, 0
    %v4186 = vsel %vm3838, %v3824, 0
    %v4189 = vsel %vm3838, %v3825, 0
    %v4192 = vsel %vm3838, %v3826, 0
    %v4195 = vsel %vm3838, %v3827, 0
    %v4198 = vsel %vm3838, %v3828, 0
    %v4201 = vsel %vm3838, %v3829, 0
    %v4204 = vsel %vm3838, %v3830, 0
    %v4207 = vsel %vm3838, %v3831, 0
    %v4210 = vsel %vm3838, %v3832, 0
    %v4213 = vsel %vm3838, %v3833, 0
    %v4216 = vsel %vm3838, %v3834, 0
    %v4219 = vsel %vm3838, %v3835, 0
    %v4222 = vsel %vm3838, %v3836, 0
    %v4225 = vsel %vm3838, %v3837, 0
    %4227 = vmatprep.subr.bf16.mxu0 0
    %4228 = vmatpush1.bf16.msra.mxu0 %v4168
    %4229 = vmatprep.subr.bf16.mxu0 0
    %4230 = vmatpush1.bf16.msra.mxu0 %v4167
    %4231 = vmatprep.subr.bf16.mxu0 0
    %4232 = vmatpush1.bf16.msra.mxu0 %v4166
    %4233 = vmatprep.subr.bf16.mxu0 0
    %4234 = vmatpush1.bf16.msra.mxu0 %v4165
    %4235 = vmatprep.subr.bf16.mxu0 0
    %4236 = vmatpush1.bf16.msra.mxu0 %v4164
    %4237 = vmatprep.subr.bf16.mxu0 0
    %4238 = vmatpush1.bf16.msra.mxu0 %v4163
    %4239 = vmatprep.subr.bf16.mxu0 0
    %4240 = vmatpush1.bf16.msra.mxu0 %v4162
    %4241 = vmatprep.subr.bf16.mxu0 0
    %4242 = vmatpush1.bf16.msra.mxu0 %v4161
    %4243 = vmatprep.subr.bf16.mxu0 0
    %4244 = vmatpush2.bf16.msra.mxu0 0
    %4245 = vmatprep.subr.bf16.mxu0 0
    %4246 = vmatpush2.bf16.msra.mxu0 0
    %4247 = vmatprep.subr.bf16.mxu0 0
    %4248 = vmatpush2.bf16.msra.mxu0 0
    %4249 = vmatprep.subr.bf16.mxu0 0
    %4250 = vmatpush2.bf16.msra.mxu0 0
    %4251 = vmatprep.subr.bf16.mxu0 0
    %4252 = vmatpush2.bf16.msra.mxu0 0
    %4253 = vmatprep.subr.bf16.mxu0 0
    %4254 = vmatpush2.bf16.msra.mxu0 0
    %4255 = vmatprep.subr.bf16.mxu0 0
    %4256 = vmatpush2.bf16.msra.mxu0 0
    %4257 = vmatprep.subr.bf16.mxu0 0
    %4258 = vmatpush2.bf16.msra.mxu0 %v4169
    %4259 = vmatprep.mubr.bf16.mxu0 %v4180
    %4260 = vmatmul.mubr.bf16.gmra.mxu0 %v4053
    %v4261 = vpop.f32.mrf.mxu0
    %v4262 = vadd.f32 %v4123, %v4261
    %v4263 = vpop.f32.mrf.mxu0
    %v4264 = vpop.f32.mrf.mxu0
    %v4265 = vadd.f32 %v4123, %v4264
    %v4266 = vpop.f32.mrf.mxu0
    %4267 = vmatprep.mubr.bf16.mxu0 %v4183
    %4268 = vmatmul.mubr.bf16.gmra.mxu0 %v4056
    %v4269 = vpop.f32.mrf.mxu0
    %v4270 = vadd.f32 %v4123, %v4269
    %v4271 = vpop.f32.mrf.mxu0
    %v4272 = vpop.f32.mrf.mxu0
    %v4273 = vadd.f32 %v4123, %v4272
    %v4274 = vpop.f32.mrf.mxu0
    %4275 = vmatprep.mubr.bf16.mxu0 %v4186
    %4276 = vmatmul.mubr.bf16.gmra.mxu0 %v4059
    %v4277 = vpop.f32.mrf.mxu0
    %v4278 = vadd.f32 %v4123, %v4277
    %v4279 = vpop.f32.mrf.mxu0
    %v4280 = vpop.f32.mrf.mxu0
    %v4281 = vadd.f32 %v4123, %v4280
    %v4282 = vpop.f32.mrf.mxu0
    %4283 = vmatprep.mubr.bf16.mxu0 %v4189
    %4284 = vmatmul.mubr.bf16.gmra.mxu0 %v4062
    %v4285 = vpop.f32.mrf.mxu0
    %v4286 = vadd.f32 %v4123, %v4285
    %v4287 = vpop.f32.mrf.mxu0
    %v4288 = vpop.f32.mrf.mxu0
    %v4289 = vadd.f32 %v4123, %v4288
    %v4290 = vpop.f32.mrf.mxu0
    %4291 = vmatprep.mubr.bf16.mxu0 %v4192
    %4292 = vmatmul.mubr.bf16.gmra.mxu0 %v4065
    %v4293 = vpop.f32.mrf.mxu0
    %v4294 = vadd.f32 %v4123, %v4293
    %v4295 = vpop.f32.mrf.mxu0
    %v4296 = vpop.f32.mrf.mxu0
    %v4297 = vadd.f32 %v4123, %v4296
    %v4298 = vpop.f32.mrf.mxu0
    %4299 = vmatprep.mubr.bf16.mxu0 %v4195
    %4300 = vmatmul.mubr.bf16.gmra.mxu0 %v4068
    %v4301 = vpop.f32.mrf.mxu0
    %v4302 = vadd.f32 %v4123, %v4301
    %v4303 = vpop.f32.mrf.mxu0
    %v4304 = vpop.f32.mrf.mxu0
    %v4305 = vadd.f32 %v4123, %v4304
    %v4306 = vpop.f32.mrf.mxu0
    %4307 = vmatprep.mubr.bf16.mxu0 %v4198
    %4308 = vmatmul.mubr.bf16.gmra.mxu0 %v4071
    %v4309 = vpop.f32.mrf.mxu0
    %v4310 = vadd.f32 %v4123, %v4309
    %v4311 = vpop.f32.mrf.mxu0
    %v4312 = vpop.f32.mrf.mxu0
    %v4313 = vadd.f32 %v4123, %v4312
    %v4314 = vpop.f32.mrf.mxu0
    %4315 = vmatprep.mubr.bf16.mxu0 %v4201
    %4316 = vmatmul.mubr.bf16.gmra.mxu0 %v4074
    %v4317 = vpop.f32.mrf.mxu0
    %v4318 = vadd.f32 %v4123, %v4317
    %v4319 = vpop.f32.mrf.mxu0
    %v4320 = vpop.f32.mrf.mxu0
    %v4321 = vadd.f32 %v4123, %v4320
    %v4322 = vpop.f32.mrf.mxu0
    %4323 = vmatprep.mubr.bf16.mxu0 %v4204
    %4324 = vmatmul.mubr.bf16.gmra.mxu0 %v4077
    %v4325 = vpop.f32.mrf.mxu0
    %v4326 = vadd.f32 %v4123, %v4325
    %v4327 = vpop.f32.mrf.mxu0
    %v4328 = vpop.f32.mrf.mxu0
    %v4329 = vadd.f32 %v4123, %v4328
    %v4330 = vpop.f32.mrf.mxu0
    %4331 = vmatprep.mubr.bf16.mxu0 %v4207
    %4332 = vmatmul.mubr.bf16.gmra.mxu0 %v4080
    %v4333 = vpop.f32.mrf.mxu0
    %v4334 = vadd.f32 %v4123, %v4333
    %v4335 = vpop.f32.mrf.mxu0
    %v4336 = vpop.f32.mrf.mxu0
    %v4337 = vadd.f32 %v4123, %v4336
    %v4338 = vpop.f32.mrf.mxu0
    %4339 = vmatprep.mubr.bf16.mxu0 %v4210
    %4340 = vmatmul.mubr.bf16.gmra.mxu0 %v4083
    %v4341 = vpop.f32.mrf.mxu0
    %v4342 = vadd.f32 %v4123, %v4341
    %v4343 = vpop.f32.mrf.mxu0
    %v4344 = vpop.f32.mrf.mxu0
    %v4345 = vadd.f32 %v4123, %v4344
    %v4346 = vpop.f32.mrf.mxu0
    %4347 = vmatprep.mubr.bf16.mxu0 %v4213
    %4348 = vmatmul.mubr.bf16.gmra.mxu0 %v4086
    %v4349 = vpop.f32.mrf.mxu0
    %v4350 = vadd.f32 %v4123, %v4349
    %v4351 = vpop.f32.mrf.mxu0
    %v4352 = vpop.f32.mrf.mxu0
    %v4353 = vadd.f32 %v4123, %v4352
    %v4354 = vpop.f32.mrf.mxu0
    %4355 = vmatprep.mubr.bf16.mxu0 %v4216
    %4356 = vmatmul.mubr.bf16.gmra.mxu0 %v4089
    %v4357 = vpop.f32.mrf.mxu0
    %v4358 = vadd.f32 %v4123, %v4357
    %v4359 = vpop.f32.mrf.mxu0
    %v4360 = vpop.f32.mrf.mxu0
    %v4361 = vadd.f32 %v4123, %v4360
    %v4362 = vpop.f32.mrf.mxu0
    %4363 = vmatprep.mubr.bf16.mxu0 %v4219
    %4364 = vmatmul.mubr.bf16.gmra.mxu0 %v4092
    %v4365 = vpop.f32.mrf.mxu0
    %v4366 = vadd.f32 %v4123, %v4365
    %v4367 = vpop.f32.mrf.mxu0
    %v4368 = vpop.f32.mrf.mxu0
    %v4369 = vadd.f32 %v4123, %v4368
    %v4370 = vpop.f32.mrf.mxu0
    %4371 = vmatprep.mubr.bf16.mxu0 %v4222
    %4372 = vmatmul.mubr.bf16.gmra.mxu0 %v4095
    %v4373 = vpop.f32.mrf.mxu0
    %v4374 = vadd.f32 %v4123, %v4373
    %v4375 = vpop.f32.mrf.mxu0
    %v4376 = vpop.f32.mrf.mxu0
    %v4377 = vadd.f32 %v4123, %v4376
    %v4378 = vpop.f32.mrf.mxu0
    %4379 = vmatprep.mubr.bf16.mxu0 %v4225
    %4380 = vmatmul.mubr.bf16.gmra.mxu0 %v4098
    %v4381 = vpop.f32.mrf.mxu0
    %v4382 = vadd.f32 %v4123, %v4381
    %v4383 = vpop.f32.mrf.mxu0
    %v4384 = vpop.f32.mrf.mxu0
    %v4385 = vadd.f32 %v4123, %v4384
    %v4386 = vpop.f32.mrf.mxu0
    %4387 = vdwg.mxu0
    %v4388 = vmax.f32 %v4262, 0.0
    %v4389 = vmax.f32 %v4265, 0.0
    %v4390 = vmax.f32 %v4270, 0.0
    %v4391 = vmax.f32 %v4273, 0.0
    %v4392 = vmax.f32 %v4278, 0.0
    %v4393 = vmax.f32 %v4281, 0.0
    %v4394 = vmax.f32 %v4286, 0.0
    %v4395 = vmax.f32 %v4289, 0.0
    %v4396 = vmax.f32 %v4294, 0.0
    %v4397 = vmax.f32 %v4297, 0.0
    %v4398 = vmax.f32 %v4302, 0.0
    %v4399 = vmax.f32 %v4305, 0.0
    %v4400 = vmax.f32 %v4310, 0.0
    %v4401 = vmax.f32 %v4313, 0.0
    %v4402 = vmax.f32 %v4318, 0.0
    %v4403 = vmax.f32 %v4321, 0.0
    %v4404 = vmax.f32 %v4326, 0.0
    %v4405 = vmax.f32 %v4329, 0.0
    %v4406 = vmax.f32 %v4334, 0.0
    %v4407 = vmax.f32 %v4337, 0.0
    %v4408 = vmax.f32 %v4342, 0.0
    %v4409 = vmax.f32 %v4345, 0.0
    %v4410 = vmax.f32 %v4350, 0.0
    %v4411 = vmax.f32 %v4353, 0.0
    %v4412 = vmax.f32 %v4358, 0.0
    %v4413 = vmax.f32 %v4361, 0.0
    %v4414 = vmax.f32 %v4366, 0.0
    %v4415 = vmax.f32 %v4369, 0.0
    %v4416 = vmax.f32 %v4374, 0.0
    %v4417 = vmax.f32 %v4377, 0.0
    %v4418 = vmax.f32 %v4382, 0.0
    %v4419 = vmax.f32 %v4385, 0.0
    %v4420 = vpack.c.bf16 %v4389, %v4388
    %v4421 = vpack.c.bf16 %v4391, %v4390
    %v4422 = vpack.c.bf16 %v4393, %v4392
    %v4423 = vpack.c.bf16 %v4395, %v4394
    %v4424 = vpack.c.bf16 %v4397, %v4396
    %v4425 = vpack.c.bf16 %v4399, %v4398
    %v4426 = vpack.c.bf16 %v4401, %v4400
    %v4427 = vpack.c.bf16 %v4403, %v4402
    %v4428 = vpack.c.bf16 %v4405, %v4404
    %v4429 = vpack.c.bf16 %v4407, %v4406
    %v4430 = vpack.c.bf16 %v4409, %v4408
    %v4431 = vpack.c.bf16 %v4411, %v4410
    %v4432 = vpack.c.bf16 %v4413, %v4412
    %v4433 = vpack.c.bf16 %v4415, %v4414
    %v4434 = vpack.c.bf16 %v4417, %v4416
    %v4435 = vpack.c.bf16 %v4419, %v4418
    %v4436 = vld [vmem:[%s5] sm:$0xf]
    %v4437 = vld [vmem:[%s5 + $0x4] sm:$0xf]
    %v4438 = vld [vmem:[%s6] sm:$0x1]
    %v4440 = vlaneseq
    %v4441 = vshrl.u32 %v4440, 7
    %v4442 = vsub.s32 0, %v4441
    %v4443 = vrot.slane %v4438, %v4442
    %v4447 = vunpack.c.l.b16 %v4436
    %v4448 = vunpack.c.l.b16 %v4437
    %v4449 = vpack.c.b16 %v4448, %v4447
    %v4452 = vsel %vm3838, %v4420, 0
    %v4455 = vsel %vm3838, %v4421, 0
    %v4458 = vsel %vm3838, %v4422, 0
    %v4461 = vsel %vm3838, %v4423, 0
    %v4464 = vsel %vm3838, %v4424, 0
    %v4467 = vsel %vm3838, %v4425, 0
    %v4470 = vsel %vm3838, %v4426, 0
    %v4473 = vsel %vm3838, %v4427, 0
    %v4476 = vsel %vm3838, %v4428, 0
    %v4479 = vsel %vm3838, %v4429, 0
    %v4482 = vsel %vm3838, %v4430, 0
    %v4485 = vsel %vm3838, %v4431, 0
    %v4488 = vsel %vm3838, %v4432, 0
    %v4491 = vsel %vm3838, %v4433, 0
    %v4494 = vsel %vm3838, %v4434, 0
    %v4497 = vsel %vm3838, %v4435, 0
    %4499 = vmatprep.subr.bf16.mxu0 0
    %4500 = vmatpush1.bf16.msra.mxu0 0
    %4501 = vmatprep.subr.bf16.mxu0 0
    %4502 = vmatpush1.bf16.msra.mxu0 0
    %4503 = vmatprep.subr.bf16.mxu0 0
    %4504 = vmatpush1.bf16.msra.mxu0 0
    %4505 = vmatprep.subr.bf16.mxu0 0
    %4506 = vmatpush1.bf16.msra.mxu0 0
    %4507 = vmatprep.subr.bf16.mxu0 0
    %4508 = vmatpush1.bf16.msra.mxu0 0
    %4509 = vmatprep.subr.bf16.mxu0 0
    %4510 = vmatpush1.bf16.msra.mxu0 0
    %4511 = vmatprep.subr.bf16.mxu0 0
    %4512 = vmatpush1.bf16.msra.mxu0 0
    %4513 = vmatprep.subr.bf16.mxu0 0
    %4514 = vmatpush1.bf16.msra.mxu0 %v4449
    %4515 = vmatprep.subr.bf16.mxu0 0
    %4516 = vmatpush2.bf16.msra.mxu0 0
    %4517 = vmatprep.subr.bf16.mxu0 0
    %4518 = vmatpush2.bf16.msra.mxu0 0
    %4519 = vmatprep.subr.bf16.mxu0 0
    %4520 = vmatpush2.bf16.msra.mxu0 0
    %4521 = vmatprep.subr.bf16.mxu0 0
    %4522 = vmatpush2.bf16.msra.mxu0 0
    %4523 = vmatprep.subr.bf16.mxu0 0
    %4524 = vmatpush2.bf16.msra.mxu0 0
    %4525 = vmatprep.subr.bf16.mxu0 0
    %4526 = vmatpush2.bf16.msra.mxu0 0
    %4527 = vmatprep.subr.bf16.mxu0 0
    %4528 = vmatpush2.bf16.msra.mxu0 0
    %4529 = vmatprep.subr.bf16.mxu0 0
    %4530 = vmatpush2.bf16.msra.mxu0 0
    %4531 = vmatprep.mubr.bf16.mxu0 0
    %4532 = vmatmul.mubr.bf16.gmra.mxu0 %v4452
    %v4533 = vpop.f32.mrf.mxu0
    %v4534 = vadd.f32 %v4443, %v4533
    %v4535 = vpop.f32.mrf.mxu0
    %v4536 = vpop.f32.mrf.mxu0
    %v4537 = vadd.f32 %v4443, %v4536
    %v4538 = vpop.f32.mrf.mxu0
    %4539 = vmatprep.mubr.bf16.mxu0 0
    %4540 = vmatmul.mubr.bf16.gmra.mxu0 %v4455
    %v4541 = vpop.f32.mrf.mxu0
    %v4542 = vadd.f32 %v4443, %v4541
    %v4543 = vpop.f32.mrf.mxu0
    %v4544 = vpop.f32.mrf.mxu0
    %v4545 = vadd.f32 %v4443, %v4544
    %v4546 = vpop.f32.mrf.mxu0
    %4547 = vmatprep.mubr.bf16.mxu0 0
    %4548 = vmatmul.mubr.bf16.gmra.mxu0 %v4458
    %v4549 = vpop.f32.mrf.mxu0
    %v4550 = vadd.f32 %v4443, %v4549
    %v4551 = vpop.f32.mrf.mxu0
    %v4552 = vpop.f32.mrf.mxu0
    %v4553 = vadd.f32 %v4443, %v4552
    %v4554 = vpop.f32.mrf.mxu0
    %4555 = vmatprep.mubr.bf16.mxu0 0
    %4556 = vmatmul.mubr.bf16.gmra.mxu0 %v4461
    %v4557 = vpop.f32.mrf.mxu0
    %v4558 = vadd.f32 %v4443, %v4557
    %v4559 = vpop.f32.mrf.mxu0
    %v4560 = vpop.f32.mrf.mxu0
    %v4561 = vadd.f32 %v4443, %v4560
    %v4562 = vpop.f32.mrf.mxu0
    %4563 = vmatprep.mubr.bf16.mxu0 0
    %4564 = vmatmul.mubr.bf16.gmra.mxu0 %v4464
    %v4565 = vpop.f32.mrf.mxu0
    %v4566 = vadd.f32 %v4443, %v4565
    %v4567 = vpop.f32.mrf.mxu0
    %v4568 = vpop.f32.mrf.mxu0
    %v4569 = vadd.f32 %v4443, %v4568
    %v4570 = vpop.f32.mrf.mxu0
    %4571 = vmatprep.mubr.bf16.mxu0 0
    %4572 = vmatmul.mubr.bf16.gmra.mxu0 %v4467
    %v4573 = vpop.f32.mrf.mxu0
    %v4574 = vadd.f32 %v4443, %v4573
    %v4575 = vpop.f32.mrf.mxu0
    %v4576 = vpop.f32.mrf.mxu0
    %v4577 = vadd.f32 %v4443, %v4576
    %v4578 = vpop.f32.mrf.mxu0
    %4579 = vmatprep.mubr.bf16.mxu0 0
    %4580 = vmatmul.mubr.bf16.gmra.mxu0 %v4470
    %v4581 = vpop.f32.mrf.mxu0
    %v4582 = vadd.f32 %v4443, %v4581
    %v4583 = vpop.f32.mrf.mxu0
    %v4584 = vpop.f32.mrf.mxu0
    %v4585 = vadd.f32 %v4443, %v4584
    %v4586 = vpop.f32.mrf.mxu0
    %4587 = vmatprep.mubr.bf16.mxu0 0
    %4588 = vmatmul.mubr.bf16.gmra.mxu0 %v4473
    %v4589 = vpop.f32.mrf.mxu0
    %v4590 = vadd.f32 %v4443, %v4589
    %v4591 = vpop.f32.mrf.mxu0
    %v4592 = vpop.f32.mrf.mxu0
    %v4593 = vadd.f32 %v4443, %v4592
    %v4594 = vpop.f32.mrf.mxu0
    %4595 = vmatprep.mubr.bf16.mxu0 0
    %4596 = vmatmul.mubr.bf16.gmra.mxu0 %v4476
    %v4597 = vpop.f32.mrf.mxu0
    %v4598 = vadd.f32 %v4443, %v4597
    %v4599 = vpop.f32.mrf.mxu0
    %v4600 = vpop.f32.mrf.mxu0
    %v4601 = vadd.f32 %v4443, %v4600
    %v4602 = vpop.f32.mrf.mxu0
    %4603 = vmatprep.mubr.bf16.mxu0 0
    %4604 = vmatmul.mubr.bf16.gmra.mxu0 %v4479
    %v4605 = vpop.f32.mrf.mxu0
    %v4606 = vadd.f32 %v4443, %v4605
    %v4607 = vpop.f32.mrf.mxu0
    %v4608 = vpop.f32.mrf.mxu0
    %v4609 = vadd.f32 %v4443, %v4608
    %v4610 = vpop.f32.mrf.mxu0
    %4611 = vmatprep.mubr.bf16.mxu0 0
    %4612 = vmatmul.mubr.bf16.gmra.mxu0 %v4482
    %v4613 = vpop.f32.mrf.mxu0
    %v4614 = vadd.f32 %v4443, %v4613
    %v4615 = vpop.f32.mrf.mxu0
    %v4616 = vpop.f32.mrf.mxu0
    %v4617 = vadd.f32 %v4443, %v4616
    %v4618 = vpop.f32.mrf.mxu0
    %4619 = vmatprep.mubr.bf16.mxu0 0
    %4620 = vmatmul.mubr.bf16.gmra.mxu0 %v4485
    %v4621 = vpop.f32.mrf.mxu0
    %v4622 = vadd.f32 %v4443, %v4621
    %v4623 = vpop.f32.mrf.mxu0
    %v4624 = vpop.f32.mrf.mxu0
    %v4625 = vadd.f32 %v4443, %v4624
    %v4626 = vpop.f32.mrf.mxu0
    %4627 = vmatprep.mubr.bf16.mxu0 0
    %4628 = vmatmul.mubr.bf16.gmra.mxu0 %v4488
    %v4629 = vpop.f32.mrf.mxu0
    %v4630 = vadd.f32 %v4443, %v4629
    %v4631 = vpop.f32.mrf.mxu0
    %v4632 = vpop.f32.mrf.mxu0
    %v4633 = vadd.f32 %v4443, %v4632
    %v4634 = vpop.f32.mrf.mxu0
    %4635 = vmatprep.mubr.bf16.mxu0 0
    %4636 = vmatmul.mubr.bf16.gmra.mxu0 %v4491
    %v4637 = vpop.f32.mrf.mxu0
    %v4638 = vadd.f32 %v4443, %v4637
    %v4639 = vpop.f32.mrf.mxu0
    %v4640 = vpop.f32.mrf.mxu0
    %v4641 = vadd.f32 %v4443, %v4640
    %v4642 = vpop.f32.mrf.mxu0
    %4643 = vmatprep.mubr.bf16.mxu0 0
    %4644 = vmatmul.mubr.bf16.gmra.mxu0 %v4494
    %v4645 = vpop.f32.mrf.mxu0
    %v4646 = vadd.f32 %v4443, %v4645
    %v4647 = vpop.f32.mrf.mxu0
    %v4648 = vpop.f32.mrf.mxu0
    %v4649 = vadd.f32 %v4443, %v4648
    %v4650 = vpop.f32.mrf.mxu0
    %4651 = vmatprep.mubr.bf16.mxu0 0
    %4652 = vmatmul.mubr.bf16.gmra.mxu0 %v4497
    %v4653 = vpop.f32.mrf.mxu0
    %v4654 = vadd.f32 %v4443, %v4653
    %v4655 = vpop.f32.mrf.mxu0
    %v4656 = vpop.f32.mrf.mxu0
    %v4657 = vadd.f32 %v4443, %v4656
    %v4658 = vpop.f32.mrf.mxu0
    %4659 = vdwg.mxu0
    %v4660 = vunpack.c.l.bf16 %v236
    %v4661 = vunpack.c.l.bf16 %v237
    %v4662 = vunpack.c.l.bf16 %v238
    %v4663 = vunpack.c.l.bf16 %v239
    %v4664 = vunpack.c.l.bf16 %v240
    %v4665 = vunpack.c.l.bf16 %v241
    %v4666 = vunpack.c.l.bf16 %v242
    %v4667 = vunpack.c.l.bf16 %v243
    %v4668 = vunpack.c.l.bf16 %v244
    %v4669 = vunpack.c.l.bf16 %v245
    %v4670 = vunpack.c.l.bf16 %v246
    %v4671 = vunpack.c.l.bf16 %v247
    %v4672 = vunpack.c.l.bf16 %v248
    %v4673 = vunpack.c.l.bf16 %v249
    %v4674 = vunpack.c.l.bf16 %v250
    %v4675 = vunpack.c.l.bf16 %v251
    %v4676 = vunpack.c.l.bf16 %v252
    %v4677 = vunpack.c.l.bf16 %v253
    %v4678 = vunpack.c.l.bf16 %v254
    %v4679 = vunpack.c.l.bf16 %v255
    %v4680 = vunpack.c.l.bf16 %v256
    %v4681 = vunpack.c.l.bf16 %v257
    %v4682 = vunpack.c.l.bf16 %v258
    %v4683 = vunpack.c.l.bf16 %v259
    %v4684 = vunpack.c.l.bf16 %v260
    %v4685 = vunpack.c.l.bf16 %v261
    %v4686 = vunpack.c.l.bf16 %v262
    %v4687 = vunpack.c.l.bf16 %v263
    %v4688 = vunpack.c.l.bf16 %v264
    %v4689 = vunpack.c.l.bf16 %v265
    %v4690 = vunpack.c.l.bf16 %v266
    %v4691 = vunpack.c.l.bf16 %v267
    %v4692 = vadd.f32 %v4534, %v4660
    %v4693 = vadd.f32 %v4537, %v4661
    %v4694 = vadd.f32 %v4542, %v4662
    %v4695 = vadd.f32 %v4545, %v4663
    %v4696 = vadd.f32 %v4550, %v4664
    %v4697 = vadd.f32 %v4553, %v4665
    %v4698 = vadd.f32 %v4558, %v4666
    %v4699 = vadd.f32 %v4561, %v4667
    %v4700 = vadd.f32 %v4566, %v4668
    %v4701 = vadd.f32 %v4569, %v4669
    %v4702 = vadd.f32 %v4574, %v4670
    %v4703 = vadd.f32 %v4577, %v4671
    %v4704 = vadd.f32 %v4582, %v4672
    %v4705 = vadd.f32 %v4585, %v4673
    %v4706 = vadd.f32 %v4590, %v4674
    %v4707 = vadd.f32 %v4593, %v4675
    %v4708 = vadd.f32 %v4598, %v4676
    %v4709 = vadd.f32 %v4601, %v4677
    %v4710 = vadd.f32 %v4606, %v4678
    %v4711 = vadd.f32 %v4609, %v4679
    %v4712 = vadd.f32 %v4614, %v4680
    %v4713 = vadd.f32 %v4617, %v4681
    %v4714 = vadd.f32 %v4622, %v4682
    %v4715 = vadd.f32 %v4625, %v4683
    %v4716 = vadd.f32 %v4630, %v4684
    %v4717 = vadd.f32 %v4633, %v4685
    %v4718 = vadd.f32 %v4638, %v4686
    %v4719 = vadd.f32 %v4641, %v4687
    %v4720 = vadd.f32 %v4646, %v4688
    %v4721 = vadd.f32 %v4649, %v4689
    %v4722 = vadd.f32 %v4654, %v4690
    %v4723 = vadd.f32 %v4657, %v4691
    %v4724 = vmax.f32 %v4692, 0.0
    %v4725 = vmax.f32 %v4693, 0.0
    %v4726 = vmax.f32 %v4694, 0.0
    %v4727 = vmax.f32 %v4695, 0.0
    %v4728 = vmax.f32 %v4696, 0.0
    %v4729 = vmax.f32 %v4697, 0.0
    %v4730 = vmax.f32 %v4698, 0.0
    %v4731 = vmax.f32 %v4699, 0.0
    %v4732 = vmax.f32 %v4700, 0.0
    %v4733 = vmax.f32 %v4701, 0.0
    %v4734 = vmax.f32 %v4702, 0.0
    %v4735 = vmax.f32 %v4703, 0.0
    %v4736 = vmax.f32 %v4704, 0.0
    %v4737 = vmax.f32 %v4705, 0.0
    %v4738 = vmax.f32 %v4706, 0.0
    %v4739 = vmax.f32 %v4707, 0.0
    %v4740 = vmax.f32 %v4708, 0.0
    %v4741 = vmax.f32 %v4709, 0.0
    %v4742 = vmax.f32 %v4710, 0.0
    %v4743 = vmax.f32 %v4711, 0.0
    %v4744 = vmax.f32 %v4712, 0.0
    %v4745 = vmax.f32 %v4713, 0.0
    %v4746 = vmax.f32 %v4714, 0.0
    %v4747 = vmax.f32 %v4715, 0.0
    %v4748 = vmax.f32 %v4716, 0.0
    %v4749 = vmax.f32 %v4717, 0.0
    %v4750 = vmax.f32 %v4718, 0.0
    %v4751 = vmax.f32 %v4719, 0.0
    %v4752 = vmax.f32 %v4720, 0.0
    %v4753 = vmax.f32 %v4721, 0.0
    %v4754 = vmax.f32 %v4722, 0.0
    %v4755 = vmax.f32 %v4723, 0.0
    %v4756 = vpack.c.bf16 %v4724, %v4724
    %v4757 = vpack.c.bf16 %v4725, %v4725
    %v4758 = vpack.c.bf16 %v4726, %v4726
    %v4759 = vpack.c.bf16 %v4727, %v4727
    %v4760 = vpack.c.bf16 %v4728, %v4728
    %v4761 = vpack.c.bf16 %v4729, %v4729
    %v4762 = vpack.c.bf16 %v4730, %v4730
    %v4763 = vpack.c.bf16 %v4731, %v4731
    %v4764 = vpack.c.bf16 %v4732, %v4732
    %v4765 = vpack.c.bf16 %v4733, %v4733
    %v4766 = vpack.c.bf16 %v4734, %v4734
    %v4767 = vpack.c.bf16 %v4735, %v4735
    %v4768 = vpack.c.bf16 %v4736, %v4736
    %v4769 = vpack.c.bf16 %v4737, %v4737
    %v4770 = vpack.c.bf16 %v4738, %v4738
    %v4771 = vpack.c.bf16 %v4739, %v4739
    %v4772 = vpack.c.bf16 %v4740, %v4740
    %v4773 = vpack.c.bf16 %v4741, %v4741
    %v4774 = vpack.c.bf16 %v4742, %v4742
    %v4775 = vpack.c.bf16 %v4743, %v4743
    %v4776 = vpack.c.bf16 %v4744, %v4744
    %v4777 = vpack.c.bf16 %v4745, %v4745
    %v4778 = vpack.c.bf16 %v4746, %v4746
    %v4779 = vpack.c.bf16 %v4747, %v4747
    %v4780 = vpack.c.bf16 %v4748, %v4748
    %v4781 = vpack.c.bf16 %v4749, %v4749
    %v4782 = vpack.c.bf16 %v4750, %v4750
    %v4783 = vpack.c.bf16 %v4751, %v4751
    %v4784 = vpack.c.bf16 %v4752, %v4752
    %v4785 = vpack.c.bf16 %v4753, %v4753
    %v4786 = vpack.c.bf16 %v4754, %v4754
    %v4787 = vpack.c.bf16 %v4755, %v4755
    %vm4788 = vcmask 257024
    %4789 = vst.msk [vmem:[#allocation3] sm:$0xf] %vm4788, %v4756
    %4790 = vst.msk [vmem:[#allocation3 + $0x4] sm:$0xf] %vm4788, %v4757
    %4791 = vst.msk [vmem:[#allocation3 + $0x8] sm:$0xf] %vm4788, %v4758
    %4792 = vst.msk [vmem:[#allocation3 + $0xc] sm:$0xf] %vm4788, %v4759
    %4793 = vst.msk [vmem:[#allocation3 + $0x10] sm:$0xf] %vm4788, %v4760
    %4794 = vst.msk [vmem:[#allocation3 + $0x14] sm:$0xf] %vm4788, %v4761
    %4795 = vst.msk [vmem:[#allocation3 + $0x18] sm:$0xf] %vm4788, %v4762
    %4796 = vst.msk [vmem:[#allocation3 + $0x1c] sm:$0xf] %vm4788, %v4763
    %4797 = vst.msk [vmem:[#allocation3 + $0x20] sm:$0xf] %vm4788, %v4764
    %4798 = vst.msk [vmem:[#allocation3 + $0x24] sm:$0xf] %vm4788, %v4765
    %4799 = vst.msk [vmem:[#allocation3 + $0x28] sm:$0xf] %vm4788, %v4766
    %4800 = vst.msk [vmem:[#allocation3 + $0x2c] sm:$0xf] %vm4788, %v4767
    %4801 = vst.msk [vmem:[#allocation3 + $0x30] sm:$0xf] %vm4788, %v4768
    %4802 = vst.msk [vmem:[#allocation3 + $0x34] sm:$0xf] %vm4788, %v4769
    %4803 = vst.msk [vmem:[#allocation3 + $0x38] sm:$0xf] %vm4788, %v4770
    %4804 = vst.msk [vmem:[#allocation3 + $0x3c] sm:$0xf] %vm4788, %v4771
    %4805 = vst.msk [vmem:[#allocation3 + $0x40] sm:$0xf] %vm4788, %v4772
    %4806 = vst.msk [vmem:[#allocation3 + $0x44] sm:$0xf] %vm4788, %v4773
    %4807 = vst.msk [vmem:[#allocation3 + $0x48] sm:$0xf] %vm4788, %v4774
    %4808 = vst.msk [vmem:[#allocation3 + $0x4c] sm:$0xf] %vm4788, %v4775
    %4809 = vst.msk [vmem:[#allocation3 + $0x50] sm:$0xf] %vm4788, %v4776
    %4810 = vst.msk [vmem:[#allocation3 + $0x54] sm:$0xf] %vm4788, %v4777
    %4811 = vst.msk [vmem:[#allocation3 + $0x58] sm:$0xf] %vm4788, %v4778
    %4812 = vst.msk [vmem:[#allocation3 + $0x5c] sm:$0xf] %vm4788, %v4779
    %4813 = vst.msk [vmem:[#allocation3 + $0x60] sm:$0xf] %vm4788, %v4780
    %4814 = vst.msk [vmem:[#allocation3 + $0x64] sm:$0xf] %vm4788, %v4781
    %4815 = vst.msk [vmem:[#allocation3 + $0x68] sm:$0xf] %vm4788, %v4782
    %4816 = vst.msk [vmem:[#allocation3 + $0x6c] sm:$0xf] %vm4788, %v4783
    %4817 = vst.msk [vmem:[#allocation3 + $0x70] sm:$0xf] %vm4788, %v4784
    %4818 = vst.msk [vmem:[#allocation3 + $0x74] sm:$0xf] %vm4788, %v4785
    %4819 = vst.msk [vmem:[#allocation3 + $0x78] sm:$0xf] %vm4788, %v4786
    %4820 = vst.msk [vmem:[#allocation3 + $0x7c] sm:$0xf] %vm4788, %v4787
    // Predicated region
    $region34: #{bottleneck_forward.1} parent=1 // pred_check
      _
    $region35: #{bottleneck_forward.1} parent=1 // pred_check_branch
      %4822 = sbr.rel (0) target = $region37
    $region36: #{bottleneck_forward.1} parent=1 // pred_region
      %s4824 = ssub.s32 2048, 2048
      %4825 = vsyncadd [#allocation4], %s4824
      %s4826 = sshll.u32 [#allocation3], 4
      %s4827 = int_to_ptr.vmem [resolvable:$true] %s4826
      %4832 = dma.vmem_to_hbm [thread:$0]  %s4827, 2048, %s7, [#allocation4], 64, 64, 4
    $region37: #{bottleneck_forward.1} parent=1 // pred_fallthru
      _
    // Predicated region
    $region38: #{bottleneck_forward.1} parent=1 // pred_check
      _
    $region39: #{bottleneck_forward.1} parent=1 // pred_check_branch
      %4834 = sbr.rel (0) target = $region41
    $region40: #{bottleneck_forward.1} parent=1 // pred_region
      %4835 = dma.done [#allocation4], 2048
    $region41: #{bottleneck_forward.1} parent=1 // pred_fallthru
      _
    %4836 = vsyncpa [#allocation4], 1

</llo_original>
